<compile_context>
chip_gen: v7x
topology: tpu7x:2x2x1
jax: 0.10.0
libtpu: 0.0.40
codegen_flags: <defaults>
</compile_context>

<pallas_src>
import functools

import jax
import jax.numpy as jnp
from jax import lax
from jax.experimental import pallas as pl
from jax.experimental.pallas import tpu as pltpu

LANE = 128


# ----------------------------------------------------------------------------
# Manual double-buffered DMA of this grid step's input window.
# x_hbm : (N, Hc+2p, Wp8, Cp) bf16 in HBM (memory_space=pl.ANY)
# xbuf  : (2, THp, Wp8, Cp)   bf16 VMEM scratch (the double buffer)
# sem   : DMA semaphores, shape (2,)
# ----------------------------------------------------------------------------
def _dma_in_tile(x_hbm, xbuf, sem, *, TH, THp):
    n = pl.program_id(0)
    i = pl.program_id(1)
    n_t = pl.num_programs(1)
    slot = lax.rem(i, 2)

    # Prime: the first H-tile of each image copies its own window (chain restarts per
    # image so a megacore split along the batch axis never waits on a foreign start).
    @pl.when(i == 0)
    def _():
        pltpu.make_async_copy(x_hbm.at[n, pl.ds(0, THp)], xbuf.at[0], sem.at[0]).start()

    # Prefetch the next H-tile of the same image into the other slot.
    @pl.when(i + 1 < n_t)
    def _():
        nxt = 1 - slot
        row = pl.multiple_of((i + 1) * TH, 8)
        pltpu.make_async_copy(x_hbm.at[n, pl.ds(row, THp)], xbuf.at[nxt], sem.at[nxt]).start()

    # Wait for the current tile.
    row0 = pl.multiple_of(i * TH, 8)
    pltpu.make_async_copy(x_hbm.at[n, pl.ds(row0, THp)], xbuf.at[slot], sem.at[slot]).wait()
    return slot


# ----------------------------------------------------------------------------
# MXU path (v4 / v6e / v7x): depthwise+pointwise as 9 accumulated channel matmuls with
# fused per-tap weights. wtap_ref: (K, K, Cp, Op) bf16.
# ----------------------------------------------------------------------------
def _sepconv_mxu_kernel(x_hbm, wtap_ref, o_ref, xbuf, sem, *, K, TH, THp, Wv):
    slot = _dma_in_tile(x_hbm, xbuf, sem, TH=TH, THp=THp)
    xt = xbuf[slot]                                                # (THp, Wp8, Cp) bf16
    acc = None
    for dy in range(K):
        for dx in range(K):
            lhs = xt[dy:dy + TH, dx:dx + Wv, :].reshape(TH * Wv, -1)   # (TH*Wv, Cp) bf16
            part = jnp.dot(lhs, wtap_ref[dy, dx],
                           preferred_element_type=jnp.float32)         # (TH*Wv, Op) f32
            acc = part if acc is None else acc + part
    o_ref[0, :, :, :] = acc.reshape(TH, Wv, -1).astype(o_ref.dtype)


# ----------------------------------------------------------------------------
# VPU path (v5*): f32 tap-MACs on the VPU, then one pointwise matmul on the MXU.
# wdw_ref: (K, K, Cp) f32 ; wpw_ref: (Cp, Op) bf16.
# ----------------------------------------------------------------------------
def _sepconv_vpu_kernel(x_hbm, wdw_ref, wpw_ref, o_ref, xbuf, sem, *, K, TH, THp, Wv):
    slot = _dma_in_tile(x_hbm, xbuf, sem, TH=TH, THp=THp)
    xt = xbuf[slot]                                                # (THp, Wp8, Cp) bf16
    acc = None
    for dy in range(K):
        for dx in range(K):
            w_tap = wdw_ref[dy, dx, :].astype(jnp.float32)         # (Cp,)
            tap = xt[dy:dy + TH, dx:dx + Wv, :].astype(jnp.float32) * w_tap
            acc = tap if acc is None else acc + tap                # (TH, Wv, Cp) f32
    a2 = acc.reshape(TH * Wv, -1).astype(jnp.bfloat16)
    out = jnp.dot(a2, wpw_ref[...], preferred_element_type=jnp.float32)
    o_ref[0, :, :, :] = out.reshape(TH, Wv, -1).astype(o_ref.dtype)


# ----------------------------------------------------------------------------
# Spectral normalization (one forward-time power iteration, matching
# torch.nn.utils.spectral_norm's W / sigma).
# NOTE: torch persists the `u` buffer across calls; here a fresh deterministic u is
# drawn, so sigma matches torch-at-init statistics, not a trained checkpoint's buffer.
# ----------------------------------------------------------------------------
def _spectral_normalize(w, key, eps=1e-12):
    out_ch = w.shape[0]
    w_mat = w.reshape(out_ch, -1).astype(jnp.float32)
    u = jax.random.normal(key, (out_ch,), jnp.float32)
    u = u / (jnp.linalg.norm(u) + eps)
    v = w_mat.T @ u
    v = v / (jnp.linalg.norm(v) + eps)
    u = w_mat @ v
    u = u / (jnp.linalg.norm(u) + eps)
    sigma = u @ (w_mat @ v)
    return w / sigma


def _round_up(x, m):
    return (x + m - 1) // m * m


def _device_kind():
    try:
        return jax.devices()[0].device_kind.lower()
    except Exception:   # defensive: default to the newer-part path
        return ""


def _vmem_plan(kind):
    # v7x TensorCores have 64 MiB of VMEM; v5e/v6e (and v4) parts have 128 MiB.
    cap = 64 * 1024 * 1024 if "v7" in kind else 128 * 1024 * 1024
    budget = int(cap * 0.35)      # per-step working-set target for the tile-height search
    limit = int(cap * 0.65)       # explicit scoped-VMEM limit handed to Mosaic
    return budget, limit


def _choose_tile_h(Hc, Wv, Wp8, Cp, Op, K, out_itemsize, use_mxu, budget_bytes, n_images):
    """Largest tile height (multiple of 8, dividing Hc) whose real working set fits."""
    p = (K - 1) // 2
    cap = Hc
    if n_images == 1 and Hc >= 16:
        cap = Hc // 2             # keep >= 2 grid steps so both v7x TensorCores get work
    for th in range(cap, 7, -1):
        if Hc % th or th % 8:
            continue
        thp = th + 2 * p
        x_b = 2 * thp * Wp8 * Cp * 2                    # bf16 manual input double buffer
        o_b = 2 * th * Wv * Op * out_itemsize           # pipelined output blocks
        if use_mxu:
            w_b = 2 * K * K * Cp * Op * 2               # fused per-tap weights (bf16)
            tmp = thp * Wp8 * Cp * 2 + th * Wv * (4 * Cp + 8 * Op)   # tile value, lhs, acc
        else:
            w_b = 2 * (K * K * Cp * 4 + Cp * Op * 2)
            tmp = thp * Wp8 * Cp * 2 + th * Wv * (10 * Cp + 4 * Op)  # tile, tap, acc, out
        if x_b + o_b + w_b + tmp <= budget_bytes:
            return th
    return 8


# ----------------------------------------------------------------------------
# Wrapper: NCHW in / NCHW out (PyTorch module boundary). All layout plumbing (transpose,
# spatial + channel padding, bf16 cast) fuses under jit; the kernel sees lane-dense
# blocks and manually DMA'd halo windows.
# ----------------------------------------------------------------------------
@functools.partial(jax.jit, static_argnames=("padding", "tile_h", "use_mxu"))
def separable_conv2d(x_nchw, w_depthwise, w_pointwise, *, padding=1, tile_h=None,
                     use_mxu=None):
    """
    x_nchw      : (N, C, H, W)
    w_depthwise : (C, 1, K, K)   PyTorch depthwise conv weight (groups=C)
    w_pointwise : (O, C, 1, 1)   PyTorch 1x1 conv weight
    returns     : (N, O, H, W)
    """
    N, C, H, W = x_nchw.shape
    K = w_depthwise.shape[-1]
    O = w_pointwise.shape[0]
    assert 2 * padding == K - 1, "same-shape depthwise conv expected (padding=1, k=3)"

    kind = _device_kind()
    if use_mxu is None:
        # v5*: keep the depthwise taps on the f32 VPU (its MXU/HBM roofline loses with
        # 9x MXU FLOPs); everything newer folds the taps into the MXU.
        use_mxu = "v5" not in kind
    budget_bytes, vmem_limit = _vmem_plan(kind)

    Cp = _round_up(C, LANE)
    Op = _round_up(O, LANE)
    Hc = _round_up(H, 8)
    Wv = _round_up(W, 8)
    Wp8 = Wv + 8                   # left pad = `padding`, slack zero columns on the right

    # NCHW -> NHWC, spatial + channel zero-pad, bf16 cast: one fused XLA producer.
    x = jnp.transpose(x_nchw, (0, 2, 3, 1))
    x = jnp.pad(x, ((0, 0),
                    (padding, Hc - H + padding),
                    (padding, Wp8 - W - padding),
                    (0, Cp - C))).astype(jnp.bfloat16)            # (N, Hc+2p, Wp8, Cp)

    # Weight prep (f32 until the final casts); zero-padded channels keep results exact.
    wdw = jnp.transpose(w_depthwise[:, 0, :, :], (1, 2, 0)).astype(jnp.float32)  # (K,K,C)
    wdw = jnp.pad(wdw, ((0, 0), (0, 0), (0, Cp - C)))                            # (K,K,Cp)
    wpw = jnp.transpose(w_pointwise[:, :, 0, 0], (1, 0)).astype(jnp.float32)     # (C,O)
    wpw = jnp.pad(wpw, ((0, Cp - C), (0, Op - O)))                               # (Cp,Op)

    out_dtype = x_nchw.dtype
    TH = tile_h if tile_h is not None else _choose_tile_h(
        Hc, Wv, Wp8, Cp, Op, K, jnp.dtype(out_dtype).itemsize, use_mxu, budget_bytes, N)
    assert Hc % TH == 0 and TH % 8 == 0, \
        "tile_h must divide round_up(H, 8) and be a multiple of 8"
    n_t = Hc // TH
    THp = TH + 2 * padding

    if use_mxu:
        # Fused per-tap weights: depthwise+pointwise == 9 accumulated channel matmuls.
        w_tap = (wdw[:, :, :, None] * wpw[None, None, :, :]).astype(jnp.bfloat16)
        weight_args = (w_tap,)
        weight_specs = [pl.BlockSpec((K, K, Cp, Op), lambda n, i: (0, 0, 0, 0))]
        kernel = functools.partial(_sepconv_mxu_kernel, K=K, TH=TH, THp=THp, Wv=Wv)
    else:
        weight_args = (wdw, wpw.astype(jnp.bfloat16))
        weight_specs = [pl.BlockSpec((K, K, Cp), lambda n, i: (0, 0, 0)),
                        pl.BlockSpec((Cp, Op), lambda n, i: (0, 0))]
        kernel = functools.partial(_sepconv_vpu_kernel, K=K, TH=TH, THp=THp, Wv=Wv)

    out = pl.pallas_call(
        kernel,
        out_shape=jax.ShapeDtypeStruct((N, Hc, Wv, Op), out_dtype),
        grid_spec=pltpu.PrefetchScalarGridSpec(
            num_scalar_prefetch=0,
            grid=(N, n_t),
            in_specs=[pl.BlockSpec(memory_space=pl.ANY)] + weight_specs,
            out_specs=pl.BlockSpec((1, TH, Wv, Op), lambda n, i: (n, i, 0, 0)),
            scratch_shapes=[pltpu.VMEM((2, THp, Wp8, Cp), jnp.bfloat16),
                            pltpu.SemaphoreType.DMA((2,))]),
        compiler_params=pltpu.CompilerParams(
            dimension_semantics=("parallel", "arbitrary"),
            vmem_limit_bytes=vmem_limit),
    )(x, *weight_args)

    # Crop padding and return NCHW (module boundary).
    # TODO(synk): a full SingleDisc stack should stay NHWC / Op-padded between layers
    #             and skip this per-layer relayout.
    out = out[:, :H, :W, :O]
    return jnp.transpose(out, (0, 3, 1, 2))


if __name__ == "__main__":
    # Small deterministic example consistent with the module's SeparableConv2d forward.
    N, C_in, C_out, H, W, K = 2, 4, 8, 16, 16, 3

    key = jax.random.PRNGKey(0)
    k_x, k_dw, k_pw, k_u1, k_u2 = jax.random.split(key, 5)

    x = jax.random.normal(k_x, (N, C_in, H, W), jnp.float32)

    # Deterministic "Conv2d" parameter init (synthetic; not a checkpoint load).
    w_dw = 0.1 * jax.random.normal(k_dw, (C_in, 1, K, K), jnp.float32)
    w_pw = 0.1 * jax.random.normal(k_pw, (C_out, C_in, 1, 1), jnp.float32)

    # Spectral-norm the weights (as torch.nn.utils.spectral_norm does at forward time).
    w_dw_sn = _spectral_normalize(w_dw, k_u1)
    w_pw_sn = _spectral_normalize(w_pw, k_u2)

    # Pure-JAX f32 reference on the bf16-rounded input (the kernel DMAs bf16 tiles).
    x_q = x.astype(jnp.bfloat16).astype(jnp.float32)
    ref_dw = lax.conv_general_dilated(
        x_q, w_dw_sn, window_strides=(1, 1), padding=((1, 1), (1, 1)),
        dimension_numbers=("NCHW", "OIHW", "NCHW"), feature_group_count=C_in)
    ref = lax.conv_general_dilated(
        ref_dw, w_pw_sn, window_strides=(1, 1), padding="VALID",
        dimension_numbers=("NCHW", "OIHW", "NCHW"))

    # Exercise both generation paths (MXU-fused and VPU) and both the single-tile and
    # multi-tile (manual DMA prefetch chain) cases.
    for use_mxu in (True, False):
        for th in (None, 8):
            out = separable_conv2d(x, w_dw_sn, w_pw_sn, padding=1, tile_h=th,
                                   use_mxu=use_mxu)
            out = jax.block_until_ready(out)
            assert out.shape == (N, C_out, H, W)
            err = float(jnp.max(jnp.abs(out - ref)))
            # bf16 weights / MXU inputs -> tolerance sized for bf16 rounding.
            assert err < 5e-2, f"use_mxu={use_mxu} tile_h={th}: max abs err {err}"

    print("KERNEL_OK")
</pallas_src>

<mosaic_0001>
module attributes {stable_mosaic.version = 11 : i64} {
  func.func @_sepconv_mxu_kernel(%arg0: i32, %arg1: i32, %arg2: memref<2x18x24x128xbf16, #tpu.memory_space<any>>, %arg3: memref<3x3x128x128xbf16, #tpu.memory_space<vmem>>, %arg4: memref<1x16x16x128xf32, #tpu.memory_space<vmem>>, %arg5: memref<2x18x24x128xbf16, #tpu.memory_space<vmem>>, %arg6: memref<2x!tpu.dma_semaphore, #tpu.memory_space<semaphore_mem>>) attributes {dimension_semantics = [#tpu.dimension_semantics<parallel>, #tpu.dimension_semantics<arbitrary>], iteration_bounds = array<i64: 2, 1>, scalar_prefetch = 0 : i64, scratch_operands = 2 : i64, tpu.core_type = #tpu.core_type<tc>, window_params = [{}, {pipeline_mode = #tpu.pipeline_mode<synchronous>, transform_indices = @transform_1, window_bounds = array<i64: 3, 3, 128, 128>}, {transform_indices = @transform_2, window_bounds = array<i64: 1, 16, 16, 128>}]} {
    %c2_i32 = arith.constant 2 : i32
    %0 = arith.remsi %arg1, %c2_i32 : i32
    %c0_i32 = arith.constant 0 : i32
    %1 = arith.cmpi eq, %arg1, %c0_i32 : i32
    %2 = arith.extui %1 : i1 to i32
    %c0_i32_0 = arith.constant 0 : i32
    %3 = arith.cmpi ne, %2, %c0_i32_0 : i32
    scf.if %3 {
      %c0_i32_56 = arith.constant 0 : i32
      %c0_i32_57 = arith.constant 0 : i32
      %c0_i32_58 = arith.constant 0 : i32
      %c0_i32_59 = arith.constant 0 : i32
      %c0_i32_60 = arith.constant 0 : i32
      %76 = tpu.memref_slice %arg2[%arg0, %c0_i32_58, %c0_i32_59, %c0_i32_60] : memref<2x18x24x128xbf16, #tpu.memory_space<any>> -> memref<1x18x24x128xbf16, #tpu.memory_space<any>>
      %77 = tpu.memref_squeeze %76 : memref<1x18x24x128xbf16, #tpu.memory_space<any>> -> memref<18x24x128xbf16, #tpu.memory_space<any>>
      %c0_i32_61 = arith.constant 0 : i32
      %c0_i32_62 = arith.constant 0 : i32
      %c0_i32_63 = arith.constant 0 : i32
      %78 = tpu.memref_slice %arg5[%c0_i32_56, %c0_i32_61, %c0_i32_62, %c0_i32_63] : memref<2x18x24x128xbf16, #tpu.memory_space<vmem>> -> memref<1x18x24x128xbf16, #tpu.memory_space<vmem>>
      %79 = tpu.memref_squeeze %78 : memref<1x18x24x128xbf16, #tpu.memory_space<vmem>> -> memref<18x24x128xbf16, #tpu.memory_space<vmem>>
      %80 = tpu.memref_slice %arg6[%c0_i32_57] : memref<2x!tpu.dma_semaphore, #tpu.memory_space<semaphore_mem>> -> memref<1x!tpu.dma_semaphore, #tpu.memory_space<semaphore_mem>>
      %81 = tpu.memref_squeeze %80 : memref<1x!tpu.dma_semaphore, #tpu.memory_space<semaphore_mem>> -> memref<!tpu.dma_semaphore, #tpu.memory_space<semaphore_mem>>
      tpu.enqueue_dma source(%77 : memref<18x24x128xbf16, #tpu.memory_space<any>>) target(%79 : memref<18x24x128xbf16, #tpu.memory_space<vmem>>) target_semaphore(%81 : memref<!tpu.dma_semaphore, #tpu.memory_space<semaphore_mem>>)
    } else {
    }
    %c1_i32 = arith.constant 1 : i32
    %4 = arith.addi %arg1, %c1_i32 : i32
    %c1_i32_1 = arith.constant 1 : i32
    %5 = arith.cmpi slt, %4, %c1_i32_1 : i32
    %6 = arith.extui %5 : i1 to i32
    %c0_i32_2 = arith.constant 0 : i32
    %7 = arith.cmpi ne, %6, %c0_i32_2 : i32
    scf.if %7 {
      %c1_i32_56 = arith.constant 1 : i32
      %76 = arith.subi %c1_i32_56, %0 : i32
      %c1_i32_57 = arith.constant 1 : i32
      %77 = arith.addi %arg1, %c1_i32_57 : i32
      %c16_i32_58 = arith.constant 16 : i32
      %78 = arith.muli %77, %c16_i32_58 : i32
      %79 = tpu.assume_multiple %78, 8 : i32
      %c0_i32_59 = arith.constant 0 : i32
      %c0_i32_60 = arith.constant 0 : i32
      %80 = tpu.memref_slice %arg2[%arg0, %79, %c0_i32_59, %c0_i32_60] : memref<2x18x24x128xbf16, #tpu.memory_space<any>> -> memref<1x18x24x128xbf16, #tpu.memory_space<any>>
      %81 = tpu.memref_squeeze %80 : memref<1x18x24x128xbf16, #tpu.memory_space<any>> -> memref<18x24x128xbf16, #tpu.memory_space<any>>
      %c0_i32_61 = arith.constant 0 : i32
      %c0_i32_62 = arith.constant 0 : i32
      %c0_i32_63 = arith.constant 0 : i32
      %82 = tpu.memref_slice %arg5[%76, %c0_i32_61, %c0_i32_62, %c0_i32_63] : memref<2x18x24x128xbf16, #tpu.memory_space<vmem>> -> memref<1x18x24x128xbf16, #tpu.memory_space<vmem>>
      %83 = tpu.memref_squeeze %82 : memref<1x18x24x128xbf16, #tpu.memory_space<vmem>> -> memref<18x24x128xbf16, #tpu.memory_space<vmem>>
      %84 = tpu.memref_slice %arg6[%76] : memref<2x!tpu.dma_semaphore, #tpu.memory_space<semaphore_mem>> -> memref<1x!tpu.dma_semaphore, #tpu.memory_space<semaphore_mem>>
      %85 = tpu.memref_squeeze %84 : memref<1x!tpu.dma_semaphore, #tpu.memory_space<semaphore_mem>> -> memref<!tpu.dma_semaphore, #tpu.memory_space<semaphore_mem>>
      tpu.enqueue_dma source(%81 : memref<18x24x128xbf16, #tpu.memory_space<any>>) target(%83 : memref<18x24x128xbf16, #tpu.memory_space<vmem>>) target_semaphore(%85 : memref<!tpu.dma_semaphore, #tpu.memory_space<semaphore_mem>>)
    } else {
    }
    %c16_i32 = arith.constant 16 : i32
    %8 = arith.muli %arg1, %c16_i32 : i32
    %9 = tpu.assume_multiple %8, 8 : i32
    %c0_i32_3 = arith.constant 0 : i32
    %c0_i32_4 = arith.constant 0 : i32
    %10 = tpu.memref_slice %arg2[%arg0, %9, %c0_i32_3, %c0_i32_4] : memref<2x18x24x128xbf16, #tpu.memory_space<any>> -> memref<1x18x24x128xbf16, #tpu.memory_space<any>>
    %11 = tpu.memref_squeeze %10 : memref<1x18x24x128xbf16, #tpu.memory_space<any>> -> memref<18x24x128xbf16, #tpu.memory_space<any>>
    %c0_i32_5 = arith.constant 0 : i32
    %c0_i32_6 = arith.constant 0 : i32
    %c0_i32_7 = arith.constant 0 : i32
    %12 = tpu.memref_slice %arg5[%0, %c0_i32_5, %c0_i32_6, %c0_i32_7] : memref<2x18x24x128xbf16, #tpu.memory_space<vmem>> -> memref<1x18x24x128xbf16, #tpu.memory_space<vmem>>
    %13 = tpu.memref_squeeze %12 : memref<1x18x24x128xbf16, #tpu.memory_space<vmem>> -> memref<18x24x128xbf16, #tpu.memory_space<vmem>>
    %14 = tpu.memref_slice %arg6[%0] : memref<2x!tpu.dma_semaphore, #tpu.memory_space<semaphore_mem>> -> memref<1x!tpu.dma_semaphore, #tpu.memory_space<semaphore_mem>>
    %15 = tpu.memref_squeeze %14 : memref<1x!tpu.dma_semaphore, #tpu.memory_space<semaphore_mem>> -> memref<!tpu.dma_semaphore, #tpu.memory_space<semaphore_mem>>
    tpu.wait_dma2 semaphore(%15 : memref<!tpu.dma_semaphore, #tpu.memory_space<semaphore_mem>>) src(%11 : memref<18x24x128xbf16, #tpu.memory_space<any>>) dst(%13 : memref<18x24x128xbf16, #tpu.memory_space<vmem>>)
    %16 = arith.index_cast %0 : i32 to index
    %c0 = arith.constant 0 : index
    %c0_8 = arith.constant 0 : index
    %c0_9 = arith.constant 0 : index
    %17 = vector.load %arg5[%16, %c0, %c0_8, %c0_9] : memref<2x18x24x128xbf16, #tpu.memory_space<vmem>>, vector<1x18x24x128xbf16>
    %18 = vector.shape_cast %17 : vector<1x18x24x128xbf16> to vector<18x24x128xbf16>
    %19 = vector.extract_strided_slice %18 {offsets = [0, 0, 0], sizes = [16, 16, 128], strides = [1, 1, 1]} : vector<18x24x128xbf16> to vector<16x16x128xbf16>
    %20 = vector.shape_cast %19 : vector<16x16x128xbf16> to vector<256x128xbf16>
    %c0_10 = arith.constant 0 : index
    %c0_11 = arith.constant 0 : index
    %c0_12 = arith.constant 0 : index
    %c0_13 = arith.constant 0 : index
    %21 = vector.load %arg3[%c0_10, %c0_11, %c0_12, %c0_13] : memref<3x3x128x128xbf16, #tpu.memory_space<vmem>>, vector<1x1x128x128xbf16>
    %22 = vector.shape_cast %21 : vector<1x1x128x128xbf16> to vector<128x128xbf16>
    %cst = arith.constant dense<0.000000e+00> : vector<256x128xf32>
    %23 = tpu.matmul %20, %22, %cst {dimension_numbers = #tpu.dot_dimension_numbers<[1], [0], [0], [1], [0, 0, 1, 1], [], []>} : vector<256x128xbf16>, vector<128x128xbf16>, vector<256x128xf32> -> vector<256x128xf32>
    %24 = vector.extract_strided_slice %18 {offsets = [0, 1, 0], sizes = [16, 16, 128], strides = [1, 1, 1]} : vector<18x24x128xbf16> to vector<16x16x128xbf16>
    %25 = vector.shape_cast %24 : vector<16x16x128xbf16> to vector<256x128xbf16>
    %c0_14 = arith.constant 0 : index
    %c1 = arith.constant 1 : index
    %c0_15 = arith.constant 0 : index
    %c0_16 = arith.constant 0 : index
    %26 = vector.load %arg3[%c0_14, %c1, %c0_15, %c0_16] : memref<3x3x128x128xbf16, #tpu.memory_space<vmem>>, vector<1x1x128x128xbf16>
    %27 = vector.shape_cast %26 : vector<1x1x128x128xbf16> to vector<128x128xbf16>
    %cst_17 = arith.constant dense<0.000000e+00> : vector<256x128xf32>
    %28 = tpu.matmul %25, %27, %cst_17 {dimension_numbers = #tpu.dot_dimension_numbers<[1], [0], [0], [1], [0, 0, 1, 1], [], []>} : vector<256x128xbf16>, vector<128x128xbf16>, vector<256x128xf32> -> vector<256x128xf32>
    %29 = arith.addf %23, %28 : vector<256x128xf32>
    %30 = vector.extract_strided_slice %18 {offsets = [0, 2, 0], sizes = [16, 16, 128], strides = [1, 1, 1]} : vector<18x24x128xbf16> to vector<16x16x128xbf16>
    %31 = vector.shape_cast %30 : vector<16x16x128xbf16> to vector<256x128xbf16>
    %c0_18 = arith.constant 0 : index
    %c2 = arith.constant 2 : index
    %c0_19 = arith.constant 0 : index
    %c0_20 = arith.constant 0 : index
    %32 = vector.load %arg3[%c0_18, %c2, %c0_19, %c0_20] : memref<3x3x128x128xbf16, #tpu.memory_space<vmem>>, vector<1x1x128x128xbf16>
    %33 = vector.shape_cast %32 : vector<1x1x128x128xbf16> to vector<128x128xbf16>
    %cst_21 = arith.constant dense<0.000000e+00> : vector<256x128xf32>
    %34 = tpu.matmul %31, %33, %cst_21 {dimension_numbers = #tpu.dot_dimension_numbers<[1], [0], [0], [1], [0, 0, 1, 1], [], []>} : vector<256x128xbf16>, vector<128x128xbf16>, vector<256x128xf32> -> vector<256x128xf32>
    %35 = arith.addf %29, %34 : vector<256x128xf32>
    %36 = vector.extract_strided_slice %18 {offsets = [1, 0, 0], sizes = [16, 16, 128], strides = [1, 1, 1]} : vector<18x24x128xbf16> to vector<16x16x128xbf16>
    %37 = vector.shape_cast %36 : vector<16x16x128xbf16> to vector<256x128xbf16>
    %c1_22 = arith.constant 1 : index
    %c0_23 = arith.constant 0 : index
    %c0_24 = arith.constant 0 : index
    %c0_25 = arith.constant 0 : index
    %38 = vector.load %arg3[%c1_22, %c0_23, %c0_24, %c0_25] : memref<3x3x128x128xbf16, #tpu.memory_space<vmem>>, vector<1x1x128x128xbf16>
    %39 = vector.shape_cast %38 : vector<1x1x128x128xbf16> to vector<128x128xbf16>
    %cst_26 = arith.constant dense<0.000000e+00> : vector<256x128xf32>
    %40 = tpu.matmul %37, %39, %cst_26 {dimension_numbers = #tpu.dot_dimension_numbers<[1], [0], [0], [1], [0, 0, 1, 1], [], []>} : vector<256x128xbf16>, vector<128x128xbf16>, vector<256x128xf32> -> vector<256x128xf32>
    %41 = arith.addf %35, %40 : vector<256x128xf32>
    %42 = vector.extract_strided_slice %18 {offsets = [1, 1, 0], sizes = [16, 16, 128], strides = [1, 1, 1]} : vector<18x24x128xbf16> to vector<16x16x128xbf16>
    %43 = vector.shape_cast %42 : vector<16x16x128xbf16> to vector<256x128xbf16>
    %c1_27 = arith.constant 1 : index
    %c1_28 = arith.constant 1 : index
    %c0_29 = arith.constant 0 : index
    %c0_30 = arith.constant 0 : index
    %44 = vector.load %arg3[%c1_27, %c1_28, %c0_29, %c0_30] : memref<3x3x128x128xbf16, #tpu.memory_space<vmem>>, vector<1x1x128x128xbf16>
    %45 = vector.shape_cast %44 : vector<1x1x128x128xbf16> to vector<128x128xbf16>
    %cst_31 = arith.constant dense<0.000000e+00> : vector<256x128xf32>
    %46 = tpu.matmul %43, %45, %cst_31 {dimension_numbers = #tpu.dot_dimension_numbers<[1], [0], [0], [1], [0, 0, 1, 1], [], []>} : vector<256x128xbf16>, vector<128x128xbf16>, vector<256x128xf32> -> vector<256x128xf32>
    %47 = arith.addf %41, %46 : vector<256x128xf32>
    %48 = vector.extract_strided_slice %18 {offsets = [1, 2, 0], sizes = [16, 16, 128], strides = [1, 1, 1]} : vector<18x24x128xbf16> to vector<16x16x128xbf16>
    %49 = vector.shape_cast %48 : vector<16x16x128xbf16> to vector<256x128xbf16>
    %c1_32 = arith.constant 1 : index
    %c2_33 = arith.constant 2 : index
    %c0_34 = arith.constant 0 : index
    %c0_35 = arith.constant 0 : index
    %50 = vector.load %arg3[%c1_32, %c2_33, %c0_34, %c0_35] : memref<3x3x128x128xbf16, #tpu.memory_space<vmem>>, vector<1x1x128x128xbf16>
    %51 = vector.shape_cast %50 : vector<1x1x128x128xbf16> to vector<128x128xbf16>
    %cst_36 = arith.constant dense<0.000000e+00> : vector<256x128xf32>
    %52 = tpu.matmul %49, %51, %cst_36 {dimension_numbers = #tpu.dot_dimension_numbers<[1], [0], [0], [1], [0, 0, 1, 1], [], []>} : vector<256x128xbf16>, vector<128x128xbf16>, vector<256x128xf32> -> vector<256x128xf32>
    %53 = arith.addf %47, %52 : vector<256x128xf32>
    %54 = vector.extract_strided_slice %18 {offsets = [2, 0, 0], sizes = [16, 16, 128], strides = [1, 1, 1]} : vector<18x24x128xbf16> to vector<16x16x128xbf16>
    %55 = vector.shape_cast %54 : vector<16x16x128xbf16> to vector<256x128xbf16>
    %c2_37 = arith.constant 2 : index
    %c0_38 = arith.constant 0 : index
    %c0_39 = arith.constant 0 : index
    %c0_40 = arith.constant 0 : index
    %56 = vector.load %arg3[%c2_37, %c0_38, %c0_39, %c0_40] : memref<3x3x128x128xbf16, #tpu.memory_space<vmem>>, vector<1x1x128x128xbf16>
    %57 = vector.shape_cast %56 : vector<1x1x128x128xbf16> to vector<128x128xbf16>
    %cst_41 = arith.constant dense<0.000000e+00> : vector<256x128xf32>
    %58 = tpu.matmul %55, %57, %cst_41 {dimension_numbers = #tpu.dot_dimension_numbers<[1], [0], [0], [1], [0, 0, 1, 1], [], []>} : vector<256x128xbf16>, vector<128x128xbf16>, vector<256x128xf32> -> vector<256x128xf32>
    %59 = arith.addf %53, %58 : vector<256x128xf32>
    %60 = vector.extract_strided_slice %18 {offsets = [2, 1, 0], sizes = [16, 16, 128], strides = [1, 1, 1]} : vector<18x24x128xbf16> to vector<16x16x128xbf16>
    %61 = vector.shape_cast %60 : vector<16x16x128xbf16> to vector<256x128xbf16>
    %c2_42 = arith.constant 2 : index
    %c1_43 = arith.constant 1 : index
    %c0_44 = arith.constant 0 : index
    %c0_45 = arith.constant 0 : index
    %62 = vector.load %arg3[%c2_42, %c1_43, %c0_44, %c0_45] : memref<3x3x128x128xbf16, #tpu.memory_space<vmem>>, vector<1x1x128x128xbf16>
    %63 = vector.shape_cast %62 : vector<1x1x128x128xbf16> to vector<128x128xbf16>
    %cst_46 = arith.constant dense<0.000000e+00> : vector<256x128xf32>
    %64 = tpu.matmul %61, %63, %cst_46 {dimension_numbers = #tpu.dot_dimension_numbers<[1], [0], [0], [1], [0, 0, 1, 1], [], []>} : vector<256x128xbf16>, vector<128x128xbf16>, vector<256x128xf32> -> vector<256x128xf32>
    %65 = arith.addf %59, %64 : vector<256x128xf32>
    %66 = vector.extract_strided_slice %18 {offsets = [2, 2, 0], sizes = [16, 16, 128], strides = [1, 1, 1]} : vector<18x24x128xbf16> to vector<16x16x128xbf16>
    %67 = vector.shape_cast %66 : vector<16x16x128xbf16> to vector<256x128xbf16>
    %c2_47 = arith.constant 2 : index
    %c2_48 = arith.constant 2 : index
    %c0_49 = arith.constant 0 : index
    %c0_50 = arith.constant 0 : index
    %68 = vector.load %arg3[%c2_47, %c2_48, %c0_49, %c0_50] : memref<3x3x128x128xbf16, #tpu.memory_space<vmem>>, vector<1x1x128x128xbf16>
    %69 = vector.shape_cast %68 : vector<1x1x128x128xbf16> to vector<128x128xbf16>
    %cst_51 = arith.constant dense<0.000000e+00> : vector<256x128xf32>
    %70 = tpu.matmul %67, %69, %cst_51 {dimension_numbers = #tpu.dot_dimension_numbers<[1], [0], [0], [1], [0, 0, 1, 1], [], []>} : vector<256x128xbf16>, vector<128x128xbf16>, vector<256x128xf32> -> vector<256x128xf32>
    %71 = arith.addf %65, %70 : vector<256x128xf32>
    %72 = vector.shape_cast %71 : vector<256x128xf32> to vector<16x16x128xf32>
    %c0_52 = arith.constant 0 : index
    %c0_53 = arith.constant 0 : index
    %c0_54 = arith.constant 0 : index
    %c0_55 = arith.constant 0 : index
    %73 = vector.load %arg4[%c0_52, %c0_53, %c0_54, %c0_55] : memref<1x16x16x128xf32, #tpu.memory_space<vmem>>, vector<1x16x16x128xf32>
    %74 = vector.shape_cast %73 : vector<1x16x16x128xf32> to vector<16x16x128xf32>
    %75 = vector.shape_cast %72 : vector<16x16x128xf32> to vector<1x16x16x128xf32>
    tpu.vector_store %arg4[%c0_52, %c0_53, %c0_54, %c0_55], %75 {strides = array<i32>} : memref<1x16x16x128xf32, #tpu.memory_space<vmem>>, vector<1x16x16x128xf32>,
    return
  }
  func.func @transform_1(%arg0: i32, %arg1: i32) -> (i32, i32, i32, i32) {
    %c0_i32 = arith.constant 0 : i32
    %c0_i32_0 = arith.constant 0 : i32
    %c0_i32_1 = arith.constant 0 : i32
    %c0_i32_2 = arith.constant 0 : i32
    %c0_i32_3 = arith.constant 0 : i32
    return %c0_i32, %c0_i32_0, %c0_i32_1, %c0_i32_2 : i32, i32, i32, i32
  }
  func.func @transform_2(%arg0: i32, %arg1: i32) -> (i32, i32, i32, i32) {
    %c0_i32 = arith.constant 0 : i32
    %c0_i32_0 = arith.constant 0 : i32
    %c0_i32_1 = arith.constant 0 : i32
    return %arg0, %arg1, %c0_i32, %c0_i32_0 : i32, i32, i32, i32
  }
}

</mosaic_0001>

<llo_original>
// kernel: separable_conv2d.1
$region0: #{separable_conv2d.1}
  #allocation0 [shape = 'u32[]', space=smem, size = 0x4, offset = 0x4, fixed_abs, tag = 'smem constant byte address 0x4 - core index']
  #allocation1 [shape = 'u32[144,128]{1,0:T(1,128)}', space=vmem, size = 0x12000, scoped, tag = 'internal scratch']
  #allocation2 [shape = 'bf16[2,18,24,128]{3,2,1,0:T(8,128)(2,1)}', space=vmem, size = 0x36000, scoped, tag = 'scratch operand']
  #allocation3 [shape = 's32[2]{0}', space=sflag, size = 0x8, scoped, tag = 'scratch operand']
  #allocation8 [shape = 's32[]', space=sflag, size = 0x4, offset = 0, fixed_abs, tag = 'sflag constant byte address 0x0 - dummy sync flag']
  #allocation9 [shape = 's32[]', space=sflag, size = 0x4, offset = 0, fixed_abs, tag = 'sflag constant byte address 0x0 - dummy sync flag']
  #allocation10 [shape = 'u32[]', space=smem, size = 0x4, offset = 0x44, fixed_abs, tag = 'smem constant byte address 0x44 - assertion arg 0']
  #allocation11 [shape = 'u32[]', space=smem, size = 0x4, offset = 0x48, fixed_abs, tag = 'smem constant byte address 0x48 - assertion arg 1']
  #allocation12 [shape = 's32[]', space=sflag, size = 0x4, offset = 0, fixed_abs, tag = 'sflag constant byte address 0x0 - dummy sync flag']
  #allocation13 [shape = 's32[]', space=sflag, size = 0x4, offset = 0, fixed_abs, tag = 'sflag constant byte address 0x0 - dummy sync flag']
  %s0 = inlined_call_operand.hbm [shape: bf16[2,18,24,128], index: 0, kind: input, shape index: {}]
  %s1 = inlined_call_operand.hbm [shape: bf16[3,3,128,128], index: 1, kind: input, shape index: {}]
  %s2 = inlined_call_operand.hbm [shape: f32[2,16,16,128], index: 2, kind: output, shape index: {}]
  %s3 = sld [smem:[#allocation0]]
  $region57: #{separable_conv2d.1} parent=0
    _
  %s5 = ssub.s32 1, %s3
  %s6 = scalar_select 0, %s5, %s3
  $region1: #{separable_conv2d.1} parent=0
    #allocation4 [shape = 'u8[294912]{0}', space=vmem, size = 0x48000, scoped, tag = 'input window, operand 1, single buffered']
    #allocation5 [shape = 's32[2]{0}', space=sflag, size = 0x8, scoped, tag = 'scoped memory for separable_conv2d.1']
    #allocation6 [shape = 's32[2]{0}', space=sflag, size = 0x8, scoped, tag = 'scoped memory for separable_conv2d.1']
    #allocation7 [shape = 'u8[262144]{0}', space=vmem, size = 0x40000, scoped, tag = 'output window, operand 0']
    %7 = vsyncpa [#allocation5], 0
    %8 = vsyncpa [#allocation6], 0
    %s9 = scalar_lea.sflag [#allocation6], 1
    %10 = vsyncpa %s9, 0
    loop: start=0, step=1, limit=4
    $region2: #{separable_conv2d.1} parent=1 // loop_pre_header
      _
    $region3: #{separable_conv2d.1} parent=1 // loop_header
      %s12 = sphi 0, %s16
      %p13 = scmp.ge.s32.totalorder %s12, 4
      %s19 = sphi 0, %s31
      %s20 = sphi 0, %s27
      %s21 = sphi 0, %s19
      %s22 = sphi 0, %s20
      %s23 = sphi 0, %s21
      %s24 = sphi 0, %s22
      %s32 = sphi 0, %s32
      %s34 = sphi 0, %s32
      %s35 = sphi 0, %s34
      %s49 = sphi 0, %s35
      %s57 = sphi 0, %s59
      %s60 = sphi 0, %s57
      %s61 = sphi 0, %s60
      %s77 = sphi 0, %s61
    $region4: #{separable_conv2d.1} parent=1 // loop_header_branch
      %15 = sbr.rel (%p13) target = $region8
    $region5: #{separable_conv2d.1} parent=1 // loop_body
      %s17 = ssub.s32 %s12, 1
      %s18 = ssub.s32 %s12, 2
      %s25 = sadd.s32 1, %s20
      %p26 = scmp.ge.s32.totalorder %s25, 1
      %s27 = scalar_select %p26, 0, %s25
      %s28 = sadd.s32 1, %s19
      %s29 = scalar_select %p26, %s28, %s19
      %p30 = scmp.ge.s32.totalorder %s29, 2
      %s31 = scalar_select %p30, 0, %s29
      %s33 = sadd.s32 %s32, 1
      %p36 = scmp.eq.s32.totalorder %s12, 1
      %p37 = scmp.ne.s32.totalorder %s32, %s34
      %p38 = scmp.eq.s32.totalorder %s12, 0
      %p39 = por %p37, %p38
      %p40 = scmp.ne.s32.totalorder %s32, %s34
      %p41 = scmp.eq.s32.totalorder %s17, 1
      %p42 = por %p40, %p41
      %p43 = scmp.ne.s32.totalorder %s34, %s35
      %p44 = scmp.eq.s32.totalorder %s17, 0
      %p45 = por %p43, %p44
      %p46 = scmp.ne.s32.totalorder %s34, %s35
      %p47 = scmp.eq.s32.totalorder %s18, 1
      %p48 = por %p46, %p47
      %p50 = scmp.ne.s32.totalorder %s35, %s49
      %p51 = scmp.eq.s32.totalorder %s18, 0
      %p52 = por %p50, %p51
      %s53 = ssub.s32 %s19, %s31
      %s54 = ssub.s32 %s20, %s27
      %s55 = sor.u32 %s53, %s54
      %p56 = scmp.eq.s32.totalorder %s55, 0
      %s58 = sadd.s32 %s57, 1
      %s59 = scalar_select %p56, %s57, %s58
      %p62 = pneg %p56
      %p63 = scmp.eq.s32.totalorder %s12, 1
      %p64 = por %p62, %p63
      %p65 = scmp.ne.s32.totalorder %s57, %s60
      %p66 = scmp.eq.s32.totalorder %s12, 0
      %p67 = por %p65, %p66
      %p68 = scmp.ne.s32.totalorder %s57, %s60
      %p69 = scmp.eq.s32.totalorder %s17, 1
      %p70 = por %p68, %p69
      %p71 = scmp.ne.s32.totalorder %s60, %s61
      %p72 = scmp.eq.s32.totalorder %s17, 0
      %p73 = por %p71, %p72
      %p74 = scmp.ne.s32.totalorder %s60, %s61
      %p75 = scmp.eq.s32.totalorder %s18, 1
      %p76 = por %p74, %p75
      %p78 = scmp.ne.s32.totalorder %s61, %s77
      %p79 = scmp.eq.s32.totalorder %s18, 0
      %p80 = por %p78, %p79
      %p81 = scmp.le.s32.totalorder 1, %s12
      %p82 = scmp.lt.s32.totalorder %s12, 3
      %p83 = pnand %p81, %p82
      %p84 = pneg %p83
      // Predicated region
      $region9: #{separable_conv2d.1} parent=5 // pred_check
        _
      $region10: #{separable_conv2d.1} parent=5 // pred_check_branch
        %86 = sbr.rel (%p83) target = $region12
      $region11: #{separable_conv2d.1} parent=5 // pred_region
        %s87 = ssub.s32 %s12, 1
        // Predicated region
        $region13: #{separable_conv2d.1} parent=11 // pred_check
          %p88 = pneg %p45
        $region14: #{separable_conv2d.1} parent=11 // pred_check_branch
          %90 = sbr.rel (%p88) target = $region16
        $region15: #{separable_conv2d.1} parent=11 // pred_region
          %s92 = ssub.s32 9216, 9216
          %93 = vsyncadd [#allocation5], %s92
          %s94 = sshll.u32 [#allocation4], 4
          %s95 = int_to_ptr.vmem [resolvable:$true] %s94
          %100 = dma.hbm_to_vmem [thread:$0]  %s1, 9216, %s95, [#allocation5], 64, 64, 4
        $region16: #{separable_conv2d.1} parent=11 // pred_fallthru
          _
      $region12: #{separable_conv2d.1} parent=5 // pred_fallthru
        _
      %p101 = scmp.lt.s32.totalorder %s12, 2
      // Predicated region
      $region17: #{separable_conv2d.1} parent=5 // pred_check
        %p102 = pneg %p101
      $region18: #{separable_conv2d.1} parent=5 // pred_check_branch
        %104 = sbr.rel (%p102) target = $region20
      $region19: #{separable_conv2d.1} parent=5 // pred_region
        _
      $region20: #{separable_conv2d.1} parent=5 // pred_fallthru
        _
      %p105 = scmp.le.s32.totalorder 1, %s12
      %p106 = scmp.lt.s32.totalorder %s12, 3
      %p107 = pnand %p105, %p106
      %p108 = pneg %p107
      // Predicated region
      $region21: #{separable_conv2d.1} parent=5 // pred_check
        _
      $region22: #{separable_conv2d.1} parent=5 // pred_check_branch
        %110 = sbr.rel (%p107) target = $region24
      $region23: #{separable_conv2d.1} parent=5 // pred_region
        %s111 = ssub.s32 %s12, 1
        // Predicated region
        $region25: #{separable_conv2d.1} parent=23 // pred_check
          %p112 = pneg %p45
        $region26: #{separable_conv2d.1} parent=23 // pred_check_branch
          %114 = sbr.rel (%p112) target = $region28
        $region27: #{separable_conv2d.1} parent=23 // pred_region
          %115 = dma.done [#allocation5], 9216
        $region28: #{separable_conv2d.1} parent=23 // pred_fallthru
          _
        %p116 = pneg %p45
        %p117 = pneg %p42
        %p118 = pneg %p73
        %p119 = pneg %p70
        %s120 = sand.u32 %s60, 1
        %s121 = scalar_lea.sflag [#allocation6], %s120
        %s122 = sand.u32 %s60, 1
        %s123 = smul.addr %s122, 256
        %s124 = scalar_lea.vmem [#allocation7], %s123
        %s125 = smul.u32 16, %s22
        %p127 = scmp.lt.s32.totalorder %s22, 0
        %s128 = ssub.s32 0, %s22
        %s129 = scalar_select %p127, %s128, %s22
        %s130 = sand.u32 %s129, 1
        %s131 = ssub.s32 0, %s130
        %s132 = scalar_select %p127, %s131, %s130
        %p133 = scmp.eq.s32.totalorder %s22, 0
        // Predicated region
        $region29: #{separable_conv2d.1} parent=23 // pred_check
          %p134 = pneg %p133
        $region30: #{separable_conv2d.1} parent=23 // pred_check_branch
          %136 = sbr.rel (%p134) target = $region32
        $region31: #{separable_conv2d.1} parent=23 // pred_region
          %s137 = smul.u32 %s21, 54
          %s138 = smul.addr %s137, 64
          %s139 = scalar_lea.hbm %s0, %s138
          // Predicated region
          $region33: #{separable_conv2d.1} parent=31 // pred_check
            _
          $region34: #{separable_conv2d.1} parent=31 // pred_check_branch
            %141 = sbr.rel target = $region36
          $region35: #{separable_conv2d.1} parent=31 // pred_region
            %142 = sst [smem:[#allocation10]] [#allocation9]
            %143 = sst [smem:[#allocation11]] [#allocation8]
          $region36: #{separable_conv2d.1} parent=31 // pred_fallthru
            _
          %145 = shalt.err (0)
          %s147 = sshll.u32 [#allocation2], 4
          %s148 = int_to_ptr.vmem [resolvable:$true] %s147
          %150 = dma.hbm_to_vmem [thread:$0]  %s139, 3456, %s148, [#allocation3]
        $region32: #{separable_conv2d.1} parent=23 // pred_fallthru
          _
        %s151 = sadd.s32 %s22, 1
        %p152 = scmp.lt.s32.totalorder %s151, 1
        // Predicated region
        $region37: #{separable_conv2d.1} parent=23 // pred_check
          %p153 = pneg %p152
        $region38: #{separable_conv2d.1} parent=23 // pred_check_branch
          %155 = sbr.rel (%p153) target = $region40
        $region39: #{separable_conv2d.1} parent=23 // pred_region
          %s156 = ssub.s32 1, %s132
          %s157 = smul.u32 %s151, 16
          %s158 = smul.u32 %s157, 3
          %s159 = smul.u32 %s21, 54
          %s160 = sadd.s32 %s158, %s159
          %s161 = smul.addr %s160, 64
          %s162 = scalar_lea.hbm %s0, %s161
          %s163 = smul.u32 %s156, 54
          %s164 = smul.addr %s163, 4
          %s165 = scalar_lea.vmem [#allocation2], %s164
          %s166 = scalar_lea.sflag [#allocation3], %s156
          // Predicated region
          $region41: #{separable_conv2d.1} parent=39 // pred_check
            _
          $region42: #{separable_conv2d.1} parent=39 // pred_check_branch
            %168 = sbr.rel target = $region44
          $region43: #{separable_conv2d.1} parent=39 // pred_region
            %169 = sst [smem:[#allocation10]] [#allocation13]
            %170 = sst [smem:[#allocation11]] [#allocation12]
          $region44: #{separable_conv2d.1} parent=39 // pred_fallthru
            _
          %172 = shalt.err (0)
          %s174 = sshll.u32 %s165, 4
          %s175 = int_to_ptr.vmem [resolvable:$true] %s174
          %177 = dma.hbm_to_vmem [thread:$0]  %s162, 3456, %s175, %s166
        $region40: #{separable_conv2d.1} parent=23 // pred_fallthru
          _
        %s178 = smul.u32 %s22, 16
        %s179 = smul.u32 %s132, 54
        %s180 = smul.addr %s179, 4
        %s181 = scalar_lea.vmem [#allocation2], %s180
        %s182 = scalar_lea.sflag [#allocation3], %s132
        %s183 = smul.u32 4, 18
        %s184 = smul.u32 %s183, 3
        %s185 = smul.u32 %s184, 1
        %s186 = sshll.u32 %s185, 4
        %187 = dma.done %s182, %s186
        %v188 = vld [vmem:[%s181] sm:$0xf]
        %v189 = vld [vmem:[%s181 + $0x4] sm:$0xf]
        %v190 = vld [vmem:[%s181 + $0x8] sm:$0xf]
        %v191 = vld [vmem:[%s181 + $0xc] sm:$0xf]
        %v192 = vld [vmem:[%s181 + $0x10] sm:$0xf]
        %v193 = vld [vmem:[%s181 + $0x14] sm:$0xf]
        %v194 = vld [vmem:[%s181 + $0x18] sm:$0xf]
        %v195 = vld [vmem:[%s181 + $0x1c] sm:$0xf]
        %v196 = vld [vmem:[%s181 + $0x20] sm:$0xf]
        %v197 = vld [vmem:[%s181 + $0x24] sm:$0xf]
        %v198 = vld [vmem:[%s181 + $0x28] sm:$0xf]
        %v199 = vld [vmem:[%s181 + $0x2c] sm:$0xf]
        %v200 = vld [vmem:[%s181 + $0x30] sm:$0xf]
        %v201 = vld [vmem:[%s181 + $0x34] sm:$0xf]
        %v202 = vld [vmem:[%s181 + $0x38] sm:$0xf]
        %v203 = vld [vmem:[%s181 + $0x3c] sm:$0xf]
        %v204 = vld [vmem:[%s181 + $0x40] sm:$0xf]
        %v205 = vld [vmem:[%s181 + $0x44] sm:$0xf]
        %v206 = vld [vmem:[%s181 + $0x48] sm:$0xf]
        %v207 = vld [vmem:[%s181 + $0x4c] sm:$0xf]
        %v208 = vld [vmem:[%s181 + $0x50] sm:$0xf]
        %v209 = vld [vmem:[%s181 + $0x54] sm:$0xf]
        %v210 = vld [vmem:[%s181 + $0x58] sm:$0xf]
        %v211 = vld [vmem:[%s181 + $0x5c] sm:$0xf]
        %v212 = vld [vmem:[%s181 + $0x60] sm:$0xf]
        %v213 = vld [vmem:[%s181 + $0x64] sm:$0xf]
        %v214 = vld [vmem:[%s181 + $0x68] sm:$0xf]
        %v215 = vld [vmem:[%s181 + $0x6c] sm:$0xf]
        %v216 = vld [vmem:[%s181 + $0x70] sm:$0xf]
        %v217 = vld [vmem:[%s181 + $0x74] sm:$0xf]
        %v218 = vld [vmem:[%s181 + $0x78] sm:$0xf]
        %v219 = vld [vmem:[%s181 + $0x7c] sm:$0xf]
        %v220 = vld [vmem:[%s181 + $0x80] sm:$0xf]
        %v221 = vld [vmem:[%s181 + $0x84] sm:$0xf]
        %v222 = vld [vmem:[%s181 + $0x88] sm:$0xf]
        %v223 = vld [vmem:[%s181 + $0x8c] sm:$0xf]
        %v224 = vld [vmem:[%s181 + $0x90] sm:$0xf]
        %v225 = vld [vmem:[%s181 + $0x94] sm:$0xf]
        %v226 = vld [vmem:[%s181 + $0x98] sm:$0xf]
        %v227 = vld [vmem:[%s181 + $0x9c] sm:$0xf]
        %v228 = vld [vmem:[%s181 + $0xa0] sm:$0xf]
        %v229 = vld [vmem:[%s181 + $0xa4] sm:$0xf]
        %v230 = vld [vmem:[%s181 + $0xa8] sm:$0xf]
        %v231 = vld [vmem:[%s181 + $0xac] sm:$0xf]
        %v232 = vld [vmem:[%s181 + $0xb0] sm:$0xf]
        %v233 = vld [vmem:[%s181 + $0xb4] sm:$0xf]
        %v234 = vld [vmem:[%s181 + $0xb8] sm:$0xf]
        %v235 = vld [vmem:[%s181 + $0xbc] sm:$0xf]
        %v236 = vld [vmem:[%s181 + $0xc0] sm:$0xf]
        %v237 = vld [vmem:[%s181 + $0xc4] sm:$0xf]
        %v238 = vld [vmem:[%s181 + $0xc8] sm:$0xf]
        %v239 = vld [vmem:[%s181 + $0xcc] sm:$0xf]
        %v240 = vld [vmem:[%s181 + $0xd0] sm:$0xf]
        %v241 = vld [vmem:[%s181 + $0xd4] sm:$0xf]
        %v242 = vld [vmem:[#allocation4] sm:$0xf]
        %v243 = vld [vmem:[#allocation4 + $0x4] sm:$0xf]
        %v244 = vld [vmem:[#allocation4 + $0x8] sm:$0xf]
        %v245 = vld [vmem:[#allocation4 + $0xc] sm:$0xf]
        %v246 = vld [vmem:[#allocation4 + $0x10] sm:$0xf]
        %v247 = vld [vmem:[#allocation4 + $0x14] sm:$0xf]
        %v248 = vld [vmem:[#allocation4 + $0x18] sm:$0xf]
        %v249 = vld [vmem:[#allocation4 + $0x1c] sm:$0xf]
        %v250 = vld [vmem:[#allocation4 + $0x20] sm:$0xf]
        %v251 = vld [vmem:[#allocation4 + $0x24] sm:$0xf]
        %v252 = vld [vmem:[#allocation4 + $0x28] sm:$0xf]
        %v253 = vld [vmem:[#allocation4 + $0x2c] sm:$0xf]
        %v254 = vld [vmem:[#allocation4 + $0x30] sm:$0xf]
        %v255 = vld [vmem:[#allocation4 + $0x34] sm:$0xf]
        %v256 = vld [vmem:[#allocation4 + $0x38] sm:$0xf]
        %v257 = vld [vmem:[#allocation4 + $0x3c] sm:$0xf]
        %vm258 = vsmask.f32 3328
        %vm259 = vsmask.f32 7440
        %vm260 = vmor %vm258, %vm259
        %v262 = vshrl.u32 %v188, 16
        %v264 = vrot.slane %v262, 4
        %v265 = vshll.u32 %v188, 16
        %v267 = vrot.slane %v265, 5
        %v268 = vor.u32 %v264, %v267
        %v269 = vrot.slane %v268, 4
        %v271 = vshll.u32 %v189, 16
        %v273 = vrot.slane %v271, 5
        %v274 = vsel %vm260, %v269, %v273
        %v275 = vshrl.u32 %v189, 16
        %v277 = vrot.slane %v275, 4
        %v278 = vor.u32 %v277, %v273
        %v279 = vrot.slane %v278, 4
        %v281 = vshll.u32 %v190, 16
        %v283 = vrot.slane %v281, 5
        %v284 = vsel %vm260, %v279, %v283
        %v286 = vshrl.u32 %v191, 16
        %v288 = vrot.slane %v286, 4
        %v289 = vshll.u32 %v191, 16
        %v291 = vrot.slane %v289, 5
        %v292 = vor.u32 %v288, %v291
        %v293 = vrot.slane %v292, 4
        %v295 = vshll.u32 %v192, 16
        %v297 = vrot.slane %v295, 5
        %v298 = vsel %vm260, %v293, %v297
        %v299 = vshrl.u32 %v192, 16
        %v301 = vrot.slane %v299, 4
        %v302 = vor.u32 %v301, %v297
        %v303 = vrot.slane %v302, 4
        %v305 = vshll.u32 %v193, 16
        %v307 = vrot.slane %v305, 5
        %v308 = vsel %vm260, %v303, %v307
        %v310 = vshrl.u32 %v194, 16
        %v312 = vrot.slane %v310, 4
        %v313 = vshll.u32 %v194, 16
        %v315 = vrot.slane %v313, 5
        %v316 = vor.u32 %v312, %v315
        %v317 = vrot.slane %v316, 4
        %v319 = vshll.u32 %v195, 16
        %v321 = vrot.slane %v319, 5
        %v322 = vsel %vm260, %v317, %v321
        %v323 = vshrl.u32 %v195, 16
        %v325 = vrot.slane %v323, 4
        %v326 = vor.u32 %v325, %v321
        %v327 = vrot.slane %v326, 4
        %v329 = vshll.u32 %v196, 16
        %v331 = vrot.slane %v329, 5
        %v332 = vsel %vm260, %v327, %v331
        %v334 = vshrl.u32 %v197, 16
        %v336 = vrot.slane %v334, 4
        %v337 = vshll.u32 %v197, 16
        %v339 = vrot.slane %v337, 5
        %v340 = vor.u32 %v336, %v339
        %v341 = vrot.slane %v340, 4
        %v343 = vshll.u32 %v198, 16
        %v345 = vrot.slane %v343, 5
        %v346 = vsel %vm260, %v341, %v345
        %v347 = vshrl.u32 %v198, 16
        %v349 = vrot.slane %v347, 4
        %v350 = vor.u32 %v349, %v345
        %v351 = vrot.slane %v350, 4
        %v353 = vshll.u32 %v199, 16
        %v355 = vrot.slane %v353, 5
        %v356 = vsel %vm260, %v351, %v355
        %v358 = vshrl.u32 %v200, 16
        %v360 = vrot.slane %v358, 4
        %v361 = vshll.u32 %v200, 16
        %v363 = vrot.slane %v361, 5
        %v364 = vor.u32 %v360, %v363
        %v365 = vrot.slane %v364, 4
        %v367 = vshll.u32 %v201, 16
        %v369 = vrot.slane %v367, 5
        %v370 = vsel %vm260, %v365, %v369
        %v371 = vshrl.u32 %v201, 16
        %v373 = vrot.slane %v371, 4
        %v374 = vor.u32 %v373, %v369
        %v375 = vrot.slane %v374, 4
        %v377 = vshll.u32 %v202, 16
        %v379 = vrot.slane %v377, 5
        %v380 = vsel %vm260, %v375, %v379
        %v382 = vshrl.u32 %v203, 16
        %v384 = vrot.slane %v382, 4
        %v385 = vshll.u32 %v203, 16
        %v387 = vrot.slane %v385, 5
        %v388 = vor.u32 %v384, %v387
        %v389 = vrot.slane %v388, 4
        %v391 = vshll.u32 %v204, 16
        %v393 = vrot.slane %v391, 5
        %v394 = vsel %vm260, %v389, %v393
        %v395 = vshrl.u32 %v204, 16
        %v397 = vrot.slane %v395, 4
        %v398 = vor.u32 %v397, %v393
        %v399 = vrot.slane %v398, 4
        %v401 = vshll.u32 %v205, 16
        %v403 = vrot.slane %v401, 5
        %v404 = vsel %vm260, %v399, %v403
        %v406 = vshrl.u32 %v206, 16
        %v408 = vrot.slane %v406, 4
        %v409 = vshll.u32 %v206, 16
        %v411 = vrot.slane %v409, 5
        %v412 = vor.u32 %v408, %v411
        %v413 = vrot.slane %v412, 4
        %v415 = vshll.u32 %v207, 16
        %v417 = vrot.slane %v415, 5
        %v418 = vsel %vm260, %v413, %v417
        %v419 = vshrl.u32 %v207, 16
        %v421 = vrot.slane %v419, 4
        %v422 = vor.u32 %v421, %v417
        %v423 = vrot.slane %v422, 4
        %v425 = vshll.u32 %v208, 16
        %v427 = vrot.slane %v425, 5
        %v428 = vsel %vm260, %v423, %v427
        %v430 = vshrl.u32 %v209, 16
        %v432 = vrot.slane %v430, 4
        %v433 = vshll.u32 %v209, 16
        %v435 = vrot.slane %v433, 5
        %v436 = vor.u32 %v432, %v435
        %v437 = vrot.slane %v436, 4
        %v439 = vshll.u32 %v210, 16
        %v441 = vrot.slane %v439, 5
        %v442 = vsel %vm260, %v437, %v441
        %v443 = vshrl.u32 %v210, 16
        %v445 = vrot.slane %v443, 4
        %v446 = vor.u32 %v445, %v441
        %v447 = vrot.slane %v446, 4
        %v449 = vshll.u32 %v211, 16
        %v451 = vrot.slane %v449, 5
        %v452 = vsel %vm260, %v447, %v451
        %v454 = vshrl.u32 %v212, 16
        %v456 = vrot.slane %v454, 4
        %v457 = vshll.u32 %v212, 16
        %v459 = vrot.slane %v457, 5
        %v460 = vor.u32 %v456, %v459
        %v461 = vrot.slane %v460, 4
        %v463 = vshll.u32 %v213, 16
        %v465 = vrot.slane %v463, 5
        %v466 = vsel %vm260, %v461, %v465
        %v467 = vshrl.u32 %v213, 16
        %v469 = vrot.slane %v467, 4
        %v470 = vor.u32 %v469, %v465
        %v471 = vrot.slane %v470, 4
        %v473 = vshll.u32 %v214, 16
        %v475 = vrot.slane %v473, 5
        %v476 = vsel %vm260, %v471, %v475
        %v478 = vshrl.u32 %v215, 16
        %v480 = vrot.slane %v478, 4
        %v481 = vshll.u32 %v215, 16
        %v483 = vrot.slane %v481, 5
        %v484 = vor.u32 %v480, %v483
        %v485 = vrot.slane %v484, 4
        %v487 = vshll.u32 %v216, 16
        %v489 = vrot.slane %v487, 5
        %v490 = vsel %vm260, %v485, %v489
        %v491 = vshrl.u32 %v216, 16
        %v493 = vrot.slane %v491, 4
        %v494 = vor.u32 %v493, %v489
        %v495 = vrot.slane %v494, 4
        %v497 = vshll.u32 %v217, 16
        %v499 = vrot.slane %v497, 5
        %v500 = vsel %vm260, %v495, %v499
        %v502 = vshrl.u32 %v218, 16
        %v504 = vrot.slane %v502, 4
        %v505 = vshll.u32 %v218, 16
        %v507 = vrot.slane %v505, 5
        %v508 = vor.u32 %v504, %v507
        %v509 = vrot.slane %v508, 4
        %v511 = vshll.u32 %v219, 16
        %v513 = vrot.slane %v511, 5
        %v514 = vsel %vm260, %v509, %v513
        %v515 = vshrl.u32 %v219, 16
        %v517 = vrot.slane %v515, 4
        %v518 = vor.u32 %v517, %v513
        %v519 = vrot.slane %v518, 4
        %v521 = vshll.u32 %v220, 16
        %v523 = vrot.slane %v521, 5
        %v524 = vsel %vm260, %v519, %v523
        %v526 = vshrl.u32 %v221, 16
        %v528 = vrot.slane %v526, 4
        %v529 = vshll.u32 %v221, 16
        %v531 = vrot.slane %v529, 5
        %v532 = vor.u32 %v528, %v531
        %v533 = vrot.slane %v532, 4
        %v535 = vshll.u32 %v222, 16
        %v537 = vrot.slane %v535, 5
        %v538 = vsel %vm260, %v533, %v537
        %v539 = vshrl.u32 %v222, 16
        %v541 = vrot.slane %v539, 4
        %v542 = vor.u32 %v541, %v537
        %v543 = vrot.slane %v542, 4
        %v545 = vshll.u32 %v223, 16
        %v547 = vrot.slane %v545, 5
        %v548 = vsel %vm260, %v543, %v547
        %v550 = vshrl.u32 %v224, 16
        %v552 = vrot.slane %v550, 4
        %v553 = vshll.u32 %v224, 16
        %v555 = vrot.slane %v553, 5
        %v556 = vor.u32 %v552, %v555
        %v557 = vrot.slane %v556, 4
        %v559 = vshll.u32 %v225, 16
        %v561 = vrot.slane %v559, 5
        %v562 = vsel %vm260, %v557, %v561
        %v563 = vshrl.u32 %v225, 16
        %v565 = vrot.slane %v563, 4
        %v566 = vor.u32 %v565, %v561
        %v567 = vrot.slane %v566, 4
        %v569 = vshll.u32 %v226, 16
        %v571 = vrot.slane %v569, 5
        %v572 = vsel %vm260, %v567, %v571
        %v574 = vshrl.u32 %v227, 16
        %v576 = vrot.slane %v574, 4
        %v577 = vshll.u32 %v227, 16
        %v579 = vrot.slane %v577, 5
        %v580 = vor.u32 %v576, %v579
        %v581 = vrot.slane %v580, 4
        %v583 = vshll.u32 %v228, 16
        %v585 = vrot.slane %v583, 5
        %v586 = vsel %vm260, %v581, %v585
        %v587 = vshrl.u32 %v228, 16
        %v589 = vrot.slane %v587, 4
        %v590 = vor.u32 %v589, %v585
        %v591 = vrot.slane %v590, 4
        %v593 = vshll.u32 %v229, 16
        %v595 = vrot.slane %v593, 5
        %v596 = vsel %vm260, %v591, %v595
        %v598 = vshrl.u32 %v230, 16
        %v600 = vrot.slane %v598, 4
        %v601 = vshll.u32 %v230, 16
        %v603 = vrot.slane %v601, 5
        %v604 = vor.u32 %v600, %v603
        %v605 = vrot.slane %v604, 4
        %v607 = vshll.u32 %v231, 16
        %v609 = vrot.slane %v607, 5
        %v610 = vsel %vm260, %v605, %v609
        %v611 = vshrl.u32 %v231, 16
        %v613 = vrot.slane %v611, 4
        %v614 = vor.u32 %v613, %v609
        %v615 = vrot.slane %v614, 4
        %v617 = vshll.u32 %v232, 16
        %v619 = vrot.slane %v617, 5
        %v620 = vsel %vm260, %v615, %v619
        %v622 = vshrl.u32 %v233, 16
        %v624 = vrot.slane %v622, 4
        %v625 = vshll.u32 %v233, 16
        %v627 = vrot.slane %v625, 5
        %v628 = vor.u32 %v624, %v627
        %v629 = vrot.slane %v628, 4
        %v631 = vshll.u32 %v234, 16
        %v633 = vrot.slane %v631, 5
        %v634 = vsel %vm260, %v629, %v633
        %v635 = vshrl.u32 %v234, 16
        %v637 = vrot.slane %v635, 4
        %v638 = vor.u32 %v637, %v633
        %v639 = vrot.slane %v638, 4
        %v641 = vshll.u32 %v235, 16
        %v643 = vrot.slane %v641, 5
        %v644 = vsel %vm260, %v639, %v643
        %s645 = scalar_lea.vmem [#allocation4], 64
        %v646 = vld [vmem:[%s645] sm:$0xf]
        %v647 = vld [vmem:[%s645 + $0x4] sm:$0xf]
        %v648 = vld [vmem:[%s645 + $0x8] sm:$0xf]
        %v649 = vld [vmem:[%s645 + $0xc] sm:$0xf]
        %v650 = vld [vmem:[%s645 + $0x10] sm:$0xf]
        %v651 = vld [vmem:[%s645 + $0x14] sm:$0xf]
        %v652 = vld [vmem:[%s645 + $0x18] sm:$0xf]
        %v653 = vld [vmem:[%s645 + $0x1c] sm:$0xf]
        %v654 = vld [vmem:[%s645 + $0x20] sm:$0xf]
        %v655 = vld [vmem:[%s645 + $0x24] sm:$0xf]
        %v656 = vld [vmem:[%s645 + $0x28] sm:$0xf]
        %v657 = vld [vmem:[%s645 + $0x2c] sm:$0xf]
        %v658 = vld [vmem:[%s645 + $0x30] sm:$0xf]
        %v659 = vld [vmem:[%s645 + $0x34] sm:$0xf]
        %v660 = vld [vmem:[%s645 + $0x38] sm:$0xf]
        %v661 = vld [vmem:[%s645 + $0x3c] sm:$0xf]
        %v662 = vunpack.c.l.b16 %v274
        %v663 = vunpack.c.l.b16 %v284
        %v664 = vunpack.c.l.b16 %v298
        %v665 = vunpack.c.l.b16 %v308
        %v666 = vunpack.c.l.b16 %v322
        %v667 = vunpack.c.l.b16 %v332
        %v668 = vunpack.c.l.b16 %v346
        %v669 = vunpack.c.l.b16 %v356
        %v670 = vunpack.c.l.b16 %v370
        %v671 = vunpack.c.l.b16 %v380
        %v672 = vunpack.c.l.b16 %v394
        %v673 = vunpack.c.l.b16 %v404
        %v674 = vunpack.c.l.b16 %v418
        %v675 = vunpack.c.l.b16 %v428
        %v676 = vunpack.c.l.b16 %v442
        %v677 = vunpack.c.l.b16 %v452
        %v678 = vunpack.c.l.b16 %v466
        %v679 = vunpack.c.l.b16 %v476
        %v680 = vunpack.c.l.b16 %v490
        %v681 = vunpack.c.l.b16 %v500
        %v682 = vunpack.c.l.b16 %v514
        %v683 = vunpack.c.l.b16 %v524
        %v684 = vunpack.c.l.b16 %v538
        %v685 = vunpack.c.l.b16 %v548
        %v686 = vunpack.c.l.b16 %v562
        %v687 = vunpack.c.l.b16 %v572
        %v688 = vunpack.c.l.b16 %v586
        %v689 = vunpack.c.l.b16 %v596
        %v690 = vunpack.c.l.b16 %v610
        %v691 = vunpack.c.l.b16 %v620
        %v692 = vunpack.c.l.b16 %v634
        %v693 = vunpack.c.l.b16 %v644
        %v694 = vpack.c.b16 %v663, %v662
        %v695 = vpack.c.b16 %v665, %v664
        %v696 = vpack.c.b16 %v667, %v666
        %v697 = vpack.c.b16 %v669, %v668
        %v698 = vpack.c.b16 %v671, %v670
        %v699 = vpack.c.b16 %v673, %v672
        %v700 = vpack.c.b16 %v675, %v674
        %v701 = vpack.c.b16 %v677, %v676
        %v702 = vpack.c.b16 %v679, %v678
        %v703 = vpack.c.b16 %v681, %v680
        %v704 = vpack.c.b16 %v683, %v682
        %v705 = vpack.c.b16 %v685, %v684
        %v706 = vpack.c.b16 %v687, %v686
        %v707 = vpack.c.b16 %v689, %v688
        %v708 = vpack.c.b16 %v691, %v690
        %v709 = vpack.c.b16 %v693, %v692
        %v742 = vunpack.c.l.b16 %v646
        %v743 = vunpack.c.l.b16 %v647
        %v744 = vunpack.c.l.b16 %v648
        %v745 = vunpack.c.l.b16 %v649
        %v746 = vunpack.c.l.b16 %v650
        %v747 = vunpack.c.l.b16 %v651
        %v748 = vunpack.c.l.b16 %v652
        %v749 = vunpack.c.l.b16 %v653
        %v750 = vunpack.c.l.b16 %v654
        %v751 = vunpack.c.l.b16 %v655
        %v752 = vunpack.c.l.b16 %v656
        %v753 = vunpack.c.l.b16 %v657
        %v754 = vunpack.c.l.b16 %v658
        %v755 = vunpack.c.l.b16 %v659
        %v756 = vunpack.c.l.b16 %v660
        %v757 = vunpack.c.l.b16 %v661
        %v758 = vpack.c.b16 %v743, %v742
        %v759 = vpack.c.b16 %v745, %v744
        %v760 = vpack.c.b16 %v747, %v746
        %v761 = vpack.c.b16 %v749, %v748
        %v762 = vpack.c.b16 %v751, %v750
        %v763 = vpack.c.b16 %v753, %v752
        %v764 = vpack.c.b16 %v755, %v754
        %v765 = vpack.c.b16 %v757, %v756
        %774 = vmatprep.subr.bf16.mxu0 0
        %775 = vmatpush1.bf16.msra.mxu0 %v758
        %776 = vmatprep.subr.bf16.mxu0 0
        %777 = vmatpush1.bf16.msra.mxu0 %v759
        %778 = vmatprep.subr.bf16.mxu0 0
        %779 = vmatpush1.bf16.msra.mxu0 %v760
        %780 = vmatprep.subr.bf16.mxu0 0
        %781 = vmatpush1.bf16.msra.mxu0 %v761
        %782 = vmatprep.subr.bf16.mxu0 0
        %783 = vmatpush1.bf16.msra.mxu0 %v762
        %784 = vmatprep.subr.bf16.mxu0 0
        %785 = vmatpush1.bf16.msra.mxu0 %v763
        %786 = vmatprep.subr.bf16.mxu0 0
        %787 = vmatpush1.bf16.msra.mxu0 %v764
        %788 = vmatprep.subr.bf16.mxu0 0
        %789 = vmatpush1.bf16.msra.mxu0 %v765
        %790 = vmatprep.subr.bf16.mxu0 0
        %791 = vmatpush1.bf16.msra.mxu0 0
        %792 = vmatprep.subr.bf16.mxu0 0
        %793 = vmatpush1.bf16.msra.mxu0 0
        %794 = vmatprep.subr.bf16.mxu0 0
        %795 = vmatpush1.bf16.msra.mxu0 0
        %796 = vmatprep.subr.bf16.mxu0 0
        %797 = vmatpush1.bf16.msra.mxu0 0
        %798 = vmatprep.subr.bf16.mxu0 0
        %799 = vmatpush1.bf16.msra.mxu0 0
        %800 = vmatprep.subr.bf16.mxu0 0
        %801 = vmatpush1.bf16.msra.mxu0 0
        %802 = vmatprep.subr.bf16.mxu0 0
        %803 = vmatpush1.bf16.msra.mxu0 0
        %804 = vmatprep.subr.bf16.mxu0 0
        %805 = vmatpush1.bf16.msra.mxu0 0
        %806 = vmatprep.mubr.bf16.mxu0 0
        %807 = vmatmul.mubr.bf16.gmra.mrb[0].mxu0 %v694
        %v808 = vpop.f32.mrb[0].mxu0
        %v809 = vadd.f32 0.0, %v808
        %v810 = vpop.f32.mrb[0].mxu0
        %v811 = vpop.f32.mrb[0].mxu0
        %v812 = vadd.f32 0.0, %v811
        %v813 = vpop.f32.mrb[0].mxu0
        %814 = vmatprep.mubr.bf16.mxu0 0
        %815 = vmatmul.mubr.bf16.gmra.mrb[0].mxu0 %v695
        %v816 = vpop.f32.mrb[0].mxu0
        %v817 = vadd.f32 0.0, %v816
        %v818 = vpop.f32.mrb[0].mxu0
        %v819 = vpop.f32.mrb[0].mxu0
        %v820 = vadd.f32 0.0, %v819
        %v821 = vpop.f32.mrb[0].mxu0
        %822 = vmatprep.mubr.bf16.mxu0 0
        %823 = vmatmul.mubr.bf16.gmra.mrb[0].mxu0 %v696
        %v824 = vpop.f32.mrb[0].mxu0
        %v825 = vadd.f32 0.0, %v824
        %v826 = vpop.f32.mrb[0].mxu0
        %v827 = vpop.f32.mrb[0].mxu0
        %v828 = vadd.f32 0.0, %v827
        %v829 = vpop.f32.mrb[0].mxu0
        %830 = vmatprep.mubr.bf16.mxu0 0
        %831 = vmatmul.mubr.bf16.gmra.mrb[0].mxu0 %v697
        %v832 = vpop.f32.mrb[0].mxu0
        %v833 = vadd.f32 0.0, %v832
        %v834 = vpop.f32.mrb[0].mxu0
        %v835 = vpop.f32.mrb[0].mxu0
        %v836 = vadd.f32 0.0, %v835
        %v837 = vpop.f32.mrb[0].mxu0
        %838 = vmatprep.mubr.bf16.mxu0 0
        %839 = vmatmul.mubr.bf16.gmra.mrb[0].mxu0 %v698
        %v840 = vpop.f32.mrb[0].mxu0
        %v841 = vadd.f32 0.0, %v840
        %v842 = vpop.f32.mrb[0].mxu0
        %v843 = vpop.f32.mrb[0].mxu0
        %v844 = vadd.f32 0.0, %v843
        %v845 = vpop.f32.mrb[0].mxu0
        %846 = vmatprep.mubr.bf16.mxu0 0
        %847 = vmatmul.mubr.bf16.gmra.mrb[0].mxu0 %v699
        %v848 = vpop.f32.mrb[0].mxu0
        %v849 = vadd.f32 0.0, %v848
        %v850 = vpop.f32.mrb[0].mxu0
        %v851 = vpop.f32.mrb[0].mxu0
        %v852 = vadd.f32 0.0, %v851
        %v853 = vpop.f32.mrb[0].mxu0
        %854 = vmatprep.mubr.bf16.mxu0 0
        %855 = vmatmul.mubr.bf16.gmra.mrb[0].mxu0 %v700
        %v856 = vpop.f32.mrb[0].mxu0
        %v857 = vadd.f32 0.0, %v856
        %v858 = vpop.f32.mrb[0].mxu0
        %v859 = vpop.f32.mrb[0].mxu0
        %v860 = vadd.f32 0.0, %v859
        %v861 = vpop.f32.mrb[0].mxu0
        %862 = vmatprep.mubr.bf16.mxu0 0
        %863 = vmatmul.mubr.bf16.gmra.mrb[0].mxu0 %v701
        %v864 = vpop.f32.mrb[0].mxu0
        %v865 = vadd.f32 0.0, %v864
        %v866 = vpop.f32.mrb[0].mxu0
        %v867 = vpop.f32.mrb[0].mxu0
        %v868 = vadd.f32 0.0, %v867
        %v869 = vpop.f32.mrb[0].mxu0
        %870 = vmatprep.mubr.bf16.mxu0 0
        %871 = vmatmul.mubr.bf16.gmra.mrb[0].mxu0 %v702
        %v872 = vpop.f32.mrb[0].mxu0
        %v873 = vadd.f32 0.0, %v872
        %v874 = vpop.f32.mrb[0].mxu0
        %v875 = vpop.f32.mrb[0].mxu0
        %v876 = vadd.f32 0.0, %v875
        %v877 = vpop.f32.mrb[0].mxu0
        %878 = vmatprep.mubr.bf16.mxu0 0
        %879 = vmatmul.mubr.bf16.gmra.mrb[0].mxu0 %v703
        %v880 = vpop.f32.mrb[0].mxu0
        %v881 = vadd.f32 0.0, %v880
        %v882 = vpop.f32.mrb[0].mxu0
        %v883 = vpop.f32.mrb[0].mxu0
        %v884 = vadd.f32 0.0, %v883
        %v885 = vpop.f32.mrb[0].mxu0
        %886 = vmatprep.mubr.bf16.mxu0 0
        %887 = vmatmul.mubr.bf16.gmra.mrb[0].mxu0 %v704
        %v888 = vpop.f32.mrb[0].mxu0
        %v889 = vadd.f32 0.0, %v888
        %v890 = vpop.f32.mrb[0].mxu0
        %v891 = vpop.f32.mrb[0].mxu0
        %v892 = vadd.f32 0.0, %v891
        %v893 = vpop.f32.mrb[0].mxu0
        %894 = vmatprep.mubr.bf16.mxu0 0
        %895 = vmatmul.mubr.bf16.gmra.mrb[0].mxu0 %v705
        %v896 = vpop.f32.mrb[0].mxu0
        %v897 = vadd.f32 0.0, %v896
        %v898 = vpop.f32.mrb[0].mxu0
        %v899 = vpop.f32.mrb[0].mxu0
        %v900 = vadd.f32 0.0, %v899
        %v901 = vpop.f32.mrb[0].mxu0
        %902 = vmatprep.mubr.bf16.mxu0 0
        %903 = vmatmul.mubr.bf16.gmra.mrb[0].mxu0 %v706
        %v904 = vpop.f32.mrb[0].mxu0
        %v905 = vadd.f32 0.0, %v904
        %v906 = vpop.f32.mrb[0].mxu0
        %v907 = vpop.f32.mrb[0].mxu0
        %v908 = vadd.f32 0.0, %v907
        %v909 = vpop.f32.mrb[0].mxu0
        %910 = vmatprep.mubr.bf16.mxu0 0
        %911 = vmatmul.mubr.bf16.gmra.mrb[0].mxu0 %v707
        %v912 = vpop.f32.mrb[0].mxu0
        %v913 = vadd.f32 0.0, %v912
        %v914 = vpop.f32.mrb[0].mxu0
        %v915 = vpop.f32.mrb[0].mxu0
        %v916 = vadd.f32 0.0, %v915
        %v917 = vpop.f32.mrb[0].mxu0
        %918 = vmatprep.mubr.bf16.mxu0 0
        %919 = vmatmul.mubr.bf16.gmra.mrb[0].mxu0 %v708
        %v920 = vpop.f32.mrb[0].mxu0
        %v921 = vadd.f32 0.0, %v920
        %v922 = vpop.f32.mrb[0].mxu0
        %v923 = vpop.f32.mrb[0].mxu0
        %v924 = vadd.f32 0.0, %v923
        %v925 = vpop.f32.mrb[0].mxu0
        %926 = vmatprep.mubr.bf16.mxu0 0
        %927 = vmatmul.mubr.bf16.gmra.mrb[0].mxu0 %v709
        %v928 = vpop.f32.mrb[0].mxu0
        %v929 = vadd.f32 0.0, %v928
        %v930 = vpop.f32.mrb[0].mxu0
        %v931 = vpop.f32.mrb[0].mxu0
        %v932 = vadd.f32 0.0, %v931
        %v933 = vpop.f32.mrb[0].mxu0
        %934 = vdwg.mxu0
        %v967 = vunpack.c.l.b16 %v188
        %v968 = vunpack.c.l.b16 %v189
        %v969 = vunpack.c.l.b16 %v191
        %v970 = vunpack.c.l.b16 %v192
        %v971 = vunpack.c.l.b16 %v194
        %v972 = vunpack.c.l.b16 %v195
        %v973 = vunpack.c.l.b16 %v197
        %v974 = vunpack.c.l.b16 %v198
        %v975 = vunpack.c.l.b16 %v200
        %v976 = vunpack.c.l.b16 %v201
        %v977 = vunpack.c.l.b16 %v203
        %v978 = vunpack.c.l.b16 %v204
        %v979 = vunpack.c.l.b16 %v206
        %v980 = vunpack.c.l.b16 %v207
        %v981 = vunpack.c.l.b16 %v209
        %v982 = vunpack.c.l.b16 %v210
        %v983 = vunpack.c.l.b16 %v212
        %v984 = vunpack.c.l.b16 %v213
        %v985 = vunpack.c.l.b16 %v215
        %v986 = vunpack.c.l.b16 %v216
        %v987 = vunpack.c.l.b16 %v218
        %v988 = vunpack.c.l.b16 %v219
        %v989 = vunpack.c.l.b16 %v221
        %v990 = vunpack.c.l.b16 %v222
        %v991 = vunpack.c.l.b16 %v224
        %v992 = vunpack.c.l.b16 %v225
        %v993 = vunpack.c.l.b16 %v227
        %v994 = vunpack.c.l.b16 %v228
        %v995 = vunpack.c.l.b16 %v230
        %v996 = vunpack.c.l.b16 %v231
        %v997 = vunpack.c.l.b16 %v233
        %v998 = vunpack.c.l.b16 %v234
        %v999 = vpack.c.b16 %v968, %v967
        %v1000 = vpack.c.b16 %v970, %v969
        %v1001 = vpack.c.b16 %v972, %v971
        %v1002 = vpack.c.b16 %v974, %v973
        %v1003 = vpack.c.b16 %v976, %v975
        %v1004 = vpack.c.b16 %v978, %v977
        %v1005 = vpack.c.b16 %v980, %v979
        %v1006 = vpack.c.b16 %v982, %v981
        %v1007 = vpack.c.b16 %v984, %v983
        %v1008 = vpack.c.b16 %v986, %v985
        %v1009 = vpack.c.b16 %v988, %v987
        %v1010 = vpack.c.b16 %v990, %v989
        %v1011 = vpack.c.b16 %v992, %v991
        %v1012 = vpack.c.b16 %v994, %v993
        %v1013 = vpack.c.b16 %v996, %v995
        %v1014 = vpack.c.b16 %v998, %v997
        %v1047 = vunpack.c.l.b16 %v242
        %v1048 = vunpack.c.l.b16 %v243
        %v1049 = vunpack.c.l.b16 %v244
        %v1050 = vunpack.c.l.b16 %v245
        %v1051 = vunpack.c.l.b16 %v246
        %v1052 = vunpack.c.l.b16 %v247
        %v1053 = vunpack.c.l.b16 %v248
        %v1054 = vunpack.c.l.b16 %v249
        %v1055 = vunpack.c.l.b16 %v250
        %v1056 = vunpack.c.l.b16 %v251
        %v1057 = vunpack.c.l.b16 %v252
        %v1058 = vunpack.c.l.b16 %v253
        %v1059 = vunpack.c.l.b16 %v254
        %v1060 = vunpack.c.l.b16 %v255
        %v1061 = vunpack.c.l.b16 %v256
        %v1062 = vunpack.c.l.b16 %v257
        %v1063 = vpack.c.b16 %v1048, %v1047
        %v1064 = vpack.c.b16 %v1050, %v1049
        %v1065 = vpack.c.b16 %v1052, %v1051
        %v1066 = vpack.c.b16 %v1054, %v1053
        %v1067 = vpack.c.b16 %v1056, %v1055
        %v1068 = vpack.c.b16 %v1058, %v1057
        %v1069 = vpack.c.b16 %v1060, %v1059
        %v1070 = vpack.c.b16 %v1062, %v1061
        %1079 = vmatprep.subr.bf16.mxu0 0
        %1080 = vmatpush1.bf16.msra.mxu0 %v1063
        %1081 = vmatprep.subr.bf16.mxu0 0
        %1082 = vmatpush1.bf16.msra.mxu0 %v1064
        %1083 = vmatprep.subr.bf16.mxu0 0
        %1084 = vmatpush1.bf16.msra.mxu0 %v1065
        %1085 = vmatprep.subr.bf16.mxu0 0
        %1086 = vmatpush1.bf16.msra.mxu0 %v1066
        %1087 = vmatprep.subr.bf16.mxu0 0
        %1088 = vmatpush1.bf16.msra.mxu0 %v1067
        %1089 = vmatprep.subr.bf16.mxu0 0
        %1090 = vmatpush1.bf16.msra.mxu0 %v1068
        %1091 = vmatprep.subr.bf16.mxu0 0
        %1092 = vmatpush1.bf16.msra.mxu0 %v1069
        %1093 = vmatprep.subr.bf16.mxu0 0
        %1094 = vmatpush1.bf16.msra.mxu0 %v1070
        %1095 = vmatprep.subr.bf16.mxu0 0
        %1096 = vmatpush1.bf16.msra.mxu0 0
        %1097 = vmatprep.subr.bf16.mxu0 0
        %1098 = vmatpush1.bf16.msra.mxu0 0
        %1099 = vmatprep.subr.bf16.mxu0 0
        %1100 = vmatpush1.bf16.msra.mxu0 0
        %1101 = vmatprep.subr.bf16.mxu0 0
        %1102 = vmatpush1.bf16.msra.mxu0 0
        %1103 = vmatprep.subr.bf16.mxu0 0
        %1104 = vmatpush1.bf16.msra.mxu0 0
        %1105 = vmatprep.subr.bf16.mxu0 0
        %1106 = vmatpush1.bf16.msra.mxu0 0
        %1107 = vmatprep.subr.bf16.mxu0 0
        %1108 = vmatpush1.bf16.msra.mxu0 0
        %1109 = vmatprep.subr.bf16.mxu0 0
        %1110 = vmatpush1.bf16.msra.mxu0 0
        %1111 = vmatprep.mubr.bf16.mxu0 0
        %1112 = vmatmul.mubr.bf16.gmra.mrb[0].mxu0 %v999
        %v1113 = vpop.f32.mrb[0].mxu0
        %v1114 = vadd.f32 %v809, %v1113
        %v1115 = vpop.f32.mrb[0].mxu0
        %v1116 = vpop.f32.mrb[0].mxu0
        %v1117 = vadd.f32 %v812, %v1116
        %v1118 = vpop.f32.mrb[0].mxu0
        %1119 = vmatprep.mubr.bf16.mxu0 0
        %1120 = vmatmul.mubr.bf16.gmra.mrb[0].mxu0 %v1000
        %v1121 = vpop.f32.mrb[0].mxu0
        %v1122 = vadd.f32 %v817, %v1121
        %v1123 = vpop.f32.mrb[0].mxu0
        %v1124 = vpop.f32.mrb[0].mxu0
        %v1125 = vadd.f32 %v820, %v1124
        %v1126 = vpop.f32.mrb[0].mxu0
        %1127 = vmatprep.mubr.bf16.mxu0 0
        %1128 = vmatmul.mubr.bf16.gmra.mrb[0].mxu0 %v1001
        %v1129 = vpop.f32.mrb[0].mxu0
        %v1130 = vadd.f32 %v825, %v1129
        %v1131 = vpop.f32.mrb[0].mxu0
        %v1132 = vpop.f32.mrb[0].mxu0
        %v1133 = vadd.f32 %v828, %v1132
        %v1134 = vpop.f32.mrb[0].mxu0
        %1135 = vmatprep.mubr.bf16.mxu0 0
        %1136 = vmatmul.mubr.bf16.gmra.mrb[0].mxu0 %v1002
        %v1137 = vpop.f32.mrb[0].mxu0
        %v1138 = vadd.f32 %v833, %v1137
        %v1139 = vpop.f32.mrb[0].mxu0
        %v1140 = vpop.f32.mrb[0].mxu0
        %v1141 = vadd.f32 %v836, %v1140
        %v1142 = vpop.f32.mrb[0].mxu0
        %1143 = vmatprep.mubr.bf16.mxu0 0
        %1144 = vmatmul.mubr.bf16.gmra.mrb[0].mxu0 %v1003
        %v1145 = vpop.f32.mrb[0].mxu0
        %v1146 = vadd.f32 %v841, %v1145
        %v1147 = vpop.f32.mrb[0].mxu0
        %v1148 = vpop.f32.mrb[0].mxu0
        %v1149 = vadd.f32 %v844, %v1148
        %v1150 = vpop.f32.mrb[0].mxu0
        %1151 = vmatprep.mubr.bf16.mxu0 0
        %1152 = vmatmul.mubr.bf16.gmra.mrb[0].mxu0 %v1004
        %v1153 = vpop.f32.mrb[0].mxu0
        %v1154 = vadd.f32 %v849, %v1153
        %v1155 = vpop.f32.mrb[0].mxu0
        %v1156 = vpop.f32.mrb[0].mxu0
        %v1157 = vadd.f32 %v852, %v1156
        %v1158 = vpop.f32.mrb[0].mxu0
        %1159 = vmatprep.mubr.bf16.mxu0 0
        %1160 = vmatmul.mubr.bf16.gmra.mrb[0].mxu0 %v1005
        %v1161 = vpop.f32.mrb[0].mxu0
        %v1162 = vadd.f32 %v857, %v1161
        %v1163 = vpop.f32.mrb[0].mxu0
        %v1164 = vpop.f32.mrb[0].mxu0
        %v1165 = vadd.f32 %v860, %v1164
        %v1166 = vpop.f32.mrb[0].mxu0
        %1167 = vmatprep.mubr.bf16.mxu0 0
        %1168 = vmatmul.mubr.bf16.gmra.mrb[0].mxu0 %v1006
        %v1169 = vpop.f32.mrb[0].mxu0
        %v1170 = vadd.f32 %v865, %v1169
        %v1171 = vpop.f32.mrb[0].mxu0
        %v1172 = vpop.f32.mrb[0].mxu0
        %v1173 = vadd.f32 %v868, %v1172
        %v1174 = vpop.f32.mrb[0].mxu0
        %1175 = vmatprep.mubr.bf16.mxu0 0
        %1176 = vmatmul.mubr.bf16.gmra.mrb[0].mxu0 %v1007
        %v1177 = vpop.f32.mrb[0].mxu0
        %v1178 = vadd.f32 %v873, %v1177
        %v1179 = vpop.f32.mrb[0].mxu0
        %v1180 = vpop.f32.mrb[0].mxu0
        %v1181 = vadd.f32 %v876, %v1180
        %v1182 = vpop.f32.mrb[0].mxu0
        %1183 = vmatprep.mubr.bf16.mxu0 0
        %1184 = vmatmul.mubr.bf16.gmra.mrb[0].mxu0 %v1008
        %v1185 = vpop.f32.mrb[0].mxu0
        %v1186 = vadd.f32 %v881, %v1185
        %v1187 = vpop.f32.mrb[0].mxu0
        %v1188 = vpop.f32.mrb[0].mxu0
        %v1189 = vadd.f32 %v884, %v1188
        %v1190 = vpop.f32.mrb[0].mxu0
        %1191 = vmatprep.mubr.bf16.mxu0 0
        %1192 = vmatmul.mubr.bf16.gmra.mrb[0].mxu0 %v1009
        %v1193 = vpop.f32.mrb[0].mxu0
        %v1194 = vadd.f32 %v889, %v1193
        %v1195 = vpop.f32.mrb[0].mxu0
        %v1196 = vpop.f32.mrb[0].mxu0
        %v1197 = vadd.f32 %v892, %v1196
        %v1198 = vpop.f32.mrb[0].mxu0
        %1199 = vmatprep.mubr.bf16.mxu0 0
        %1200 = vmatmul.mubr.bf16.gmra.mrb[0].mxu0 %v1010
        %v1201 = vpop.f32.mrb[0].mxu0
        %v1202 = vadd.f32 %v897, %v1201
        %v1203 = vpop.f32.mrb[0].mxu0
        %v1204 = vpop.f32.mrb[0].mxu0
        %v1205 = vadd.f32 %v900, %v1204
        %v1206 = vpop.f32.mrb[0].mxu0
        %1207 = vmatprep.mubr.bf16.mxu0 0
        %1208 = vmatmul.mubr.bf16.gmra.mrb[0].mxu0 %v1011
        %v1209 = vpop.f32.mrb[0].mxu0
        %v1210 = vadd.f32 %v905, %v1209
        %v1211 = vpop.f32.mrb[0].mxu0
        %v1212 = vpop.f32.mrb[0].mxu0
        %v1213 = vadd.f32 %v908, %v1212
        %v1214 = vpop.f32.mrb[0].mxu0
        %1215 = vmatprep.mubr.bf16.mxu0 0
        %1216 = vmatmul.mubr.bf16.gmra.mrb[0].mxu0 %v1012
        %v1217 = vpop.f32.mrb[0].mxu0
        %v1218 = vadd.f32 %v913, %v1217
        %v1219 = vpop.f32.mrb[0].mxu0
        %v1220 = vpop.f32.mrb[0].mxu0
        %v1221 = vadd.f32 %v916, %v1220
        %v1222 = vpop.f32.mrb[0].mxu0
        %1223 = vmatprep.mubr.bf16.mxu0 0
        %1224 = vmatmul.mubr.bf16.gmra.mrb[0].mxu0 %v1013
        %v1225 = vpop.f32.mrb[0].mxu0
        %v1226 = vadd.f32 %v921, %v1225
        %v1227 = vpop.f32.mrb[0].mxu0
        %v1228 = vpop.f32.mrb[0].mxu0
        %v1229 = vadd.f32 %v924, %v1228
        %v1230 = vpop.f32.mrb[0].mxu0
        %1231 = vmatprep.mubr.bf16.mxu0 0
        %1232 = vmatmul.mubr.bf16.gmra.mrb[0].mxu0 %v1014
        %v1233 = vpop.f32.mrb[0].mxu0
        %v1234 = vadd.f32 %v929, %v1233
        %v1235 = vpop.f32.mrb[0].mxu0
        %v1236 = vpop.f32.mrb[0].mxu0
        %v1237 = vadd.f32 %v932, %v1236
        %v1238 = vpop.f32.mrb[0].mxu0
        %1239 = vdwg.mxu0
        %vm1256 = vcmask 1042432
        %vm1257 = vcmask 1046532
        %vm1258 = vmor %vm1256, %vm1257
        %v1259 = vrot.slane %v188, 5
        %v1260 = vrot.slane %v1259, 4
        %v1261 = vrot.slane %v189, 5
        %v1262 = vsel %vm1258, %v1260, %v1261
        %v1263 = vrot.slane %v1261, 4
        %v1264 = vrot.slane %v190, 5
        %v1265 = vsel %vm1258, %v1263, %v1264
        %v1266 = vrot.slane %v191, 5
        %v1267 = vrot.slane %v1266, 4
        %v1268 = vrot.slane %v192, 5
        %v1269 = vsel %vm1258, %v1267, %v1268
        %v1270 = vrot.slane %v1268, 4
        %v1271 = vrot.slane %v193, 5
        %v1272 = vsel %vm1258, %v1270, %v1271
        %v1273 = vrot.slane %v194, 5
        %v1274 = vrot.slane %v1273, 4
        %v1275 = vrot.slane %v195, 5
        %v1276 = vsel %vm1258, %v1274, %v1275
        %v1277 = vrot.slane %v1275, 4
        %v1278 = vrot.slane %v196, 5
        %v1279 = vsel %vm1258, %v1277, %v1278
        %v1280 = vrot.slane %v197, 5
        %v1281 = vrot.slane %v1280, 4
        %v1282 = vrot.slane %v198, 5
        %v1283 = vsel %vm1258, %v1281, %v1282
        %v1284 = vrot.slane %v1282, 4
        %v1285 = vrot.slane %v199, 5
        %v1286 = vsel %vm1258, %v1284, %v1285
        %v1287 = vrot.slane %v200, 5
        %v1288 = vrot.slane %v1287, 4
        %v1289 = vrot.slane %v201, 5
        %v1290 = vsel %vm1258, %v1288, %v1289
        %v1291 = vrot.slane %v1289, 4
        %v1292 = vrot.slane %v202, 5
        %v1293 = vsel %vm1258, %v1291, %v1292
        %v1294 = vrot.slane %v203, 5
        %v1295 = vrot.slane %v1294, 4
        %v1296 = vrot.slane %v204, 5
        %v1297 = vsel %vm1258, %v1295, %v1296
        %v1298 = vrot.slane %v1296, 4
        %v1299 = vrot.slane %v205, 5
        %v1300 = vsel %vm1258, %v1298, %v1299
        %v1301 = vrot.slane %v206, 5
        %v1302 = vrot.slane %v1301, 4
        %v1303 = vrot.slane %v207, 5
        %v1304 = vsel %vm1258, %v1302, %v1303
        %v1305 = vrot.slane %v1303, 4
        %v1306 = vrot.slane %v208, 5
        %v1307 = vsel %vm1258, %v1305, %v1306
        %v1308 = vrot.slane %v209, 5
        %v1309 = vrot.slane %v1308, 4
        %v1310 = vrot.slane %v210, 5
        %v1311 = vsel %vm1258, %v1309, %v1310
        %v1312 = vrot.slane %v1310, 4
        %v1313 = vrot.slane %v211, 5
        %v1314 = vsel %vm1258, %v1312, %v1313
        %v1315 = vrot.slane %v212, 5
        %v1316 = vrot.slane %v1315, 4
        %v1317 = vrot.slane %v213, 5
        %v1318 = vsel %vm1258, %v1316, %v1317
        %v1319 = vrot.slane %v1317, 4
        %v1320 = vrot.slane %v214, 5
        %v1321 = vsel %vm1258, %v1319, %v1320
        %v1322 = vrot.slane %v215, 5
        %v1323 = vrot.slane %v1322, 4
        %v1324 = vrot.slane %v216, 5
        %v1325 = vsel %vm1258, %v1323, %v1324
        %v1326 = vrot.slane %v1324, 4
        %v1327 = vrot.slane %v217, 5
        %v1328 = vsel %vm1258, %v1326, %v1327
        %v1329 = vrot.slane %v218, 5
        %v1330 = vrot.slane %v1329, 4
        %v1331 = vrot.slane %v219, 5
        %v1332 = vsel %vm1258, %v1330, %v1331
        %v1333 = vrot.slane %v1331, 4
        %v1334 = vrot.slane %v220, 5
        %v1335 = vsel %vm1258, %v1333, %v1334
        %v1336 = vrot.slane %v221, 5
        %v1337 = vrot.slane %v1336, 4
        %v1338 = vrot.slane %v222, 5
        %v1339 = vsel %vm1258, %v1337, %v1338
        %v1340 = vrot.slane %v1338, 4
        %v1341 = vrot.slane %v223, 5
        %v1342 = vsel %vm1258, %v1340, %v1341
        %v1343 = vrot.slane %v224, 5
        %v1344 = vrot.slane %v1343, 4
        %v1345 = vrot.slane %v225, 5
        %v1346 = vsel %vm1258, %v1344, %v1345
        %v1347 = vrot.slane %v1345, 4
        %v1348 = vrot.slane %v226, 5
        %v1349 = vsel %vm1258, %v1347, %v1348
        %v1350 = vrot.slane %v227, 5
        %v1351 = vrot.slane %v1350, 4
        %v1352 = vrot.slane %v228, 5
        %v1353 = vsel %vm1258, %v1351, %v1352
        %v1354 = vrot.slane %v1352, 4
        %v1355 = vrot.slane %v229, 5
        %v1356 = vsel %vm1258, %v1354, %v1355
        %v1357 = vrot.slane %v230, 5
        %v1358 = vrot.slane %v1357, 4
        %v1359 = vrot.slane %v231, 5
        %v1360 = vsel %vm1258, %v1358, %v1359
        %v1361 = vrot.slane %v1359, 4
        %v1362 = vrot.slane %v232, 5
        %v1363 = vsel %vm1258, %v1361, %v1362
        %v1364 = vrot.slane %v233, 5
        %v1365 = vrot.slane %v1364, 4
        %v1366 = vrot.slane %v234, 5
        %v1367 = vsel %vm1258, %v1365, %v1366
        %v1368 = vrot.slane %v1366, 4
        %v1369 = vrot.slane %v235, 5
        %v1370 = vsel %vm1258, %v1368, %v1369
        %s1371 = scalar_lea.vmem [#allocation4], 128
        %v1372 = vld [vmem:[%s1371] sm:$0xf]
        %v1373 = vld [vmem:[%s1371 + $0x4] sm:$0xf]
        %v1374 = vld [vmem:[%s1371 + $0x8] sm:$0xf]
        %v1375 = vld [vmem:[%s1371 + $0xc] sm:$0xf]
        %v1376 = vld [vmem:[%s1371 + $0x10] sm:$0xf]
        %v1377 = vld [vmem:[%s1371 + $0x14] sm:$0xf]
        %v1378 = vld [vmem:[%s1371 + $0x18] sm:$0xf]
        %v1379 = vld [vmem:[%s1371 + $0x1c] sm:$0xf]
        %v1380 = vld [vmem:[%s1371 + $0x20] sm:$0xf]
        %v1381 = vld [vmem:[%s1371 + $0x24] sm:$0xf]
        %v1382 = vld [vmem:[%s1371 + $0x28] sm:$0xf]
        %v1383 = vld [vmem:[%s1371 + $0x2c] sm:$0xf]
        %v1384 = vld [vmem:[%s1371 + $0x30] sm:$0xf]
        %v1385 = vld [vmem:[%s1371 + $0x34] sm:$0xf]
        %v1386 = vld [vmem:[%s1371 + $0x38] sm:$0xf]
        %v1387 = vld [vmem:[%s1371 + $0x3c] sm:$0xf]
        %v1388 = vunpack.c.l.b16 %v1262
        %v1389 = vunpack.c.l.b16 %v1265
        %v1390 = vunpack.c.l.b16 %v1269
        %v1391 = vunpack.c.l.b16 %v1272
        %v1392 = vunpack.c.l.b16 %v1276
        %v1393 = vunpack.c.l.b16 %v1279
        %v1394 = vunpack.c.l.b16 %v1283
        %v1395 = vunpack.c.l.b16 %v1286
        %v1396 = vunpack.c.l.b16 %v1290
        %v1397 = vunpack.c.l.b16 %v1293
        %v1398 = vunpack.c.l.b16 %v1297
        %v1399 = vunpack.c.l.b16 %v1300
        %v1400 = vunpack.c.l.b16 %v1304
        %v1401 = vunpack.c.l.b16 %v1307
        %v1402 = vunpack.c.l.b16 %v1311
        %v1403 = vunpack.c.l.b16 %v1314
        %v1404 = vunpack.c.l.b16 %v1318
        %v1405 = vunpack.c.l.b16 %v1321
        %v1406 = vunpack.c.l.b16 %v1325
        %v1407 = vunpack.c.l.b16 %v1328
        %v1408 = vunpack.c.l.b16 %v1332
        %v1409 = vunpack.c.l.b16 %v1335
        %v1410 = vunpack.c.l.b16 %v1339
        %v1411 = vunpack.c.l.b16 %v1342
        %v1412 = vunpack.c.l.b16 %v1346
        %v1413 = vunpack.c.l.b16 %v1349
        %v1414 = vunpack.c.l.b16 %v1353
        %v1415 = vunpack.c.l.b16 %v1356
        %v1416 = vunpack.c.l.b16 %v1360
        %v1417 = vunpack.c.l.b16 %v1363
        %v1418 = vunpack.c.l.b16 %v1367
        %v1419 = vunpack.c.l.b16 %v1370
        %v1420 = vpack.c.b16 %v1389, %v1388
        %v1421 = vpack.c.b16 %v1391, %v1390
        %v1422 = vpack.c.b16 %v1393, %v1392
        %v1423 = vpack.c.b16 %v1395, %v1394
        %v1424 = vpack.c.b16 %v1397, %v1396
        %v1425 = vpack.c.b16 %v1399, %v1398
        %v1426 = vpack.c.b16 %v1401, %v1400
        %v1427 = vpack.c.b16 %v1403, %v1402
        %v1428 = vpack.c.b16 %v1405, %v1404
        %v1429 = vpack.c.b16 %v1407, %v1406
        %v1430 = vpack.c.b16 %v1409, %v1408
        %v1431 = vpack.c.b16 %v1411, %v1410
        %v1432 = vpack.c.b16 %v1413, %v1412
        %v1433 = vpack.c.b16 %v1415, %v1414
        %v1434 = vpack.c.b16 %v1417, %v1416
        %v1435 = vpack.c.b16 %v1419, %v1418
        %v1468 = vunpack.c.l.b16 %v1372
        %v1469 = vunpack.c.l.b16 %v1373
        %v1470 = vunpack.c.l.b16 %v1374
        %v1471 = vunpack.c.l.b16 %v1375
        %v1472 = vunpack.c.l.b16 %v1376
        %v1473 = vunpack.c.l.b16 %v1377
        %v1474 = vunpack.c.l.b16 %v1378
        %v1475 = vunpack.c.l.b16 %v1379
        %v1476 = vunpack.c.l.b16 %v1380
        %v1477 = vunpack.c.l.b16 %v1381
        %v1478 = vunpack.c.l.b16 %v1382
        %v1479 = vunpack.c.l.b16 %v1383
        %v1480 = vunpack.c.l.b16 %v1384
        %v1481 = vunpack.c.l.b16 %v1385
        %v1482 = vunpack.c.l.b16 %v1386
        %v1483 = vunpack.c.l.b16 %v1387
        %v1484 = vpack.c.b16 %v1469, %v1468
        %v1485 = vpack.c.b16 %v1471, %v1470
        %v1486 = vpack.c.b16 %v1473, %v1472
        %v1487 = vpack.c.b16 %v1475, %v1474
        %v1488 = vpack.c.b16 %v1477, %v1476
        %v1489 = vpack.c.b16 %v1479, %v1478
        %v1490 = vpack.c.b16 %v1481, %v1480
        %v1491 = vpack.c.b16 %v1483, %v1482
        %1500 = vmatprep.subr.bf16.mxu0 0
        %1501 = vmatpush1.bf16.msra.mxu0 %v1484
        %1502 = vmatprep.subr.bf16.mxu0 0
        %1503 = vmatpush1.bf16.msra.mxu0 %v1485
        %1504 = vmatprep.subr.bf16.mxu0 0
        %1505 = vmatpush1.bf16.msra.mxu0 %v1486
        %1506 = vmatprep.subr.bf16.mxu0 0
        %1507 = vmatpush1.bf16.msra.mxu0 %v1487
        %1508 = vmatprep.subr.bf16.mxu0 0
        %1509 = vmatpush1.bf16.msra.mxu0 %v1488
        %1510 = vmatprep.subr.bf16.mxu0 0
        %1511 = vmatpush1.bf16.msra.mxu0 %v1489
        %1512 = vmatprep.subr.bf16.mxu0 0
        %1513 = vmatpush1.bf16.msra.mxu0 %v1490
        %1514 = vmatprep.subr.bf16.mxu0 0
        %1515 = vmatpush1.bf16.msra.mxu0 %v1491
        %1516 = vmatprep.subr.bf16.mxu0 0
        %1517 = vmatpush1.bf16.msra.mxu0 0
        %1518 = vmatprep.subr.bf16.mxu0 0
        %1519 = vmatpush1.bf16.msra.mxu0 0
        %1520 = vmatprep.subr.bf16.mxu0 0
        %1521 = vmatpush1.bf16.msra.mxu0 0
        %1522 = vmatprep.subr.bf16.mxu0 0
        %1523 = vmatpush1.bf16.msra.mxu0 0
        %1524 = vmatprep.subr.bf16.mxu0 0
        %1525 = vmatpush1.bf16.msra.mxu0 0
        %1526 = vmatprep.subr.bf16.mxu0 0
        %1527 = vmatpush1.bf16.msra.mxu0 0
        %1528 = vmatprep.subr.bf16.mxu0 0
        %1529 = vmatpush1.bf16.msra.mxu0 0
        %1530 = vmatprep.subr.bf16.mxu0 0
        %1531 = vmatpush1.bf16.msra.mxu0 0
        %1532 = vmatprep.mubr.bf16.mxu0 0
        %1533 = vmatmul.mubr.bf16.gmra.mrb[0].mxu0 %v1420
        %v1534 = vpop.f32.mrb[0].mxu0
        %v1535 = vadd.f32 0.0, %v1534
        %v1536 = vpop.f32.mrb[0].mxu0
        %v1537 = vpop.f32.mrb[0].mxu0
        %v1538 = vadd.f32 0.0, %v1537
        %v1539 = vpop.f32.mrb[0].mxu0
        %1540 = vmatprep.mubr.bf16.mxu0 0
        %1541 = vmatmul.mubr.bf16.gmra.mrb[0].mxu0 %v1421
        %v1542 = vpop.f32.mrb[0].mxu0
        %v1543 = vadd.f32 0.0, %v1542
        %v1544 = vpop.f32.mrb[0].mxu0
        %v1545 = vpop.f32.mrb[0].mxu0
        %v1546 = vadd.f32 0.0, %v1545
        %v1547 = vpop.f32.mrb[0].mxu0
        %1548 = vmatprep.mubr.bf16.mxu0 0
        %1549 = vmatmul.mubr.bf16.gmra.mrb[0].mxu0 %v1422
        %v1550 = vpop.f32.mrb[0].mxu0
        %v1551 = vadd.f32 0.0, %v1550
        %v1552 = vpop.f32.mrb[0].mxu0
        %v1553 = vpop.f32.mrb[0].mxu0
        %v1554 = vadd.f32 0.0, %v1553
        %v1555 = vpop.f32.mrb[0].mxu0
        %1556 = vmatprep.mubr.bf16.mxu0 0
        %1557 = vmatmul.mubr.bf16.gmra.mrb[0].mxu0 %v1423
        %v1558 = vpop.f32.mrb[0].mxu0
        %v1559 = vadd.f32 0.0, %v1558
        %v1560 = vpop.f32.mrb[0].mxu0
        %v1561 = vpop.f32.mrb[0].mxu0
        %v1562 = vadd.f32 0.0, %v1561
        %v1563 = vpop.f32.mrb[0].mxu0
        %1564 = vmatprep.mubr.bf16.mxu0 0
        %1565 = vmatmul.mubr.bf16.gmra.mrb[0].mxu0 %v1424
        %v1566 = vpop.f32.mrb[0].mxu0
        %v1567 = vadd.f32 0.0, %v1566
        %v1568 = vpop.f32.mrb[0].mxu0
        %v1569 = vpop.f32.mrb[0].mxu0
        %v1570 = vadd.f32 0.0, %v1569
        %v1571 = vpop.f32.mrb[0].mxu0
        %1572 = vmatprep.mubr.bf16.mxu0 0
        %1573 = vmatmul.mubr.bf16.gmra.mrb[0].mxu0 %v1425
        %v1574 = vpop.f32.mrb[0].mxu0
        %v1575 = vadd.f32 0.0, %v1574
        %v1576 = vpop.f32.mrb[0].mxu0
        %v1577 = vpop.f32.mrb[0].mxu0
        %v1578 = vadd.f32 0.0, %v1577
        %v1579 = vpop.f32.mrb[0].mxu0
        %1580 = vmatprep.mubr.bf16.mxu0 0
        %1581 = vmatmul.mubr.bf16.gmra.mrb[0].mxu0 %v1426
        %v1582 = vpop.f32.mrb[0].mxu0
        %v1583 = vadd.f32 0.0, %v1582
        %v1584 = vpop.f32.mrb[0].mxu0
        %v1585 = vpop.f32.mrb[0].mxu0
        %v1586 = vadd.f32 0.0, %v1585
        %v1587 = vpop.f32.mrb[0].mxu0
        %1588 = vmatprep.mubr.bf16.mxu0 0
        %1589 = vmatmul.mubr.bf16.gmra.mrb[0].mxu0 %v1427
        %v1590 = vpop.f32.mrb[0].mxu0
        %v1591 = vadd.f32 0.0, %v1590
        %v1592 = vpop.f32.mrb[0].mxu0
        %v1593 = vpop.f32.mrb[0].mxu0
        %v1594 = vadd.f32 0.0, %v1593
        %v1595 = vpop.f32.mrb[0].mxu0
        %1596 = vmatprep.mubr.bf16.mxu0 0
        %1597 = vmatmul.mubr.bf16.gmra.mrb[0].mxu0 %v1428
        %v1598 = vpop.f32.mrb[0].mxu0
        %v1599 = vadd.f32 0.0, %v1598
        %v1600 = vpop.f32.mrb[0].mxu0
        %v1601 = vpop.f32.mrb[0].mxu0
        %v1602 = vadd.f32 0.0, %v1601
        %v1603 = vpop.f32.mrb[0].mxu0
        %1604 = vmatprep.mubr.bf16.mxu0 0
        %1605 = vmatmul.mubr.bf16.gmra.mrb[0].mxu0 %v1429
        %v1606 = vpop.f32.mrb[0].mxu0
        %v1607 = vadd.f32 0.0, %v1606
        %v1608 = vpop.f32.mrb[0].mxu0
        %v1609 = vpop.f32.mrb[0].mxu0
        %v1610 = vadd.f32 0.0, %v1609
        %v1611 = vpop.f32.mrb[0].mxu0
        %1612 = vmatprep.mubr.bf16.mxu0 0
        %1613 = vmatmul.mubr.bf16.gmra.mrb[0].mxu0 %v1430
        %v1614 = vpop.f32.mrb[0].mxu0
        %v1615 = vadd.f32 0.0, %v1614
        %v1616 = vpop.f32.mrb[0].mxu0
        %v1617 = vpop.f32.mrb[0].mxu0
        %v1618 = vadd.f32 0.0, %v1617
        %v1619 = vpop.f32.mrb[0].mxu0
        %1620 = vmatprep.mubr.bf16.mxu0 0
        %1621 = vmatmul.mubr.bf16.gmra.mrb[0].mxu0 %v1431
        %v1622 = vpop.f32.mrb[0].mxu0
        %v1623 = vadd.f32 0.0, %v1622
        %v1624 = vpop.f32.mrb[0].mxu0
        %v1625 = vpop.f32.mrb[0].mxu0
        %v1626 = vadd.f32 0.0, %v1625
        %v1627 = vpop.f32.mrb[0].mxu0
        %1628 = vmatprep.mubr.bf16.mxu0 0
        %1629 = vmatmul.mubr.bf16.gmra.mrb[0].mxu0 %v1432
        %v1630 = vpop.f32.mrb[0].mxu0
        %v1631 = vadd.f32 0.0, %v1630
        %v1632 = vpop.f32.mrb[0].mxu0
        %v1633 = vpop.f32.mrb[0].mxu0
        %v1634 = vadd.f32 0.0, %v1633
        %v1635 = vpop.f32.mrb[0].mxu0
        %1636 = vmatprep.mubr.bf16.mxu0 0
        %1637 = vmatmul.mubr.bf16.gmra.mrb[0].mxu0 %v1433
        %v1638 = vpop.f32.mrb[0].mxu0
        %v1639 = vadd.f32 0.0, %v1638
        %v1640 = vpop.f32.mrb[0].mxu0
        %v1641 = vpop.f32.mrb[0].mxu0
        %v1642 = vadd.f32 0.0, %v1641
        %v1643 = vpop.f32.mrb[0].mxu0
        %1644 = vmatprep.mubr.bf16.mxu0 0
        %1645 = vmatmul.mubr.bf16.gmra.mrb[0].mxu0 %v1434
        %v1646 = vpop.f32.mrb[0].mxu0
        %v1647 = vadd.f32 0.0, %v1646
        %v1648 = vpop.f32.mrb[0].mxu0
        %v1649 = vpop.f32.mrb[0].mxu0
        %v1650 = vadd.f32 0.0, %v1649
        %v1651 = vpop.f32.mrb[0].mxu0
        %1652 = vmatprep.mubr.bf16.mxu0 0
        %1653 = vmatmul.mubr.bf16.gmra.mrb[0].mxu0 %v1435
        %v1654 = vpop.f32.mrb[0].mxu0
        %v1655 = vadd.f32 0.0, %v1654
        %v1656 = vpop.f32.mrb[0].mxu0
        %v1657 = vpop.f32.mrb[0].mxu0
        %v1658 = vadd.f32 0.0, %v1657
        %v1659 = vpop.f32.mrb[0].mxu0
        %1660 = vdwg.mxu0
        %v1661 = vadd.f32 %v1114, %v1535
        %v1662 = vadd.f32 %v1117, %v1538
        %v1663 = vadd.f32 %v1122, %v1543
        %v1664 = vadd.f32 %v1125, %v1546
        %v1665 = vadd.f32 %v1130, %v1551
        %v1666 = vadd.f32 %v1133, %v1554
        %v1667 = vadd.f32 %v1138, %v1559
        %v1668 = vadd.f32 %v1141, %v1562
        %v1669 = vadd.f32 %v1146, %v1567
        %v1670 = vadd.f32 %v1149, %v1570
        %v1671 = vadd.f32 %v1154, %v1575
        %v1672 = vadd.f32 %v1157, %v1578
        %v1673 = vadd.f32 %v1162, %v1583
        %v1674 = vadd.f32 %v1165, %v1586
        %v1675 = vadd.f32 %v1170, %v1591
        %v1676 = vadd.f32 %v1173, %v1594
        %v1677 = vadd.f32 %v1178, %v1599
        %v1678 = vadd.f32 %v1181, %v1602
        %v1679 = vadd.f32 %v1186, %v1607
        %v1680 = vadd.f32 %v1189, %v1610
        %v1681 = vadd.f32 %v1194, %v1615
        %v1682 = vadd.f32 %v1197, %v1618
        %v1683 = vadd.f32 %v1202, %v1623
        %v1684 = vadd.f32 %v1205, %v1626
        %v1685 = vadd.f32 %v1210, %v1631
        %v1686 = vadd.f32 %v1213, %v1634
        %v1687 = vadd.f32 %v1218, %v1639
        %v1688 = vadd.f32 %v1221, %v1642
        %v1689 = vadd.f32 %v1226, %v1647
        %v1690 = vadd.f32 %v1229, %v1650
        %v1691 = vadd.f32 %v1234, %v1655
        %v1692 = vadd.f32 %v1237, %v1658
        %s1693 = scalar_lea.vmem [#allocation4], 192
        %v1694 = vld [vmem:[%s1693] sm:$0xf]
        %v1695 = vld [vmem:[%s1693 + $0x4] sm:$0xf]
        %v1696 = vld [vmem:[%s1693 + $0x8] sm:$0xf]
        %v1697 = vld [vmem:[%s1693 + $0xc] sm:$0xf]
        %v1698 = vld [vmem:[%s1693 + $0x10] sm:$0xf]
        %v1699 = vld [vmem:[%s1693 + $0x14] sm:$0xf]
        %v1700 = vld [vmem:[%s1693 + $0x18] sm:$0xf]
        %v1701 = vld [vmem:[%s1693 + $0x1c] sm:$0xf]
        %v1702 = vld [vmem:[%s1693 + $0x20] sm:$0xf]
        %v1703 = vld [vmem:[%s1693 + $0x24] sm:$0xf]
        %v1704 = vld [vmem:[%s1693 + $0x28] sm:$0xf]
        %v1705 = vld [vmem:[%s1693 + $0x2c] sm:$0xf]
        %v1706 = vld [vmem:[%s1693 + $0x30] sm:$0xf]
        %v1707 = vld [vmem:[%s1693 + $0x34] sm:$0xf]
        %v1708 = vld [vmem:[%s1693 + $0x38] sm:$0xf]
        %v1709 = vld [vmem:[%s1693 + $0x3c] sm:$0xf]
        %v1712 = vunpack.c.l.b16 %v236
        %v1713 = vunpack.c.l.b16 %v237
        %v1714 = vpack.c.b16 %v1713, %v1712
        %v1732 = vunpack.c.l.b16 %v1694
        %v1733 = vunpack.c.l.b16 %v1695
        %v1734 = vunpack.c.l.b16 %v1696
        %v1735 = vunpack.c.l.b16 %v1697
        %v1736 = vunpack.c.l.b16 %v1698
        %v1737 = vunpack.c.l.b16 %v1699
        %v1738 = vunpack.c.l.b16 %v1700
        %v1739 = vunpack.c.l.b16 %v1701
        %v1740 = vunpack.c.l.b16 %v1702
        %v1741 = vunpack.c.l.b16 %v1703
        %v1742 = vunpack.c.l.b16 %v1704
        %v1743 = vunpack.c.l.b16 %v1705
        %v1744 = vunpack.c.l.b16 %v1706
        %v1745 = vunpack.c.l.b16 %v1707
        %v1746 = vunpack.c.l.b16 %v1708
        %v1747 = vunpack.c.l.b16 %v1709
        %v1748 = vpack.c.b16 %v1733, %v1732
        %v1749 = vpack.c.b16 %v1735, %v1734
        %v1750 = vpack.c.b16 %v1737, %v1736
        %v1751 = vpack.c.b16 %v1739, %v1738
        %v1752 = vpack.c.b16 %v1741, %v1740
        %v1753 = vpack.c.b16 %v1743, %v1742
        %v1754 = vpack.c.b16 %v1745, %v1744
        %v1755 = vpack.c.b16 %v1747, %v1746
        %1764 = vmatprep.subr.bf16.mxu0 0
        %1765 = vmatpush1.bf16.msra.mxu0 %v1748
        %1766 = vmatprep.subr.bf16.mxu0 0
        %1767 = vmatpush1.bf16.msra.mxu0 %v1749
        %1768 = vmatprep.subr.bf16.mxu0 0
        %1769 = vmatpush1.bf16.msra.mxu0 %v1750
        %1770 = vmatprep.subr.bf16.mxu0 0
        %1771 = vmatpush1.bf16.msra.mxu0 %v1751
        %1772 = vmatprep.subr.bf16.mxu0 0
        %1773 = vmatpush1.bf16.msra.mxu0 %v1752
        %1774 = vmatprep.subr.bf16.mxu0 0
        %1775 = vmatpush1.bf16.msra.mxu0 %v1753
        %1776 = vmatprep.subr.bf16.mxu0 0
        %1777 = vmatpush1.bf16.msra.mxu0 %v1754
        %1778 = vmatprep.subr.bf16.mxu0 0
        %1779 = vmatpush1.bf16.msra.mxu0 %v1755
        %1780 = vmatprep.subr.bf16.mxu0 0
        %1781 = vmatpush1.bf16.msra.mxu0 0
        %1782 = vmatprep.subr.bf16.mxu0 0
        %1783 = vmatpush1.bf16.msra.mxu0 0
        %1784 = vmatprep.subr.bf16.mxu0 0
        %1785 = vmatpush1.bf16.msra.mxu0 0
        %1786 = vmatprep.subr.bf16.mxu0 0
        %1787 = vmatpush1.bf16.msra.mxu0 0
        %1788 = vmatprep.subr.bf16.mxu0 0
        %1789 = vmatpush1.bf16.msra.mxu0 0
        %1790 = vmatprep.subr.bf16.mxu0 0
        %1791 = vmatpush1.bf16.msra.mxu0 0
        %1792 = vmatprep.subr.bf16.mxu0 0
        %1793 = vmatpush1.bf16.msra.mxu0 0
        %1794 = vmatprep.subr.bf16.mxu0 0
        %1795 = vmatpush1.bf16.msra.mxu0 0
        %1796 = vmatprep.mubr.bf16.mxu0 0
        %1797 = vmatmul.mubr.bf16.gmra.mrb[0].mxu0 %v1000
        %v1798 = vpop.f32.mrb[0].mxu0
        %v1799 = vadd.f32 0.0, %v1798
        %v1800 = vpop.f32.mrb[0].mxu0
        %v1801 = vpop.f32.mrb[0].mxu0
        %v1802 = vadd.f32 0.0, %v1801
        %v1803 = vpop.f32.mrb[0].mxu0
        %1804 = vmatprep.mubr.bf16.mxu0 0
        %1805 = vmatmul.mubr.bf16.gmra.mrb[0].mxu0 %v1001
        %v1806 = vpop.f32.mrb[0].mxu0
        %v1807 = vadd.f32 0.0, %v1806
        %v1808 = vpop.f32.mrb[0].mxu0
        %v1809 = vpop.f32.mrb[0].mxu0
        %v1810 = vadd.f32 0.0, %v1809
        %v1811 = vpop.f32.mrb[0].mxu0
        %1812 = vmatprep.mubr.bf16.mxu0 0
        %1813 = vmatmul.mubr.bf16.gmra.mrb[0].mxu0 %v1002
        %v1814 = vpop.f32.mrb[0].mxu0
        %v1815 = vadd.f32 0.0, %v1814
        %v1816 = vpop.f32.mrb[0].mxu0
        %v1817 = vpop.f32.mrb[0].mxu0
        %v1818 = vadd.f32 0.0, %v1817
        %v1819 = vpop.f32.mrb[0].mxu0
        %1820 = vmatprep.mubr.bf16.mxu0 0
        %1821 = vmatmul.mubr.bf16.gmra.mrb[0].mxu0 %v1003
        %v1822 = vpop.f32.mrb[0].mxu0
        %v1823 = vadd.f32 0.0, %v1822
        %v1824 = vpop.f32.mrb[0].mxu0
        %v1825 = vpop.f32.mrb[0].mxu0
        %v1826 = vadd.f32 0.0, %v1825
        %v1827 = vpop.f32.mrb[0].mxu0
        %1828 = vmatprep.mubr.bf16.mxu0 0
        %1829 = vmatmul.mubr.bf16.gmra.mrb[0].mxu0 %v1004
        %v1830 = vpop.f32.mrb[0].mxu0
        %v1831 = vadd.f32 0.0, %v1830
        %v1832 = vpop.f32.mrb[0].mxu0
        %v1833 = vpop.f32.mrb[0].mxu0
        %v1834 = vadd.f32 0.0, %v1833
        %v1835 = vpop.f32.mrb[0].mxu0
        %1836 = vmatprep.mubr.bf16.mxu0 0
        %1837 = vmatmul.mubr.bf16.gmra.mrb[0].mxu0 %v1005
        %v1838 = vpop.f32.mrb[0].mxu0
        %v1839 = vadd.f32 0.0, %v1838
        %v1840 = vpop.f32.mrb[0].mxu0
        %v1841 = vpop.f32.mrb[0].mxu0
        %v1842 = vadd.f32 0.0, %v1841
        %v1843 = vpop.f32.mrb[0].mxu0
        %1844 = vmatprep.mubr.bf16.mxu0 0
        %1845 = vmatmul.mubr.bf16.gmra.mrb[0].mxu0 %v1006
        %v1846 = vpop.f32.mrb[0].mxu0
        %v1847 = vadd.f32 0.0, %v1846
        %v1848 = vpop.f32.mrb[0].mxu0
        %v1849 = vpop.f32.mrb[0].mxu0
        %v1850 = vadd.f32 0.0, %v1849
        %v1851 = vpop.f32.mrb[0].mxu0
        %1852 = vmatprep.mubr.bf16.mxu0 0
        %1853 = vmatmul.mubr.bf16.gmra.mrb[0].mxu0 %v1007
        %v1854 = vpop.f32.mrb[0].mxu0
        %v1855 = vadd.f32 0.0, %v1854
        %v1856 = vpop.f32.mrb[0].mxu0
        %v1857 = vpop.f32.mrb[0].mxu0
        %v1858 = vadd.f32 0.0, %v1857
        %v1859 = vpop.f32.mrb[0].mxu0
        %1860 = vmatprep.mubr.bf16.mxu0 0
        %1861 = vmatmul.mubr.bf16.gmra.mrb[0].mxu0 %v1008
        %v1862 = vpop.f32.mrb[0].mxu0
        %v1863 = vadd.f32 0.0, %v1862
        %v1864 = vpop.f32.mrb[0].mxu0
        %v1865 = vpop.f32.mrb[0].mxu0
        %v1866 = vadd.f32 0.0, %v1865
        %v1867 = vpop.f32.mrb[0].mxu0
        %1868 = vmatprep.mubr.bf16.mxu0 0
        %1869 = vmatmul.mubr.bf16.gmra.mrb[0].mxu0 %v1009
        %v1870 = vpop.f32.mrb[0].mxu0
        %v1871 = vadd.f32 0.0, %v1870
        %v1872 = vpop.f32.mrb[0].mxu0
        %v1873 = vpop.f32.mrb[0].mxu0
        %v1874 = vadd.f32 0.0, %v1873
        %v1875 = vpop.f32.mrb[0].mxu0
        %1876 = vmatprep.mubr.bf16.mxu0 0
        %1877 = vmatmul.mubr.bf16.gmra.mrb[0].mxu0 %v1010
        %v1878 = vpop.f32.mrb[0].mxu0
        %v1879 = vadd.f32 0.0, %v1878
        %v1880 = vpop.f32.mrb[0].mxu0
        %v1881 = vpop.f32.mrb[0].mxu0
        %v1882 = vadd.f32 0.0, %v1881
        %v1883 = vpop.f32.mrb[0].mxu0
        %1884 = vmatprep.mubr.bf16.mxu0 0
        %1885 = vmatmul.mubr.bf16.gmra.mrb[0].mxu0 %v1011
        %v1886 = vpop.f32.mrb[0].mxu0
        %v1887 = vadd.f32 0.0, %v1886
        %v1888 = vpop.f32.mrb[0].mxu0
        %v1889 = vpop.f32.mrb[0].mxu0
        %v1890 = vadd.f32 0.0, %v1889
        %v1891 = vpop.f32.mrb[0].mxu0
        %1892 = vmatprep.mubr.bf16.mxu0 0
        %1893 = vmatmul.mubr.bf16.gmra.mrb[0].mxu0 %v1012
        %v1894 = vpop.f32.mrb[0].mxu0
        %v1895 = vadd.f32 0.0, %v1894
        %v1896 = vpop.f32.mrb[0].mxu0
        %v1897 = vpop.f32.mrb[0].mxu0
        %v1898 = vadd.f32 0.0, %v1897
        %v1899 = vpop.f32.mrb[0].mxu0
        %1900 = vmatprep.mubr.bf16.mxu0 0
        %1901 = vmatmul.mubr.bf16.gmra.mrb[0].mxu0 %v1013
        %v1902 = vpop.f32.mrb[0].mxu0
        %v1903 = vadd.f32 0.0, %v1902
        %v1904 = vpop.f32.mrb[0].mxu0
        %v1905 = vpop.f32.mrb[0].mxu0
        %v1906 = vadd.f32 0.0, %v1905
        %v1907 = vpop.f32.mrb[0].mxu0
        %1908 = vmatprep.mubr.bf16.mxu0 0
        %1909 = vmatmul.mubr.bf16.gmra.mrb[0].mxu0 %v1014
        %v1910 = vpop.f32.mrb[0].mxu0
        %v1911 = vadd.f32 0.0, %v1910
        %v1912 = vpop.f32.mrb[0].mxu0
        %v1913 = vpop.f32.mrb[0].mxu0
        %v1914 = vadd.f32 0.0, %v1913
        %v1915 = vpop.f32.mrb[0].mxu0
        %1916 = vmatprep.mubr.bf16.mxu0 0
        %1917 = vmatmul.mubr.bf16.gmra.mrb[0].mxu0 %v1714
        %v1918 = vpop.f32.mrb[0].mxu0
        %v1919 = vadd.f32 0.0, %v1918
        %v1920 = vpop.f32.mrb[0].mxu0
        %v1921 = vpop.f32.mrb[0].mxu0
        %v1922 = vadd.f32 0.0, %v1921
        %v1923 = vpop.f32.mrb[0].mxu0
        %1924 = vdwg.mxu0
        %v1925 = vadd.f32 %v1661, %v1799
        %v1926 = vadd.f32 %v1662, %v1802
        %v1927 = vadd.f32 %v1663, %v1807
        %v1928 = vadd.f32 %v1664, %v1810
        %v1929 = vadd.f32 %v1665, %v1815
        %v1930 = vadd.f32 %v1666, %v1818
        %v1931 = vadd.f32 %v1667, %v1823
        %v1932 = vadd.f32 %v1668, %v1826
        %v1933 = vadd.f32 %v1669, %v1831
        %v1934 = vadd.f32 %v1670, %v1834
        %v1935 = vadd.f32 %v1671, %v1839
        %v1936 = vadd.f32 %v1672, %v1842
        %v1937 = vadd.f32 %v1673, %v1847
        %v1938 = vadd.f32 %v1674, %v1850
        %v1939 = vadd.f32 %v1675, %v1855
        %v1940 = vadd.f32 %v1676, %v1858
        %v1941 = vadd.f32 %v1677, %v1863
        %v1942 = vadd.f32 %v1678, %v1866
        %v1943 = vadd.f32 %v1679, %v1871
        %v1944 = vadd.f32 %v1680, %v1874
        %v1945 = vadd.f32 %v1681, %v1879
        %v1946 = vadd.f32 %v1682, %v1882
        %v1947 = vadd.f32 %v1683, %v1887
        %v1948 = vadd.f32 %v1684, %v1890
        %v1949 = vadd.f32 %v1685, %v1895
        %v1950 = vadd.f32 %v1686, %v1898
        %v1951 = vadd.f32 %v1687, %v1903
        %v1952 = vadd.f32 %v1688, %v1906
        %v1953 = vadd.f32 %v1689, %v1911
        %v1954 = vadd.f32 %v1690, %v1914
        %v1955 = vadd.f32 %v1691, %v1919
        %v1956 = vadd.f32 %v1692, %v1922
        %v1958 = vshrl.u32 %v236, 16
        %v1960 = vrot.slane %v1958, 4
        %v1961 = vshll.u32 %v236, 16
        %v1963 = vrot.slane %v1961, 5
        %v1964 = vor.u32 %v1960, %v1963
        %v1965 = vrot.slane %v1964, 4
        %v1967 = vshll.u32 %v237, 16
        %v1969 = vrot.slane %v1967, 5
        %v1970 = vsel %vm260, %v1965, %v1969
        %v1971 = vshrl.u32 %v237, 16
        %v1973 = vrot.slane %v1971, 4
        %v1974 = vor.u32 %v1973, %v1969
        %v1975 = vrot.slane %v1974, 4
        %v1977 = vshll.u32 %v238, 16
        %v1979 = vrot.slane %v1977, 5
        %v1980 = vsel %vm260, %v1975, %v1979
        %s1981 = scalar_lea.vmem [#allocation4], 256
        %v1982 = vld [vmem:[%s1981] sm:$0xf]
        %v1983 = vld [vmem:[%s1981 + $0x4] sm:$0xf]
        %v1984 = vld [vmem:[%s1981 + $0x8] sm:$0xf]
        %v1985 = vld [vmem:[%s1981 + $0xc] sm:$0xf]
        %v1986 = vld [vmem:[%s1981 + $0x10] sm:$0xf]
        %v1987 = vld [vmem:[%s1981 + $0x14] sm:$0xf]
        %v1988 = vld [vmem:[%s1981 + $0x18] sm:$0xf]
        %v1989 = vld [vmem:[%s1981 + $0x1c] sm:$0xf]
        %v1990 = vld [vmem:[%s1981 + $0x20] sm:$0xf]
        %v1991 = vld [vmem:[%s1981 + $0x24] sm:$0xf]
        %v1992 = vld [vmem:[%s1981 + $0x28] sm:$0xf]
        %v1993 = vld [vmem:[%s1981 + $0x2c] sm:$0xf]
        %v1994 = vld [vmem:[%s1981 + $0x30] sm:$0xf]
        %v1995 = vld [vmem:[%s1981 + $0x34] sm:$0xf]
        %v1996 = vld [vmem:[%s1981 + $0x38] sm:$0xf]
        %v1997 = vld [vmem:[%s1981 + $0x3c] sm:$0xf]
        %v1998 = vunpack.c.l.b16 %v1970
        %v1999 = vunpack.c.l.b16 %v1980
        %v2000 = vpack.c.b16 %v1999, %v1998
        %v2018 = vunpack.c.l.b16 %v1982
        %v2019 = vunpack.c.l.b16 %v1983
        %v2020 = vunpack.c.l.b16 %v1984
        %v2021 = vunpack.c.l.b16 %v1985
        %v2022 = vunpack.c.l.b16 %v1986
        %v2023 = vunpack.c.l.b16 %v1987
        %v2024 = vunpack.c.l.b16 %v1988
        %v2025 = vunpack.c.l.b16 %v1989
        %v2026 = vunpack.c.l.b16 %v1990
        %v2027 = vunpack.c.l.b16 %v1991
        %v2028 = vunpack.c.l.b16 %v1992
        %v2029 = vunpack.c.l.b16 %v1993
        %v2030 = vunpack.c.l.b16 %v1994
        %v2031 = vunpack.c.l.b16 %v1995
        %v2032 = vunpack.c.l.b16 %v1996
        %v2033 = vunpack.c.l.b16 %v1997
        %v2034 = vpack.c.b16 %v2019, %v2018
        %v2035 = vpack.c.b16 %v2021, %v2020
        %v2036 = vpack.c.b16 %v2023, %v2022
        %v2037 = vpack.c.b16 %v2025, %v2024
        %v2038 = vpack.c.b16 %v2027, %v2026
        %v2039 = vpack.c.b16 %v2029, %v2028
        %v2040 = vpack.c.b16 %v2031, %v2030
        %v2041 = vpack.c.b16 %v2033, %v2032
        %2050 = vmatprep.subr.bf16.mxu0 0
        %2051 = vmatpush1.bf16.msra.mxu0 %v2034
        %2052 = vmatprep.subr.bf16.mxu0 0
        %2053 = vmatpush1.bf16.msra.mxu0 %v2035
        %2054 = vmatprep.subr.bf16.mxu0 0
        %2055 = vmatpush1.bf16.msra.mxu0 %v2036
        %2056 = vmatprep.subr.bf16.mxu0 0
        %2057 = vmatpush1.bf16.msra.mxu0 %v2037
        %2058 = vmatprep.subr.bf16.mxu0 0
        %2059 = vmatpush1.bf16.msra.mxu0 %v2038
        %2060 = vmatprep.subr.bf16.mxu0 0
        %2061 = vmatpush1.bf16.msra.mxu0 %v2039
        %2062 = vmatprep.subr.bf16.mxu0 0
        %2063 = vmatpush1.bf16.msra.mxu0 %v2040
        %2064 = vmatprep.subr.bf16.mxu0 0
        %2065 = vmatpush1.bf16.msra.mxu0 %v2041
        %2066 = vmatprep.subr.bf16.mxu0 0
        %2067 = vmatpush1.bf16.msra.mxu0 0
        %2068 = vmatprep.subr.bf16.mxu0 0
        %2069 = vmatpush1.bf16.msra.mxu0 0
        %2070 = vmatprep.subr.bf16.mxu0 0
        %2071 = vmatpush1.bf16.msra.mxu0 0
        %2072 = vmatprep.subr.bf16.mxu0 0
        %2073 = vmatpush1.bf16.msra.mxu0 0
        %2074 = vmatprep.subr.bf16.mxu0 0
        %2075 = vmatpush1.bf16.msra.mxu0 0
        %2076 = vmatprep.subr.bf16.mxu0 0
        %2077 = vmatpush1.bf16.msra.mxu0 0
        %2078 = vmatprep.subr.bf16.mxu0 0
        %2079 = vmatpush1.bf16.msra.mxu0 0
        %2080 = vmatprep.subr.bf16.mxu0 0
        %2081 = vmatpush1.bf16.msra.mxu0 0
        %2082 = vmatprep.mubr.bf16.mxu0 0
        %2083 = vmatmul.mubr.bf16.gmra.mrb[0].mxu0 %v695
        %v2084 = vpop.f32.mrb[0].mxu0
        %v2085 = vadd.f32 0.0, %v2084
        %v2086 = vpop.f32.mrb[0].mxu0
        %v2087 = vpop.f32.mrb[0].mxu0
        %v2088 = vadd.f32 0.0, %v2087
        %v2089 = vpop.f32.mrb[0].mxu0
        %2090 = vmatprep.mubr.bf16.mxu0 0
        %2091 = vmatmul.mubr.bf16.gmra.mrb[0].mxu0 %v696
        %v2092 = vpop.f32.mrb[0].mxu0
        %v2093 = vadd.f32 0.0, %v2092
        %v2094 = vpop.f32.mrb[0].mxu0
        %v2095 = vpop.f32.mrb[0].mxu0
        %v2096 = vadd.f32 0.0, %v2095
        %v2097 = vpop.f32.mrb[0].mxu0
        %2098 = vmatprep.mubr.bf16.mxu0 0
        %2099 = vmatmul.mubr.bf16.gmra.mrb[0].mxu0 %v697
        %v2100 = vpop.f32.mrb[0].mxu0
        %v2101 = vadd.f32 0.0, %v2100
        %v2102 = vpop.f32.mrb[0].mxu0
        %v2103 = vpop.f32.mrb[0].mxu0
        %v2104 = vadd.f32 0.0, %v2103
        %v2105 = vpop.f32.mrb[0].mxu0
        %2106 = vmatprep.mubr.bf16.mxu0 0
        %2107 = vmatmul.mubr.bf16.gmra.mrb[0].mxu0 %v698
        %v2108 = vpop.f32.mrb[0].mxu0
        %v2109 = vadd.f32 0.0, %v2108
        %v2110 = vpop.f32.mrb[0].mxu0
        %v2111 = vpop.f32.mrb[0].mxu0
        %v2112 = vadd.f32 0.0, %v2111
        %v2113 = vpop.f32.mrb[0].mxu0
        %2114 = vmatprep.mubr.bf16.mxu0 0
        %2115 = vmatmul.mubr.bf16.gmra.mrb[0].mxu0 %v699
        %v2116 = vpop.f32.mrb[0].mxu0
        %v2117 = vadd.f32 0.0, %v2116
        %v2118 = vpop.f32.mrb[0].mxu0
        %v2119 = vpop.f32.mrb[0].mxu0
        %v2120 = vadd.f32 0.0, %v2119
        %v2121 = vpop.f32.mrb[0].mxu0
        %2122 = vmatprep.mubr.bf16.mxu0 0
        %2123 = vmatmul.mubr.bf16.gmra.mrb[0].mxu0 %v700
        %v2124 = vpop.f32.mrb[0].mxu0
        %v2125 = vadd.f32 0.0, %v2124
        %v2126 = vpop.f32.mrb[0].mxu0
        %v2127 = vpop.f32.mrb[0].mxu0
        %v2128 = vadd.f32 0.0, %v2127
        %v2129 = vpop.f32.mrb[0].mxu0
        %2130 = vmatprep.mubr.bf16.mxu0 0
        %2131 = vmatmul.mubr.bf16.gmra.mrb[0].mxu0 %v701
        %v2132 = vpop.f32.mrb[0].mxu0
        %v2133 = vadd.f32 0.0, %v2132
        %v2134 = vpop.f32.mrb[0].mxu0
        %v2135 = vpop.f32.mrb[0].mxu0
        %v2136 = vadd.f32 0.0, %v2135
        %v2137 = vpop.f32.mrb[0].mxu0
        %2138 = vmatprep.mubr.bf16.mxu0 0
        %2139 = vmatmul.mubr.bf16.gmra.mrb[0].mxu0 %v702
        %v2140 = vpop.f32.mrb[0].mxu0
        %v2141 = vadd.f32 0.0, %v2140
        %v2142 = vpop.f32.mrb[0].mxu0
        %v2143 = vpop.f32.mrb[0].mxu0
        %v2144 = vadd.f32 0.0, %v2143
        %v2145 = vpop.f32.mrb[0].mxu0
        %2146 = vmatprep.mubr.bf16.mxu0 0
        %2147 = vmatmul.mubr.bf16.gmra.mrb[0].mxu0 %v703
        %v2148 = vpop.f32.mrb[0].mxu0
        %v2149 = vadd.f32 0.0, %v2148
        %v2150 = vpop.f32.mrb[0].mxu0
        %v2151 = vpop.f32.mrb[0].mxu0
        %v2152 = vadd.f32 0.0, %v2151
        %v2153 = vpop.f32.mrb[0].mxu0
        %2154 = vmatprep.mubr.bf16.mxu0 0
        %2155 = vmatmul.mubr.bf16.gmra.mrb[0].mxu0 %v704
        %v2156 = vpop.f32.mrb[0].mxu0
        %v2157 = vadd.f32 0.0, %v2156
        %v2158 = vpop.f32.mrb[0].mxu0
        %v2159 = vpop.f32.mrb[0].mxu0
        %v2160 = vadd.f32 0.0, %v2159
        %v2161 = vpop.f32.mrb[0].mxu0
        %2162 = vmatprep.mubr.bf16.mxu0 0
        %2163 = vmatmul.mubr.bf16.gmra.mrb[0].mxu0 %v705
        %v2164 = vpop.f32.mrb[0].mxu0
        %v2165 = vadd.f32 0.0, %v2164
        %v2166 = vpop.f32.mrb[0].mxu0
        %v2167 = vpop.f32.mrb[0].mxu0
        %v2168 = vadd.f32 0.0, %v2167
        %v2169 = vpop.f32.mrb[0].mxu0
        %2170 = vmatprep.mubr.bf16.mxu0 0
        %2171 = vmatmul.mubr.bf16.gmra.mrb[0].mxu0 %v706
        %v2172 = vpop.f32.mrb[0].mxu0
        %v2173 = vadd.f32 0.0, %v2172
        %v2174 = vpop.f32.mrb[0].mxu0
        %v2175 = vpop.f32.mrb[0].mxu0
        %v2176 = vadd.f32 0.0, %v2175
        %v2177 = vpop.f32.mrb[0].mxu0
        %2178 = vmatprep.mubr.bf16.mxu0 0
        %2179 = vmatmul.mubr.bf16.gmra.mrb[0].mxu0 %v707
        %v2180 = vpop.f32.mrb[0].mxu0
        %v2181 = vadd.f32 0.0, %v2180
        %v2182 = vpop.f32.mrb[0].mxu0
        %v2183 = vpop.f32.mrb[0].mxu0
        %v2184 = vadd.f32 0.0, %v2183
        %v2185 = vpop.f32.mrb[0].mxu0
        %2186 = vmatprep.mubr.bf16.mxu0 0
        %2187 = vmatmul.mubr.bf16.gmra.mrb[0].mxu0 %v708
        %v2188 = vpop.f32.mrb[0].mxu0
        %v2189 = vadd.f32 0.0, %v2188
        %v2190 = vpop.f32.mrb[0].mxu0
        %v2191 = vpop.f32.mrb[0].mxu0
        %v2192 = vadd.f32 0.0, %v2191
        %v2193 = vpop.f32.mrb[0].mxu0
        %2194 = vmatprep.mubr.bf16.mxu0 0
        %2195 = vmatmul.mubr.bf16.gmra.mrb[0].mxu0 %v709
        %v2196 = vpop.f32.mrb[0].mxu0
        %v2197 = vadd.f32 0.0, %v2196
        %v2198 = vpop.f32.mrb[0].mxu0
        %v2199 = vpop.f32.mrb[0].mxu0
        %v2200 = vadd.f32 0.0, %v2199
        %v2201 = vpop.f32.mrb[0].mxu0
        %2202 = vmatprep.mubr.bf16.mxu0 0
        %2203 = vmatmul.mubr.bf16.gmra.mrb[0].mxu0 %v2000
        %v2204 = vpop.f32.mrb[0].mxu0
        %v2205 = vadd.f32 0.0, %v2204
        %v2206 = vpop.f32.mrb[0].mxu0
        %v2207 = vpop.f32.mrb[0].mxu0
        %v2208 = vadd.f32 0.0, %v2207
        %v2209 = vpop.f32.mrb[0].mxu0
        %2210 = vdwg.mxu0
        %v2211 = vadd.f32 %v1925, %v2085
        %v2212 = vadd.f32 %v1926, %v2088
        %v2213 = vadd.f32 %v1927, %v2093
        %v2214 = vadd.f32 %v1928, %v2096
        %v2215 = vadd.f32 %v1929, %v2101
        %v2216 = vadd.f32 %v1930, %v2104
        %v2217 = vadd.f32 %v1931, %v2109
        %v2218 = vadd.f32 %v1932, %v2112
        %v2219 = vadd.f32 %v1933, %v2117
        %v2220 = vadd.f32 %v1934, %v2120
        %v2221 = vadd.f32 %v1935, %v2125
        %v2222 = vadd.f32 %v1936, %v2128
        %v2223 = vadd.f32 %v1937, %v2133
        %v2224 = vadd.f32 %v1938, %v2136
        %v2225 = vadd.f32 %v1939, %v2141
        %v2226 = vadd.f32 %v1940, %v2144
        %v2227 = vadd.f32 %v1941, %v2149
        %v2228 = vadd.f32 %v1942, %v2152
        %v2229 = vadd.f32 %v1943, %v2157
        %v2230 = vadd.f32 %v1944, %v2160
        %v2231 = vadd.f32 %v1945, %v2165
        %v2232 = vadd.f32 %v1946, %v2168
        %v2233 = vadd.f32 %v1947, %v2173
        %v2234 = vadd.f32 %v1948, %v2176
        %v2235 = vadd.f32 %v1949, %v2181
        %v2236 = vadd.f32 %v1950, %v2184
        %v2237 = vadd.f32 %v1951, %v2189
        %v2238 = vadd.f32 %v1952, %v2192
        %v2239 = vadd.f32 %v1953, %v2197
        %v2240 = vadd.f32 %v1954, %v2200
        %v2241 = vadd.f32 %v1955, %v2205
        %v2242 = vadd.f32 %v1956, %v2208
        %v2244 = vrot.slane %v236, 5
        %v2245 = vrot.slane %v2244, 4
        %v2246 = vrot.slane %v237, 5
        %v2247 = vsel %vm1258, %v2245, %v2246
        %v2248 = vrot.slane %v2246, 4
        %v2249 = vrot.slane %v238, 5
        %v2250 = vsel %vm1258, %v2248, %v2249
        %s2251 = scalar_lea.vmem [#allocation4], 320
        %v2252 = vld [vmem:[%s2251] sm:$0xf]
        %v2253 = vld [vmem:[%s2251 + $0x4] sm:$0xf]
        %v2254 = vld [vmem:[%s2251 + $0x8] sm:$0xf]
        %v2255 = vld [vmem:[%s2251 + $0xc] sm:$0xf]
        %v2256 = vld [vmem:[%s2251 + $0x10] sm:$0xf]
        %v2257 = vld [vmem:[%s2251 + $0x14] sm:$0xf]
        %v2258 = vld [vmem:[%s2251 + $0x18] sm:$0xf]
        %v2259 = vld [vmem:[%s2251 + $0x1c] sm:$0xf]
        %v2260 = vld [vmem:[%s2251 + $0x20] sm:$0xf]
        %v2261 = vld [vmem:[%s2251 + $0x24] sm:$0xf]
        %v2262 = vld [vmem:[%s2251 + $0x28] sm:$0xf]
        %v2263 = vld [vmem:[%s2251 + $0x2c] sm:$0xf]
        %v2264 = vld [vmem:[%s2251 + $0x30] sm:$0xf]
        %v2265 = vld [vmem:[%s2251 + $0x34] sm:$0xf]
        %v2266 = vld [vmem:[%s2251 + $0x38] sm:$0xf]
        %v2267 = vld [vmem:[%s2251 + $0x3c] sm:$0xf]
        %v2268 = vunpack.c.l.b16 %v2247
        %v2269 = vunpack.c.l.b16 %v2250
        %v2270 = vpack.c.b16 %v2269, %v2268
        %v2288 = vunpack.c.l.b16 %v2252
        %v2289 = vunpack.c.l.b16 %v2253
        %v2290 = vunpack.c.l.b16 %v2254
        %v2291 = vunpack.c.l.b16 %v2255
        %v2292 = vunpack.c.l.b16 %v2256
        %v2293 = vunpack.c.l.b16 %v2257
        %v2294 = vunpack.c.l.b16 %v2258
        %v2295 = vunpack.c.l.b16 %v2259
        %v2296 = vunpack.c.l.b16 %v2260
        %v2297 = vunpack.c.l.b16 %v2261
        %v2298 = vunpack.c.l.b16 %v2262
        %v2299 = vunpack.c.l.b16 %v2263
        %v2300 = vunpack.c.l.b16 %v2264
        %v2301 = vunpack.c.l.b16 %v2265
        %v2302 = vunpack.c.l.b16 %v2266
        %v2303 = vunpack.c.l.b16 %v2267
        %v2304 = vpack.c.b16 %v2289, %v2288
        %v2305 = vpack.c.b16 %v2291, %v2290
        %v2306 = vpack.c.b16 %v2293, %v2292
        %v2307 = vpack.c.b16 %v2295, %v2294
        %v2308 = vpack.c.b16 %v2297, %v2296
        %v2309 = vpack.c.b16 %v2299, %v2298
        %v2310 = vpack.c.b16 %v2301, %v2300
        %v2311 = vpack.c.b16 %v2303, %v2302
        %2320 = vmatprep.subr.bf16.mxu0 0
        %2321 = vmatpush1.bf16.msra.mxu0 %v2304
        %2322 = vmatprep.subr.bf16.mxu0 0
        %2323 = vmatpush1.bf16.msra.mxu0 %v2305
        %2324 = vmatprep.subr.bf16.mxu0 0
        %2325 = vmatpush1.bf16.msra.mxu0 %v2306
        %2326 = vmatprep.subr.bf16.mxu0 0
        %2327 = vmatpush1.bf16.msra.mxu0 %v2307
        %2328 = vmatprep.subr.bf16.mxu0 0
        %2329 = vmatpush1.bf16.msra.mxu0 %v2308
        %2330 = vmatprep.subr.bf16.mxu0 0
        %2331 = vmatpush1.bf16.msra.mxu0 %v2309
        %2332 = vmatprep.subr.bf16.mxu0 0
        %2333 = vmatpush1.bf16.msra.mxu0 %v2310
        %2334 = vmatprep.subr.bf16.mxu0 0
        %2335 = vmatpush1.bf16.msra.mxu0 %v2311
        %2336 = vmatprep.subr.bf16.mxu0 0
        %2337 = vmatpush1.bf16.msra.mxu0 0
        %2338 = vmatprep.subr.bf16.mxu0 0
        %2339 = vmatpush1.bf16.msra.mxu0 0
        %2340 = vmatprep.subr.bf16.mxu0 0
        %2341 = vmatpush1.bf16.msra.mxu0 0
        %2342 = vmatprep.subr.bf16.mxu0 0
        %2343 = vmatpush1.bf16.msra.mxu0 0
        %2344 = vmatprep.subr.bf16.mxu0 0
        %2345 = vmatpush1.bf16.msra.mxu0 0
        %2346 = vmatprep.subr.bf16.mxu0 0
        %2347 = vmatpush1.bf16.msra.mxu0 0
        %2348 = vmatprep.subr.bf16.mxu0 0
        %2349 = vmatpush1.bf16.msra.mxu0 0
        %2350 = vmatprep.subr.bf16.mxu0 0
        %2351 = vmatpush1.bf16.msra.mxu0 0
        %2352 = vmatprep.mubr.bf16.mxu0 0
        %2353 = vmatmul.mubr.bf16.gmra.mrb[0].mxu0 %v1421
        %v2354 = vpop.f32.mrb[0].mxu0
        %v2355 = vadd.f32 0.0, %v2354
        %v2356 = vpop.f32.mrb[0].mxu0
        %v2357 = vpop.f32.mrb[0].mxu0
        %v2358 = vadd.f32 0.0, %v2357
        %v2359 = vpop.f32.mrb[0].mxu0
        %2360 = vmatprep.mubr.bf16.mxu0 0
        %2361 = vmatmul.mubr.bf16.gmra.mrb[0].mxu0 %v1422
        %v2362 = vpop.f32.mrb[0].mxu0
        %v2363 = vadd.f32 0.0, %v2362
        %v2364 = vpop.f32.mrb[0].mxu0
        %v2365 = vpop.f32.mrb[0].mxu0
        %v2366 = vadd.f32 0.0, %v2365
        %v2367 = vpop.f32.mrb[0].mxu0
        %2368 = vmatprep.mubr.bf16.mxu0 0
        %2369 = vmatmul.mubr.bf16.gmra.mrb[0].mxu0 %v1423
        %v2370 = vpop.f32.mrb[0].mxu0
        %v2371 = vadd.f32 0.0, %v2370
        %v2372 = vpop.f32.mrb[0].mxu0
        %v2373 = vpop.f32.mrb[0].mxu0
        %v2374 = vadd.f32 0.0, %v2373
        %v2375 = vpop.f32.mrb[0].mxu0
        %2376 = vmatprep.mubr.bf16.mxu0 0
        %2377 = vmatmul.mubr.bf16.gmra.mrb[0].mxu0 %v1424
        %v2378 = vpop.f32.mrb[0].mxu0
        %v2379 = vadd.f32 0.0, %v2378
        %v2380 = vpop.f32.mrb[0].mxu0
        %v2381 = vpop.f32.mrb[0].mxu0
        %v2382 = vadd.f32 0.0, %v2381
        %v2383 = vpop.f32.mrb[0].mxu0
        %2384 = vmatprep.mubr.bf16.mxu0 0
        %2385 = vmatmul.mubr.bf16.gmra.mrb[0].mxu0 %v1425
        %v2386 = vpop.f32.mrb[0].mxu0
        %v2387 = vadd.f32 0.0, %v2386
        %v2388 = vpop.f32.mrb[0].mxu0
        %v2389 = vpop.f32.mrb[0].mxu0
        %v2390 = vadd.f32 0.0, %v2389
        %v2391 = vpop.f32.mrb[0].mxu0
        %2392 = vmatprep.mubr.bf16.mxu0 0
        %2393 = vmatmul.mubr.bf16.gmra.mrb[0].mxu0 %v1426
        %v2394 = vpop.f32.mrb[0].mxu0
        %v2395 = vadd.f32 0.0, %v2394
        %v2396 = vpop.f32.mrb[0].mxu0
        %v2397 = vpop.f32.mrb[0].mxu0
        %v2398 = vadd.f32 0.0, %v2397
        %v2399 = vpop.f32.mrb[0].mxu0
        %2400 = vmatprep.mubr.bf16.mxu0 0
        %2401 = vmatmul.mubr.bf16.gmra.mrb[0].mxu0 %v1427
        %v2402 = vpop.f32.mrb[0].mxu0
        %v2403 = vadd.f32 0.0, %v2402
        %v2404 = vpop.f32.mrb[0].mxu0
        %v2405 = vpop.f32.mrb[0].mxu0
        %v2406 = vadd.f32 0.0, %v2405
        %v2407 = vpop.f32.mrb[0].mxu0
        %2408 = vmatprep.mubr.bf16.mxu0 0
        %2409 = vmatmul.mubr.bf16.gmra.mrb[0].mxu0 %v1428
        %v2410 = vpop.f32.mrb[0].mxu0
        %v2411 = vadd.f32 0.0, %v2410
        %v2412 = vpop.f32.mrb[0].mxu0
        %v2413 = vpop.f32.mrb[0].mxu0
        %v2414 = vadd.f32 0.0, %v2413
        %v2415 = vpop.f32.mrb[0].mxu0
        %2416 = vmatprep.mubr.bf16.mxu0 0
        %2417 = vmatmul.mubr.bf16.gmra.mrb[0].mxu0 %v1429
        %v2418 = vpop.f32.mrb[0].mxu0
        %v2419 = vadd.f32 0.0, %v2418
        %v2420 = vpop.f32.mrb[0].mxu0
        %v2421 = vpop.f32.mrb[0].mxu0
        %v2422 = vadd.f32 0.0, %v2421
        %v2423 = vpop.f32.mrb[0].mxu0
        %2424 = vmatprep.mubr.bf16.mxu0 0
        %2425 = vmatmul.mubr.bf16.gmra.mrb[0].mxu0 %v1430
        %v2426 = vpop.f32.mrb[0].mxu0
        %v2427 = vadd.f32 0.0, %v2426
        %v2428 = vpop.f32.mrb[0].mxu0
        %v2429 = vpop.f32.mrb[0].mxu0
        %v2430 = vadd.f32 0.0, %v2429
        %v2431 = vpop.f32.mrb[0].mxu0
        %2432 = vmatprep.mubr.bf16.mxu0 0
        %2433 = vmatmul.mubr.bf16.gmra.mrb[0].mxu0 %v1431
        %v2434 = vpop.f32.mrb[0].mxu0
        %v2435 = vadd.f32 0.0, %v2434
        %v2436 = vpop.f32.mrb[0].mxu0
        %v2437 = vpop.f32.mrb[0].mxu0
        %v2438 = vadd.f32 0.0, %v2437
        %v2439 = vpop.f32.mrb[0].mxu0
        %2440 = vmatprep.mubr.bf16.mxu0 0
        %2441 = vmatmul.mubr.bf16.gmra.mrb[0].mxu0 %v1432
        %v2442 = vpop.f32.mrb[0].mxu0
        %v2443 = vadd.f32 0.0, %v2442
        %v2444 = vpop.f32.mrb[0].mxu0
        %v2445 = vpop.f32.mrb[0].mxu0
        %v2446 = vadd.f32 0.0, %v2445
        %v2447 = vpop.f32.mrb[0].mxu0
        %2448 = vmatprep.mubr.bf16.mxu0 0
        %2449 = vmatmul.mubr.bf16.gmra.mrb[0].mxu0 %v1433
        %v2450 = vpop.f32.mrb[0].mxu0
        %v2451 = vadd.f32 0.0, %v2450
        %v2452 = vpop.f32.mrb[0].mxu0
        %v2453 = vpop.f32.mrb[0].mxu0
        %v2454 = vadd.f32 0.0, %v2453
        %v2455 = vpop.f32.mrb[0].mxu0
        %2456 = vmatprep.mubr.bf16.mxu0 0
        %2457 = vmatmul.mubr.bf16.gmra.mrb[0].mxu0 %v1434
        %v2458 = vpop.f32.mrb[0].mxu0
        %v2459 = vadd.f32 0.0, %v2458
        %v2460 = vpop.f32.mrb[0].mxu0
        %v2461 = vpop.f32.mrb[0].mxu0
        %v2462 = vadd.f32 0.0, %v2461
        %v2463 = vpop.f32.mrb[0].mxu0
        %2464 = vmatprep.mubr.bf16.mxu0 0
        %2465 = vmatmul.mubr.bf16.gmra.mrb[0].mxu0 %v1435
        %v2466 = vpop.f32.mrb[0].mxu0
        %v2467 = vadd.f32 0.0, %v2466
        %v2468 = vpop.f32.mrb[0].mxu0
        %v2469 = vpop.f32.mrb[0].mxu0
        %v2470 = vadd.f32 0.0, %v2469
        %v2471 = vpop.f32.mrb[0].mxu0
        %2472 = vmatprep.mubr.bf16.mxu0 0
        %2473 = vmatmul.mubr.bf16.gmra.mrb[0].mxu0 %v2270
        %v2474 = vpop.f32.mrb[0].mxu0
        %v2475 = vadd.f32 0.0, %v2474
        %v2476 = vpop.f32.mrb[0].mxu0
        %v2477 = vpop.f32.mrb[0].mxu0
        %v2478 = vadd.f32 0.0, %v2477
        %v2479 = vpop.f32.mrb[0].mxu0
        %2480 = vdwg.mxu0
        %v2481 = vadd.f32 %v2211, %v2355
        %v2482 = vadd.f32 %v2212, %v2358
        %v2483 = vadd.f32 %v2213, %v2363
        %v2484 = vadd.f32 %v2214, %v2366
        %v2485 = vadd.f32 %v2215, %v2371
        %v2486 = vadd.f32 %v2216, %v2374
        %v2487 = vadd.f32 %v2217, %v2379
        %v2488 = vadd.f32 %v2218, %v2382
        %v2489 = vadd.f32 %v2219, %v2387
        %v2490 = vadd.f32 %v2220, %v2390
        %v2491 = vadd.f32 %v2221, %v2395
        %v2492 = vadd.f32 %v2222, %v2398
        %v2493 = vadd.f32 %v2223, %v2403
        %v2494 = vadd.f32 %v2224, %v2406
        %v2495 = vadd.f32 %v2225, %v2411
        %v2496 = vadd.f32 %v2226, %v2414
        %v2497 = vadd.f32 %v2227, %v2419
        %v2498 = vadd.f32 %v2228, %v2422
        %v2499 = vadd.f32 %v2229, %v2427
        %v2500 = vadd.f32 %v2230, %v2430
        %v2501 = vadd.f32 %v2231, %v2435
        %v2502 = vadd.f32 %v2232, %v2438
        %v2503 = vadd.f32 %v2233, %v2443
        %v2504 = vadd.f32 %v2234, %v2446
        %v2505 = vadd.f32 %v2235, %v2451
        %v2506 = vadd.f32 %v2236, %v2454
        %v2507 = vadd.f32 %v2237, %v2459
        %v2508 = vadd.f32 %v2238, %v2462
        %v2509 = vadd.f32 %v2239, %v2467
        %v2510 = vadd.f32 %v2240, %v2470
        %v2511 = vadd.f32 %v2241, %v2475
        %v2512 = vadd.f32 %v2242, %v2478
        %s2513 = scalar_lea.vmem [#allocation4], 384
        %v2514 = vld [vmem:[%s2513] sm:$0xf]
        %v2515 = vld [vmem:[%s2513 + $0x4] sm:$0xf]
        %v2516 = vld [vmem:[%s2513 + $0x8] sm:$0xf]
        %v2517 = vld [vmem:[%s2513 + $0xc] sm:$0xf]
        %v2518 = vld [vmem:[%s2513 + $0x10] sm:$0xf]
        %v2519 = vld [vmem:[%s2513 + $0x14] sm:$0xf]
        %v2520 = vld [vmem:[%s2513 + $0x18] sm:$0xf]
        %v2521 = vld [vmem:[%s2513 + $0x1c] sm:$0xf]
        %v2522 = vld [vmem:[%s2513 + $0x20] sm:$0xf]
        %v2523 = vld [vmem:[%s2513 + $0x24] sm:$0xf]
        %v2524 = vld [vmem:[%s2513 + $0x28] sm:$0xf]
        %v2525 = vld [vmem:[%s2513 + $0x2c] sm:$0xf]
        %v2526 = vld [vmem:[%s2513 + $0x30] sm:$0xf]
        %v2527 = vld [vmem:[%s2513 + $0x34] sm:$0xf]
        %v2528 = vld [vmem:[%s2513 + $0x38] sm:$0xf]
        %v2529 = vld [vmem:[%s2513 + $0x3c] sm:$0xf]
        %v2532 = vunpack.c.l.b16 %v239
        %v2533 = vunpack.c.l.b16 %v240
        %v2534 = vpack.c.b16 %v2533, %v2532
        %v2552 = vunpack.c.l.b16 %v2514
        %v2553 = vunpack.c.l.b16 %v2515
        %v2554 = vunpack.c.l.b16 %v2516
        %v2555 = vunpack.c.l.b16 %v2517
        %v2556 = vunpack.c.l.b16 %v2518
        %v2557 = vunpack.c.l.b16 %v2519
        %v2558 = vunpack.c.l.b16 %v2520
        %v2559 = vunpack.c.l.b16 %v2521
        %v2560 = vunpack.c.l.b16 %v2522
        %v2561 = vunpack.c.l.b16 %v2523
        %v2562 = vunpack.c.l.b16 %v2524
        %v2563 = vunpack.c.l.b16 %v2525
        %v2564 = vunpack.c.l.b16 %v2526
        %v2565 = vunpack.c.l.b16 %v2527
        %v2566 = vunpack.c.l.b16 %v2528
        %v2567 = vunpack.c.l.b16 %v2529
        %v2568 = vpack.c.b16 %v2553, %v2552
        %v2569 = vpack.c.b16 %v2555, %v2554
        %v2570 = vpack.c.b16 %v2557, %v2556
        %v2571 = vpack.c.b16 %v2559, %v2558
        %v2572 = vpack.c.b16 %v2561, %v2560
        %v2573 = vpack.c.b16 %v2563, %v2562
        %v2574 = vpack.c.b16 %v2565, %v2564
        %v2575 = vpack.c.b16 %v2567, %v2566
        %2584 = vmatprep.subr.bf16.mxu0 0
        %2585 = vmatpush1.bf16.msra.mxu0 %v2568
        %2586 = vmatprep.subr.bf16.mxu0 0
        %2587 = vmatpush1.bf16.msra.mxu0 %v2569
        %2588 = vmatprep.subr.bf16.mxu0 0
        %2589 = vmatpush1.bf16.msra.mxu0 %v2570
        %2590 = vmatprep.subr.bf16.mxu0 0
        %2591 = vmatpush1.bf16.msra.mxu0 %v2571
        %2592 = vmatprep.subr.bf16.mxu0 0
        %2593 = vmatpush1.bf16.msra.mxu0 %v2572
        %2594 = vmatprep.subr.bf16.mxu0 0
        %2595 = vmatpush1.bf16.msra.mxu0 %v2573
        %2596 = vmatprep.subr.bf16.mxu0 0
        %2597 = vmatpush1.bf16.msra.mxu0 %v2574
        %2598 = vmatprep.subr.bf16.mxu0 0
        %2599 = vmatpush1.bf16.msra.mxu0 %v2575
        %2600 = vmatprep.subr.bf16.mxu0 0
        %2601 = vmatpush1.bf16.msra.mxu0 0
        %2602 = vmatprep.subr.bf16.mxu0 0
        %2603 = vmatpush1.bf16.msra.mxu0 0
        %2604 = vmatprep.subr.bf16.mxu0 0
        %2605 = vmatpush1.bf16.msra.mxu0 0
        %2606 = vmatprep.subr.bf16.mxu0 0
        %2607 = vmatpush1.bf16.msra.mxu0 0
        %2608 = vmatprep.subr.bf16.mxu0 0
        %2609 = vmatpush1.bf16.msra.mxu0 0
        %2610 = vmatprep.subr.bf16.mxu0 0
        %2611 = vmatpush1.bf16.msra.mxu0 0
        %2612 = vmatprep.subr.bf16.mxu0 0
        %2613 = vmatpush1.bf16.msra.mxu0 0
        %2614 = vmatprep.subr.bf16.mxu0 0
        %2615 = vmatpush1.bf16.msra.mxu0 0
        %2616 = vmatprep.mubr.bf16.mxu0 0
        %2617 = vmatmul.mubr.bf16.gmra.mrb[0].mxu0 %v1001
        %v2618 = vpop.f32.mrb[0].mxu0
        %v2619 = vadd.f32 0.0, %v2618
        %v2620 = vpop.f32.mrb[0].mxu0
        %v2621 = vpop.f32.mrb[0].mxu0
        %v2622 = vadd.f32 0.0, %v2621
        %v2623 = vpop.f32.mrb[0].mxu0
        %2624 = vmatprep.mubr.bf16.mxu0 0
        %2625 = vmatmul.mubr.bf16.gmra.mrb[0].mxu0 %v1002
        %v2626 = vpop.f32.mrb[0].mxu0
        %v2627 = vadd.f32 0.0, %v2626
        %v2628 = vpop.f32.mrb[0].mxu0
        %v2629 = vpop.f32.mrb[0].mxu0
        %v2630 = vadd.f32 0.0, %v2629
        %v2631 = vpop.f32.mrb[0].mxu0
        %2632 = vmatprep.mubr.bf16.mxu0 0
        %2633 = vmatmul.mubr.bf16.gmra.mrb[0].mxu0 %v1003
        %v2634 = vpop.f32.mrb[0].mxu0
        %v2635 = vadd.f32 0.0, %v2634
        %v2636 = vpop.f32.mrb[0].mxu0
        %v2637 = vpop.f32.mrb[0].mxu0
        %v2638 = vadd.f32 0.0, %v2637
        %v2639 = vpop.f32.mrb[0].mxu0
        %2640 = vmatprep.mubr.bf16.mxu0 0
        %2641 = vmatmul.mubr.bf16.gmra.mrb[0].mxu0 %v1004
        %v2642 = vpop.f32.mrb[0].mxu0
        %v2643 = vadd.f32 0.0, %v2642
        %v2644 = vpop.f32.mrb[0].mxu0
        %v2645 = vpop.f32.mrb[0].mxu0
        %v2646 = vadd.f32 0.0, %v2645
        %v2647 = vpop.f32.mrb[0].mxu0
        %2648 = vmatprep.mubr.bf16.mxu0 0
        %2649 = vmatmul.mubr.bf16.gmra.mrb[0].mxu0 %v1005
        %v2650 = vpop.f32.mrb[0].mxu0
        %v2651 = vadd.f32 0.0, %v2650
        %v2652 = vpop.f32.mrb[0].mxu0
        %v2653 = vpop.f32.mrb[0].mxu0
        %v2654 = vadd.f32 0.0, %v2653
        %v2655 = vpop.f32.mrb[0].mxu0
        %2656 = vmatprep.mubr.bf16.mxu0 0
        %2657 = vmatmul.mubr.bf16.gmra.mrb[0].mxu0 %v1006
        %v2658 = vpop.f32.mrb[0].mxu0
        %v2659 = vadd.f32 0.0, %v2658
        %v2660 = vpop.f32.mrb[0].mxu0
        %v2661 = vpop.f32.mrb[0].mxu0
        %v2662 = vadd.f32 0.0, %v2661
        %v2663 = vpop.f32.mrb[0].mxu0
        %2664 = vmatprep.mubr.bf16.mxu0 0
        %2665 = vmatmul.mubr.bf16.gmra.mrb[0].mxu0 %v1007
        %v2666 = vpop.f32.mrb[0].mxu0
        %v2667 = vadd.f32 0.0, %v2666
        %v2668 = vpop.f32.mrb[0].mxu0
        %v2669 = vpop.f32.mrb[0].mxu0
        %v2670 = vadd.f32 0.0, %v2669
        %v2671 = vpop.f32.mrb[0].mxu0
        %2672 = vmatprep.mubr.bf16.mxu0 0
        %2673 = vmatmul.mubr.bf16.gmra.mrb[0].mxu0 %v1008
        %v2674 = vpop.f32.mrb[0].mxu0
        %v2675 = vadd.f32 0.0, %v2674
        %v2676 = vpop.f32.mrb[0].mxu0
        %v2677 = vpop.f32.mrb[0].mxu0
        %v2678 = vadd.f32 0.0, %v2677
        %v2679 = vpop.f32.mrb[0].mxu0
        %2680 = vmatprep.mubr.bf16.mxu0 0
        %2681 = vmatmul.mubr.bf16.gmra.mrb[0].mxu0 %v1009
        %v2682 = vpop.f32.mrb[0].mxu0
        %v2683 = vadd.f32 0.0, %v2682
        %v2684 = vpop.f32.mrb[0].mxu0
        %v2685 = vpop.f32.mrb[0].mxu0
        %v2686 = vadd.f32 0.0, %v2685
        %v2687 = vpop.f32.mrb[0].mxu0
        %2688 = vmatprep.mubr.bf16.mxu0 0
        %2689 = vmatmul.mubr.bf16.gmra.mrb[0].mxu0 %v1010
        %v2690 = vpop.f32.mrb[0].mxu0
        %v2691 = vadd.f32 0.0, %v2690
        %v2692 = vpop.f32.mrb[0].mxu0
        %v2693 = vpop.f32.mrb[0].mxu0
        %v2694 = vadd.f32 0.0, %v2693
        %v2695 = vpop.f32.mrb[0].mxu0
        %2696 = vmatprep.mubr.bf16.mxu0 0
        %2697 = vmatmul.mubr.bf16.gmra.mrb[0].mxu0 %v1011
        %v2698 = vpop.f32.mrb[0].mxu0
        %v2699 = vadd.f32 0.0, %v2698
        %v2700 = vpop.f32.mrb[0].mxu0
        %v2701 = vpop.f32.mrb[0].mxu0
        %v2702 = vadd.f32 0.0, %v2701
        %v2703 = vpop.f32.mrb[0].mxu0
        %2704 = vmatprep.mubr.bf16.mxu0 0
        %2705 = vmatmul.mubr.bf16.gmra.mrb[0].mxu0 %v1012
        %v2706 = vpop.f32.mrb[0].mxu0
        %v2707 = vadd.f32 0.0, %v2706
        %v2708 = vpop.f32.mrb[0].mxu0
        %v2709 = vpop.f32.mrb[0].mxu0
        %v2710 = vadd.f32 0.0, %v2709
        %v2711 = vpop.f32.mrb[0].mxu0
        %2712 = vmatprep.mubr.bf16.mxu0 0
        %2713 = vmatmul.mubr.bf16.gmra.mrb[0].mxu0 %v1013
        %v2714 = vpop.f32.mrb[0].mxu0
        %v2715 = vadd.f32 0.0, %v2714
        %v2716 = vpop.f32.mrb[0].mxu0
        %v2717 = vpop.f32.mrb[0].mxu0
        %v2718 = vadd.f32 0.0, %v2717
        %v2719 = vpop.f32.mrb[0].mxu0
        %2720 = vmatprep.mubr.bf16.mxu0 0
        %2721 = vmatmul.mubr.bf16.gmra.mrb[0].mxu0 %v1014
        %v2722 = vpop.f32.mrb[0].mxu0
        %v2723 = vadd.f32 0.0, %v2722
        %v2724 = vpop.f32.mrb[0].mxu0
        %v2725 = vpop.f32.mrb[0].mxu0
        %v2726 = vadd.f32 0.0, %v2725
        %v2727 = vpop.f32.mrb[0].mxu0
        %2728 = vmatprep.mubr.bf16.mxu0 0
        %2729 = vmatmul.mubr.bf16.gmra.mrb[0].mxu0 %v1714
        %v2730 = vpop.f32.mrb[0].mxu0
        %v2731 = vadd.f32 0.0, %v2730
        %v2732 = vpop.f32.mrb[0].mxu0
        %v2733 = vpop.f32.mrb[0].mxu0
        %v2734 = vadd.f32 0.0, %v2733
        %v2735 = vpop.f32.mrb[0].mxu0
        %2736 = vmatprep.mubr.bf16.mxu0 0
        %2737 = vmatmul.mubr.bf16.gmra.mrb[0].mxu0 %v2534
        %v2738 = vpop.f32.mrb[0].mxu0
        %v2739 = vadd.f32 0.0, %v2738
        %v2740 = vpop.f32.mrb[0].mxu0
        %v2741 = vpop.f32.mrb[0].mxu0
        %v2742 = vadd.f32 0.0, %v2741
        %v2743 = vpop.f32.mrb[0].mxu0
        %2744 = vdwg.mxu0
        %v2745 = vadd.f32 %v2481, %v2619
        %v2746 = vadd.f32 %v2482, %v2622
        %v2747 = vadd.f32 %v2483, %v2627
        %v2748 = vadd.f32 %v2484, %v2630
        %v2749 = vadd.f32 %v2485, %v2635
        %v2750 = vadd.f32 %v2486, %v2638
        %v2751 = vadd.f32 %v2487, %v2643
        %v2752 = vadd.f32 %v2488, %v2646
        %v2753 = vadd.f32 %v2489, %v2651
        %v2754 = vadd.f32 %v2490, %v2654
        %v2755 = vadd.f32 %v2491, %v2659
        %v2756 = vadd.f32 %v2492, %v2662
        %v2757 = vadd.f32 %v2493, %v2667
        %v2758 = vadd.f32 %v2494, %v2670
        %v2759 = vadd.f32 %v2495, %v2675
        %v2760 = vadd.f32 %v2496, %v2678
        %v2761 = vadd.f32 %v2497, %v2683
        %v2762 = vadd.f32 %v2498, %v2686
        %v2763 = vadd.f32 %v2499, %v2691
        %v2764 = vadd.f32 %v2500, %v2694
        %v2765 = vadd.f32 %v2501, %v2699
        %v2766 = vadd.f32 %v2502, %v2702
        %v2767 = vadd.f32 %v2503, %v2707
        %v2768 = vadd.f32 %v2504, %v2710
        %v2769 = vadd.f32 %v2505, %v2715
        %v2770 = vadd.f32 %v2506, %v2718
        %v2771 = vadd.f32 %v2507, %v2723
        %v2772 = vadd.f32 %v2508, %v2726
        %v2773 = vadd.f32 %v2509, %v2731
        %v2774 = vadd.f32 %v2510, %v2734
        %v2775 = vadd.f32 %v2511, %v2739
        %v2776 = vadd.f32 %v2512, %v2742
        %v2778 = vshrl.u32 %v239, 16
        %v2780 = vrot.slane %v2778, 4
        %v2781 = vshll.u32 %v239, 16
        %v2783 = vrot.slane %v2781, 5
        %v2784 = vor.u32 %v2780, %v2783
        %v2785 = vrot.slane %v2784, 4
        %v2787 = vshll.u32 %v240, 16
        %v2789 = vrot.slane %v2787, 5
        %v2790 = vsel %vm260, %v2785, %v2789
        %v2791 = vshrl.u32 %v240, 16
        %v2793 = vrot.slane %v2791, 4
        %v2794 = vor.u32 %v2793, %v2789
        %v2795 = vrot.slane %v2794, 4
        %v2797 = vshll.u32 %v241, 16
        %v2799 = vrot.slane %v2797, 5
        %v2800 = vsel %vm260, %v2795, %v2799
        %s2801 = scalar_lea.vmem [#allocation4], 448
        %v2802 = vld [vmem:[%s2801] sm:$0xf]
        %v2803 = vld [vmem:[%s2801 + $0x4] sm:$0xf]
        %v2804 = vld [vmem:[%s2801 + $0x8] sm:$0xf]
        %v2805 = vld [vmem:[%s2801 + $0xc] sm:$0xf]
        %v2806 = vld [vmem:[%s2801 + $0x10] sm:$0xf]
        %v2807 = vld [vmem:[%s2801 + $0x14] sm:$0xf]
        %v2808 = vld [vmem:[%s2801 + $0x18] sm:$0xf]
        %v2809 = vld [vmem:[%s2801 + $0x1c] sm:$0xf]
        %v2810 = vld [vmem:[%s2801 + $0x20] sm:$0xf]
        %v2811 = vld [vmem:[%s2801 + $0x24] sm:$0xf]
        %v2812 = vld [vmem:[%s2801 + $0x28] sm:$0xf]
        %v2813 = vld [vmem:[%s2801 + $0x2c] sm:$0xf]
        %v2814 = vld [vmem:[%s2801 + $0x30] sm:$0xf]
        %v2815 = vld [vmem:[%s2801 + $0x34] sm:$0xf]
        %v2816 = vld [vmem:[%s2801 + $0x38] sm:$0xf]
        %v2817 = vld [vmem:[%s2801 + $0x3c] sm:$0xf]
        %v2818 = vunpack.c.l.b16 %v2790
        %v2819 = vunpack.c.l.b16 %v2800
        %v2820 = vpack.c.b16 %v2819, %v2818
        %v2838 = vunpack.c.l.b16 %v2802
        %v2839 = vunpack.c.l.b16 %v2803
        %v2840 = vunpack.c.l.b16 %v2804
        %v2841 = vunpack.c.l.b16 %v2805
        %v2842 = vunpack.c.l.b16 %v2806
        %v2843 = vunpack.c.l.b16 %v2807
        %v2844 = vunpack.c.l.b16 %v2808
        %v2845 = vunpack.c.l.b16 %v2809
        %v2846 = vunpack.c.l.b16 %v2810
        %v2847 = vunpack.c.l.b16 %v2811
        %v2848 = vunpack.c.l.b16 %v2812
        %v2849 = vunpack.c.l.b16 %v2813
        %v2850 = vunpack.c.l.b16 %v2814
        %v2851 = vunpack.c.l.b16 %v2815
        %v2852 = vunpack.c.l.b16 %v2816
        %v2853 = vunpack.c.l.b16 %v2817
        %v2854 = vpack.c.b16 %v2839, %v2838
        %v2855 = vpack.c.b16 %v2841, %v2840
        %v2856 = vpack.c.b16 %v2843, %v2842
        %v2857 = vpack.c.b16 %v2845, %v2844
        %v2858 = vpack.c.b16 %v2847, %v2846
        %v2859 = vpack.c.b16 %v2849, %v2848
        %v2860 = vpack.c.b16 %v2851, %v2850
        %v2861 = vpack.c.b16 %v2853, %v2852
        %2870 = vmatprep.subr.bf16.mxu0 0
        %2871 = vmatpush1.bf16.msra.mxu0 %v2854
        %2872 = vmatprep.subr.bf16.mxu0 0
        %2873 = vmatpush1.bf16.msra.mxu0 %v2855
        %2874 = vmatprep.subr.bf16.mxu0 0
        %2875 = vmatpush1.bf16.msra.mxu0 %v2856
        %2876 = vmatprep.subr.bf16.mxu0 0
        %2877 = vmatpush1.bf16.msra.mxu0 %v2857
        %2878 = vmatprep.subr.bf16.mxu0 0
        %2879 = vmatpush1.bf16.msra.mxu0 %v2858
        %2880 = vmatprep.subr.bf16.mxu0 0
        %2881 = vmatpush1.bf16.msra.mxu0 %v2859
        %2882 = vmatprep.subr.bf16.mxu0 0
        %2883 = vmatpush1.bf16.msra.mxu0 %v2860
        %2884 = vmatprep.subr.bf16.mxu0 0
        %2885 = vmatpush1.bf16.msra.mxu0 %v2861
        %2886 = vmatprep.subr.bf16.mxu0 0
        %2887 = vmatpush1.bf16.msra.mxu0 0
        %2888 = vmatprep.subr.bf16.mxu0 0
        %2889 = vmatpush1.bf16.msra.mxu0 0
        %2890 = vmatprep.subr.bf16.mxu0 0
        %2891 = vmatpush1.bf16.msra.mxu0 0
        %2892 = vmatprep.subr.bf16.mxu0 0
        %2893 = vmatpush1.bf16.msra.mxu0 0
        %2894 = vmatprep.subr.bf16.mxu0 0
        %2895 = vmatpush1.bf16.msra.mxu0 0
        %2896 = vmatprep.subr.bf16.mxu0 0
        %2897 = vmatpush1.bf16.msra.mxu0 0
        %2898 = vmatprep.subr.bf16.mxu0 0
        %2899 = vmatpush1.bf16.msra.mxu0 0
        %2900 = vmatprep.subr.bf16.mxu0 0
        %2901 = vmatpush1.bf16.msra.mxu0 0
        %2902 = vmatprep.mubr.bf16.mxu0 0
        %2903 = vmatmul.mubr.bf16.gmra.mrb[0].mxu0 %v696
        %v2904 = vpop.f32.mrb[0].mxu0
        %v2905 = vadd.f32 0.0, %v2904
        %v2906 = vpop.f32.mrb[0].mxu0
        %v2907 = vpop.f32.mrb[0].mxu0
        %v2908 = vadd.f32 0.0, %v2907
        %v2909 = vpop.f32.mrb[0].mxu0
        %2910 = vmatprep.mubr.bf16.mxu0 0
        %2911 = vmatmul.mubr.bf16.gmra.mrb[0].mxu0 %v697
        %v2912 = vpop.f32.mrb[0].mxu0
        %v2913 = vadd.f32 0.0, %v2912
        %v2914 = vpop.f32.mrb[0].mxu0
        %v2915 = vpop.f32.mrb[0].mxu0
        %v2916 = vadd.f32 0.0, %v2915
        %v2917 = vpop.f32.mrb[0].mxu0
        %2918 = vmatprep.mubr.bf16.mxu0 0
        %2919 = vmatmul.mubr.bf16.gmra.mrb[0].mxu0 %v698
        %v2920 = vpop.f32.mrb[0].mxu0
        %v2921 = vadd.f32 0.0, %v2920
        %v2922 = vpop.f32.mrb[0].mxu0
        %v2923 = vpop.f32.mrb[0].mxu0
        %v2924 = vadd.f32 0.0, %v2923
        %v2925 = vpop.f32.mrb[0].mxu0
        %2926 = vmatprep.mubr.bf16.mxu0 0
        %2927 = vmatmul.mubr.bf16.gmra.mrb[0].mxu0 %v699
        %v2928 = vpop.f32.mrb[0].mxu0
        %v2929 = vadd.f32 0.0, %v2928
        %v2930 = vpop.f32.mrb[0].mxu0
        %v2931 = vpop.f32.mrb[0].mxu0
        %v2932 = vadd.f32 0.0, %v2931
        %v2933 = vpop.f32.mrb[0].mxu0
        %2934 = vmatprep.mubr.bf16.mxu0 0
        %2935 = vmatmul.mubr.bf16.gmra.mrb[0].mxu0 %v700
        %v2936 = vpop.f32.mrb[0].mxu0
        %v2937 = vadd.f32 0.0, %v2936
        %v2938 = vpop.f32.mrb[0].mxu0
        %v2939 = vpop.f32.mrb[0].mxu0
        %v2940 = vadd.f32 0.0, %v2939
        %v2941 = vpop.f32.mrb[0].mxu0
        %2942 = vmatprep.mubr.bf16.mxu0 0
        %2943 = vmatmul.mubr.bf16.gmra.mrb[0].mxu0 %v701
        %v2944 = vpop.f32.mrb[0].mxu0
        %v2945 = vadd.f32 0.0, %v2944
        %v2946 = vpop.f32.mrb[0].mxu0
        %v2947 = vpop.f32.mrb[0].mxu0
        %v2948 = vadd.f32 0.0, %v2947
        %v2949 = vpop.f32.mrb[0].mxu0
        %2950 = vmatprep.mubr.bf16.mxu0 0
        %2951 = vmatmul.mubr.bf16.gmra.mrb[0].mxu0 %v702
        %v2952 = vpop.f32.mrb[0].mxu0
        %v2953 = vadd.f32 0.0, %v2952
        %v2954 = vpop.f32.mrb[0].mxu0
        %v2955 = vpop.f32.mrb[0].mxu0
        %v2956 = vadd.f32 0.0, %v2955
        %v2957 = vpop.f32.mrb[0].mxu0
        %2958 = vmatprep.mubr.bf16.mxu0 0
        %2959 = vmatmul.mubr.bf16.gmra.mrb[0].mxu0 %v703
        %v2960 = vpop.f32.mrb[0].mxu0
        %v2961 = vadd.f32 0.0, %v2960
        %v2962 = vpop.f32.mrb[0].mxu0
        %v2963 = vpop.f32.mrb[0].mxu0
        %v2964 = vadd.f32 0.0, %v2963
        %v2965 = vpop.f32.mrb[0].mxu0
        %2966 = vmatprep.mubr.bf16.mxu0 0
        %2967 = vmatmul.mubr.bf16.gmra.mrb[0].mxu0 %v704
        %v2968 = vpop.f32.mrb[0].mxu0
        %v2969 = vadd.f32 0.0, %v2968
        %v2970 = vpop.f32.mrb[0].mxu0
        %v2971 = vpop.f32.mrb[0].mxu0
        %v2972 = vadd.f32 0.0, %v2971
        %v2973 = vpop.f32.mrb[0].mxu0
        %2974 = vmatprep.mubr.bf16.mxu0 0
        %2975 = vmatmul.mubr.bf16.gmra.mrb[0].mxu0 %v705
        %v2976 = vpop.f32.mrb[0].mxu0
        %v2977 = vadd.f32 0.0, %v2976
        %v2978 = vpop.f32.mrb[0].mxu0
        %v2979 = vpop.f32.mrb[0].mxu0
        %v2980 = vadd.f32 0.0, %v2979
        %v2981 = vpop.f32.mrb[0].mxu0
        %2982 = vmatprep.mubr.bf16.mxu0 0
        %2983 = vmatmul.mubr.bf16.gmra.mrb[0].mxu0 %v706
        %v2984 = vpop.f32.mrb[0].mxu0
        %v2985 = vadd.f32 0.0, %v2984
        %v2986 = vpop.f32.mrb[0].mxu0
        %v2987 = vpop.f32.mrb[0].mxu0
        %v2988 = vadd.f32 0.0, %v2987
        %v2989 = vpop.f32.mrb[0].mxu0
        %2990 = vmatprep.mubr.bf16.mxu0 0
        %2991 = vmatmul.mubr.bf16.gmra.mrb[0].mxu0 %v707
        %v2992 = vpop.f32.mrb[0].mxu0
        %v2993 = vadd.f32 0.0, %v2992
        %v2994 = vpop.f32.mrb[0].mxu0
        %v2995 = vpop.f32.mrb[0].mxu0
        %v2996 = vadd.f32 0.0, %v2995
        %v2997 = vpop.f32.mrb[0].mxu0
        %2998 = vmatprep.mubr.bf16.mxu0 0
        %2999 = vmatmul.mubr.bf16.gmra.mrb[0].mxu0 %v708
        %v3000 = vpop.f32.mrb[0].mxu0
        %v3001 = vadd.f32 0.0, %v3000
        %v3002 = vpop.f32.mrb[0].mxu0
        %v3003 = vpop.f32.mrb[0].mxu0
        %v3004 = vadd.f32 0.0, %v3003
        %v3005 = vpop.f32.mrb[0].mxu0
        %3006 = vmatprep.mubr.bf16.mxu0 0
        %3007 = vmatmul.mubr.bf16.gmra.mrb[0].mxu0 %v709
        %v3008 = vpop.f32.mrb[0].mxu0
        %v3009 = vadd.f32 0.0, %v3008
        %v3010 = vpop.f32.mrb[0].mxu0
        %v3011 = vpop.f32.mrb[0].mxu0
        %v3012 = vadd.f32 0.0, %v3011
        %v3013 = vpop.f32.mrb[0].mxu0
        %3014 = vmatprep.mubr.bf16.mxu0 0
        %3015 = vmatmul.mubr.bf16.gmra.mrb[0].mxu0 %v2000
        %v3016 = vpop.f32.mrb[0].mxu0
        %v3017 = vadd.f32 0.0, %v3016
        %v3018 = vpop.f32.mrb[0].mxu0
        %v3019 = vpop.f32.mrb[0].mxu0
        %v3020 = vadd.f32 0.0, %v3019
        %v3021 = vpop.f32.mrb[0].mxu0
        %3022 = vmatprep.mubr.bf16.mxu0 0
        %3023 = vmatmul.mubr.bf16.gmra.mrb[0].mxu0 %v2820
        %v3024 = vpop.f32.mrb[0].mxu0
        %v3025 = vadd.f32 0.0, %v3024
        %v3026 = vpop.f32.mrb[0].mxu0
        %v3027 = vpop.f32.mrb[0].mxu0
        %v3028 = vadd.f32 0.0, %v3027
        %v3029 = vpop.f32.mrb[0].mxu0
        %3030 = vdwg.mxu0
        %v3031 = vadd.f32 %v2745, %v2905
        %v3032 = vadd.f32 %v2746, %v2908
        %v3033 = vadd.f32 %v2747, %v2913
        %v3034 = vadd.f32 %v2748, %v2916
        %v3035 = vadd.f32 %v2749, %v2921
        %v3036 = vadd.f32 %v2750, %v2924
        %v3037 = vadd.f32 %v2751, %v2929
        %v3038 = vadd.f32 %v2752, %v2932
        %v3039 = vadd.f32 %v2753, %v2937
        %v3040 = vadd.f32 %v2754, %v2940
        %v3041 = vadd.f32 %v2755, %v2945
        %v3042 = vadd.f32 %v2756, %v2948
        %v3043 = vadd.f32 %v2757, %v2953
        %v3044 = vadd.f32 %v2758, %v2956
        %v3045 = vadd.f32 %v2759, %v2961
        %v3046 = vadd.f32 %v2760, %v2964
        %v3047 = vadd.f32 %v2761, %v2969
        %v3048 = vadd.f32 %v2762, %v2972
        %v3049 = vadd.f32 %v2763, %v2977
        %v3050 = vadd.f32 %v2764, %v2980
        %v3051 = vadd.f32 %v2765, %v2985
        %v3052 = vadd.f32 %v2766, %v2988
        %v3053 = vadd.f32 %v2767, %v2993
        %v3054 = vadd.f32 %v2768, %v2996
        %v3055 = vadd.f32 %v2769, %v3001
        %v3056 = vadd.f32 %v2770, %v3004
        %v3057 = vadd.f32 %v2771, %v3009
        %v3058 = vadd.f32 %v2772, %v3012
        %v3059 = vadd.f32 %v2773, %v3017
        %v3060 = vadd.f32 %v2774, %v3020
        %v3061 = vadd.f32 %v2775, %v3025
        %v3062 = vadd.f32 %v2776, %v3028
        %v3064 = vrot.slane %v239, 5
        %v3065 = vrot.slane %v3064, 4
        %v3066 = vrot.slane %v240, 5
        %v3067 = vsel %vm1258, %v3065, %v3066
        %v3068 = vrot.slane %v3066, 4
        %v3069 = vrot.slane %v241, 5
        %v3070 = vsel %vm1258, %v3068, %v3069
        %s3071 = scalar_lea.vmem [#allocation4], 512
        %v3072 = vld [vmem:[%s3071] sm:$0xf]
        %v3073 = vld [vmem:[%s3071 + $0x4] sm:$0xf]
        %v3074 = vld [vmem:[%s3071 + $0x8] sm:$0xf]
        %v3075 = vld [vmem:[%s3071 + $0xc] sm:$0xf]
        %v3076 = vld [vmem:[%s3071 + $0x10] sm:$0xf]
        %v3077 = vld [vmem:[%s3071 + $0x14] sm:$0xf]
        %v3078 = vld [vmem:[%s3071 + $0x18] sm:$0xf]
        %v3079 = vld [vmem:[%s3071 + $0x1c] sm:$0xf]
        %v3080 = vld [vmem:[%s3071 + $0x20] sm:$0xf]
        %v3081 = vld [vmem:[%s3071 + $0x24] sm:$0xf]
        %v3082 = vld [vmem:[%s3071 + $0x28] sm:$0xf]
        %v3083 = vld [vmem:[%s3071 + $0x2c] sm:$0xf]
        %v3084 = vld [vmem:[%s3071 + $0x30] sm:$0xf]
        %v3085 = vld [vmem:[%s3071 + $0x34] sm:$0xf]
        %v3086 = vld [vmem:[%s3071 + $0x38] sm:$0xf]
        %v3087 = vld [vmem:[%s3071 + $0x3c] sm:$0xf]
        %v3088 = vunpack.c.l.b16 %v3067
        %v3089 = vunpack.c.l.b16 %v3070
        %v3090 = vpack.c.b16 %v3089, %v3088
        %v3108 = vunpack.c.l.b16 %v3072
        %v3109 = vunpack.c.l.b16 %v3073
        %v3110 = vunpack.c.l.b16 %v3074
        %v3111 = vunpack.c.l.b16 %v3075
        %v3112 = vunpack.c.l.b16 %v3076
        %v3113 = vunpack.c.l.b16 %v3077
        %v3114 = vunpack.c.l.b16 %v3078
        %v3115 = vunpack.c.l.b16 %v3079
        %v3116 = vunpack.c.l.b16 %v3080
        %v3117 = vunpack.c.l.b16 %v3081
        %v3118 = vunpack.c.l.b16 %v3082
        %v3119 = vunpack.c.l.b16 %v3083
        %v3120 = vunpack.c.l.b16 %v3084
        %v3121 = vunpack.c.l.b16 %v3085
        %v3122 = vunpack.c.l.b16 %v3086
        %v3123 = vunpack.c.l.b16 %v3087
        %v3124 = vpack.c.b16 %v3109, %v3108
        %v3125 = vpack.c.b16 %v3111, %v3110
        %v3126 = vpack.c.b16 %v3113, %v3112
        %v3127 = vpack.c.b16 %v3115, %v3114
        %v3128 = vpack.c.b16 %v3117, %v3116
        %v3129 = vpack.c.b16 %v3119, %v3118
        %v3130 = vpack.c.b16 %v3121, %v3120
        %v3131 = vpack.c.b16 %v3123, %v3122
        %3140 = vmatprep.subr.bf16.mxu0 0
        %3141 = vmatpush1.bf16.msra.mxu0 %v3124
        %3142 = vmatprep.subr.bf16.mxu0 0
        %3143 = vmatpush1.bf16.msra.mxu0 %v3125
        %3144 = vmatprep.subr.bf16.mxu0 0
        %3145 = vmatpush1.bf16.msra.mxu0 %v3126
        %3146 = vmatprep.subr.bf16.mxu0 0
        %3147 = vmatpush1.bf16.msra.mxu0 %v3127
        %3148 = vmatprep.subr.bf16.mxu0 0
        %3149 = vmatpush1.bf16.msra.mxu0 %v3128
        %3150 = vmatprep.subr.bf16.mxu0 0
        %3151 = vmatpush1.bf16.msra.mxu0 %v3129
        %3152 = vmatprep.subr.bf16.mxu0 0
        %3153 = vmatpush1.bf16.msra.mxu0 %v3130
        %3154 = vmatprep.subr.bf16.mxu0 0
        %3155 = vmatpush1.bf16.msra.mxu0 %v3131
        %3156 = vmatprep.subr.bf16.mxu0 0
        %3157 = vmatpush1.bf16.msra.mxu0 0
        %3158 = vmatprep.subr.bf16.mxu0 0
        %3159 = vmatpush1.bf16.msra.mxu0 0
        %3160 = vmatprep.subr.bf16.mxu0 0
        %3161 = vmatpush1.bf16.msra.mxu0 0
        %3162 = vmatprep.subr.bf16.mxu0 0
        %3163 = vmatpush1.bf16.msra.mxu0 0
        %3164 = vmatprep.subr.bf16.mxu0 0
        %3165 = vmatpush1.bf16.msra.mxu0 0
        %3166 = vmatprep.subr.bf16.mxu0 0
        %3167 = vmatpush1.bf16.msra.mxu0 0
        %3168 = vmatprep.subr.bf16.mxu0 0
        %3169 = vmatpush1.bf16.msra.mxu0 0
        %3170 = vmatprep.subr.bf16.mxu0 0
        %3171 = vmatpush1.bf16.msra.mxu0 0
        %3172 = vmatprep.mubr.bf16.mxu0 0
        %3173 = vmatmul.mubr.bf16.gmra.mrb[0].mxu0 %v1422
        %v3174 = vpop.f32.mrb[0].mxu0
        %v3175 = vadd.f32 0.0, %v3174
        %v3176 = vpop.f32.mrb[0].mxu0
        %v3177 = vpop.f32.mrb[0].mxu0
        %v3178 = vadd.f32 0.0, %v3177
        %v3179 = vpop.f32.mrb[0].mxu0
        %3180 = vmatprep.mubr.bf16.mxu0 0
        %3181 = vmatmul.mubr.bf16.gmra.mrb[0].mxu0 %v1423
        %v3182 = vpop.f32.mrb[0].mxu0
        %v3183 = vadd.f32 0.0, %v3182
        %v3184 = vpop.f32.mrb[0].mxu0
        %v3185 = vpop.f32.mrb[0].mxu0
        %v3186 = vadd.f32 0.0, %v3185
        %v3187 = vpop.f32.mrb[0].mxu0
        %3188 = vmatprep.mubr.bf16.mxu0 0
        %3189 = vmatmul.mubr.bf16.gmra.mrb[0].mxu0 %v1424
        %v3190 = vpop.f32.mrb[0].mxu0
        %v3191 = vadd.f32 0.0, %v3190
        %v3192 = vpop.f32.mrb[0].mxu0
        %v3193 = vpop.f32.mrb[0].mxu0
        %v3194 = vadd.f32 0.0, %v3193
        %v3195 = vpop.f32.mrb[0].mxu0
        %3196 = vmatprep.mubr.bf16.mxu0 0
        %3197 = vmatmul.mubr.bf16.gmra.mrb[0].mxu0 %v1425
        %v3198 = vpop.f32.mrb[0].mxu0
        %v3199 = vadd.f32 0.0, %v3198
        %v3200 = vpop.f32.mrb[0].mxu0
        %v3201 = vpop.f32.mrb[0].mxu0
        %v3202 = vadd.f32 0.0, %v3201
        %v3203 = vpop.f32.mrb[0].mxu0
        %3204 = vmatprep.mubr.bf16.mxu0 0
        %3205 = vmatmul.mubr.bf16.gmra.mrb[0].mxu0 %v1426
        %v3206 = vpop.f32.mrb[0].mxu0
        %v3207 = vadd.f32 0.0, %v3206
        %v3208 = vpop.f32.mrb[0].mxu0
        %v3209 = vpop.f32.mrb[0].mxu0
        %v3210 = vadd.f32 0.0, %v3209
        %v3211 = vpop.f32.mrb[0].mxu0
        %3212 = vmatprep.mubr.bf16.mxu0 0
        %3213 = vmatmul.mubr.bf16.gmra.mrb[0].mxu0 %v1427
        %v3214 = vpop.f32.mrb[0].mxu0
        %v3215 = vadd.f32 0.0, %v3214
        %v3216 = vpop.f32.mrb[0].mxu0
        %v3217 = vpop.f32.mrb[0].mxu0
        %v3218 = vadd.f32 0.0, %v3217
        %v3219 = vpop.f32.mrb[0].mxu0
        %3220 = vmatprep.mubr.bf16.mxu0 0
        %3221 = vmatmul.mubr.bf16.gmra.mrb[0].mxu0 %v1428
        %v3222 = vpop.f32.mrb[0].mxu0
        %v3223 = vadd.f32 0.0, %v3222
        %v3224 = vpop.f32.mrb[0].mxu0
        %v3225 = vpop.f32.mrb[0].mxu0
        %v3226 = vadd.f32 0.0, %v3225
        %v3227 = vpop.f32.mrb[0].mxu0
        %3228 = vmatprep.mubr.bf16.mxu0 0
        %3229 = vmatmul.mubr.bf16.gmra.mrb[0].mxu0 %v1429
        %v3230 = vpop.f32.mrb[0].mxu0
        %v3231 = vadd.f32 0.0, %v3230
        %v3232 = vpop.f32.mrb[0].mxu0
        %v3233 = vpop.f32.mrb[0].mxu0
        %v3234 = vadd.f32 0.0, %v3233
        %v3235 = vpop.f32.mrb[0].mxu0
        %3236 = vmatprep.mubr.bf16.mxu0 0
        %3237 = vmatmul.mubr.bf16.gmra.mrb[0].mxu0 %v1430
        %v3238 = vpop.f32.mrb[0].mxu0
        %v3239 = vadd.f32 0.0, %v3238
        %v3240 = vpop.f32.mrb[0].mxu0
        %v3241 = vpop.f32.mrb[0].mxu0
        %v3242 = vadd.f32 0.0, %v3241
        %v3243 = vpop.f32.mrb[0].mxu0
        %3244 = vmatprep.mubr.bf16.mxu0 0
        %3245 = vmatmul.mubr.bf16.gmra.mrb[0].mxu0 %v1431
        %v3246 = vpop.f32.mrb[0].mxu0
        %v3247 = vadd.f32 0.0, %v3246
        %v3248 = vpop.f32.mrb[0].mxu0
        %v3249 = vpop.f32.mrb[0].mxu0
        %v3250 = vadd.f32 0.0, %v3249
        %v3251 = vpop.f32.mrb[0].mxu0
        %3252 = vmatprep.mubr.bf16.mxu0 0
        %3253 = vmatmul.mubr.bf16.gmra.mrb[0].mxu0 %v1432
        %v3254 = vpop.f32.mrb[0].mxu0
        %v3255 = vadd.f32 0.0, %v3254
        %v3256 = vpop.f32.mrb[0].mxu0
        %v3257 = vpop.f32.mrb[0].mxu0
        %v3258 = vadd.f32 0.0, %v3257
        %v3259 = vpop.f32.mrb[0].mxu0
        %3260 = vmatprep.mubr.bf16.mxu0 0
        %3261 = vmatmul.mubr.bf16.gmra.mrb[0].mxu0 %v1433
        %v3262 = vpop.f32.mrb[0].mxu0
        %v3263 = vadd.f32 0.0, %v3262
        %v3264 = vpop.f32.mrb[0].mxu0
        %v3265 = vpop.f32.mrb[0].mxu0
        %v3266 = vadd.f32 0.0, %v3265
        %v3267 = vpop.f32.mrb[0].mxu0
        %3268 = vmatprep.mubr.bf16.mxu0 0
        %3269 = vmatmul.mubr.bf16.gmra.mrb[0].mxu0 %v1434
        %v3270 = vpop.f32.mrb[0].mxu0
        %v3271 = vadd.f32 0.0, %v3270
        %v3272 = vpop.f32.mrb[0].mxu0
        %v3273 = vpop.f32.mrb[0].mxu0
        %v3274 = vadd.f32 0.0, %v3273
        %v3275 = vpop.f32.mrb[0].mxu0
        %3276 = vmatprep.mubr.bf16.mxu0 0
        %3277 = vmatmul.mubr.bf16.gmra.mrb[0].mxu0 %v1435
        %v3278 = vpop.f32.mrb[0].mxu0
        %v3279 = vadd.f32 0.0, %v3278
        %v3280 = vpop.f32.mrb[0].mxu0
        %v3281 = vpop.f32.mrb[0].mxu0
        %v3282 = vadd.f32 0.0, %v3281
        %v3283 = vpop.f32.mrb[0].mxu0
        %3284 = vmatprep.mubr.bf16.mxu0 0
        %3285 = vmatmul.mubr.bf16.gmra.mrb[0].mxu0 %v2270
        %v3286 = vpop.f32.mrb[0].mxu0
        %v3287 = vadd.f32 0.0, %v3286
        %v3288 = vpop.f32.mrb[0].mxu0
        %v3289 = vpop.f32.mrb[0].mxu0
        %v3290 = vadd.f32 0.0, %v3289
        %v3291 = vpop.f32.mrb[0].mxu0
        %3292 = vmatprep.mubr.bf16.mxu0 0
        %3293 = vmatmul.mubr.bf16.gmra.mrb[0].mxu0 %v3090
        %v3294 = vpop.f32.mrb[0].mxu0
        %v3295 = vadd.f32 0.0, %v3294
        %v3296 = vpop.f32.mrb[0].mxu0
        %v3297 = vpop.f32.mrb[0].mxu0
        %v3298 = vadd.f32 0.0, %v3297
        %v3299 = vpop.f32.mrb[0].mxu0
        %3300 = vdwg.mxu0
        %v3301 = vadd.f32 %v3031, %v3175
        %v3302 = vadd.f32 %v3032, %v3178
        %v3303 = vadd.f32 %v3033, %v3183
        %v3304 = vadd.f32 %v3034, %v3186
        %v3305 = vadd.f32 %v3035, %v3191
        %v3306 = vadd.f32 %v3036, %v3194
        %v3307 = vadd.f32 %v3037, %v3199
        %v3308 = vadd.f32 %v3038, %v3202
        %v3309 = vadd.f32 %v3039, %v3207
        %v3310 = vadd.f32 %v3040, %v3210
        %v3311 = vadd.f32 %v3041, %v3215
        %v3312 = vadd.f32 %v3042, %v3218
        %v3313 = vadd.f32 %v3043, %v3223
        %v3314 = vadd.f32 %v3044, %v3226
        %v3315 = vadd.f32 %v3045, %v3231
        %v3316 = vadd.f32 %v3046, %v3234
        %v3317 = vadd.f32 %v3047, %v3239
        %v3318 = vadd.f32 %v3048, %v3242
        %v3319 = vadd.f32 %v3049, %v3247
        %v3320 = vadd.f32 %v3050, %v3250
        %v3321 = vadd.f32 %v3051, %v3255
        %v3322 = vadd.f32 %v3052, %v3258
        %v3323 = vadd.f32 %v3053, %v3263
        %v3324 = vadd.f32 %v3054, %v3266
        %v3325 = vadd.f32 %v3055, %v3271
        %v3326 = vadd.f32 %v3056, %v3274
        %v3327 = vadd.f32 %v3057, %v3279
        %v3328 = vadd.f32 %v3058, %v3282
        %v3329 = vadd.f32 %v3059, %v3287
        %v3330 = vadd.f32 %v3060, %v3290
        %v3331 = vadd.f32 %v3061, %v3295
        %v3332 = vadd.f32 %v3062, %v3298
        %3333 = vst [vmem:[%s124] sm:$0xff] %v3301
        %3334 = vst [vmem:[%s124 + $0x8] sm:$0xff] %v3302
        %3335 = vst [vmem:[%s124 + $0x10] sm:$0xff] %v3303
        %3336 = vst [vmem:[%s124 + $0x18] sm:$0xff] %v3304
        %3337 = vst [vmem:[%s124 + $0x20] sm:$0xff] %v3305
        %3338 = vst [vmem:[%s124 + $0x28] sm:$0xff] %v3306
        %3339 = vst [vmem:[%s124 + $0x30] sm:$0xff] %v3307
        %3340 = vst [vmem:[%s124 + $0x38] sm:$0xff] %v3308
        %3341 = vst [vmem:[%s124 + $0x40] sm:$0xff] %v3309
        %3342 = vst [vmem:[%s124 + $0x48] sm:$0xff] %v3310
        %3343 = vst [vmem:[%s124 + $0x50] sm:$0xff] %v3311
        %3344 = vst [vmem:[%s124 + $0x58] sm:$0xff] %v3312
        %3345 = vst [vmem:[%s124 + $0x60] sm:$0xff] %v3313
        %3346 = vst [vmem:[%s124 + $0x68] sm:$0xff] %v3314
        %3347 = vst [vmem:[%s124 + $0x70] sm:$0xff] %v3315
        %3348 = vst [vmem:[%s124 + $0x78] sm:$0xff] %v3316
        %3349 = vst [vmem:[%s124 + $0x80] sm:$0xff] %v3317
        %3350 = vst [vmem:[%s124 + $0x88] sm:$0xff] %v3318
        %3351 = vst [vmem:[%s124 + $0x90] sm:$0xff] %v3319
        %3352 = vst [vmem:[%s124 + $0x98] sm:$0xff] %v3320
        %3353 = vst [vmem:[%s124 + $0xa0] sm:$0xff] %v3321
        %3354 = vst [vmem:[%s124 + $0xa8] sm:$0xff] %v3322
        %3355 = vst [vmem:[%s124 + $0xb0] sm:$0xff] %v3323
        %3356 = vst [vmem:[%s124 + $0xb8] sm:$0xff] %v3324
        %3357 = vst [vmem:[%s124 + $0xc0] sm:$0xff] %v3325
        %3358 = vst [vmem:[%s124 + $0xc8] sm:$0xff] %v3326
        %3359 = vst [vmem:[%s124 + $0xd0] sm:$0xff] %v3327
        %3360 = vst [vmem:[%s124 + $0xd8] sm:$0xff] %v3328
        %3361 = vst [vmem:[%s124 + $0xe0] sm:$0xff] %v3329
        %3362 = vst [vmem:[%s124 + $0xe8] sm:$0xff] %v3330
        %3363 = vst [vmem:[%s124 + $0xf0] sm:$0xff] %v3331
        %3364 = vst [vmem:[%s124 + $0xf8] sm:$0xff] %v3332
        %s3365 = sand.u32 %s60, 1
        %s3366 = scalar_lea.sflag [#allocation6], %s3365
        %s3367 = sand.u32 %s60, 1
        %s3368 = smul.addr %s3367, 256
        %s3369 = scalar_lea.vmem [#allocation7], %s3368
        // Predicated region
        $region45: #{separable_conv2d.1} parent=23 // pred_check
          %p3370 = pneg %p70
        $region46: #{separable_conv2d.1} parent=23 // pred_check_branch
          %3372 = sbr.rel (%p3370) target = $region48
        $region47: #{separable_conv2d.1} parent=23 // pred_region
          %s3373 = smul.u32 16, %s22
          %s3375 = ssub.s32 4096, 4096
          %3376 = vsyncadd %s3366, %s3375
          %s3377 = smul.addr %s3373, 2
          %s3378 = smul.addr %s21, 32
          %s3379 = sadd.s32 %s3377, %s3378
          %s3380 = smul.addr %s3379, 128
          %s3381 = scalar_lea.hbm %s2, %s3380
          %s3382 = sshll.u32 %s3369, 4
          %s3383 = int_to_ptr.vmem [resolvable:$true] %s3382
          %3388 = dma.vmem_to_hbm [thread:$0]  %s3383, 4096, %s3381, %s3366, 128, 128, 8
        $region48: #{separable_conv2d.1} parent=23 // pred_fallthru
          _
      $region24: #{separable_conv2d.1} parent=5 // pred_fallthru
        _
      %p3389 = scmp.le.s32.totalorder 2, %s12
      // Predicated region
      $region49: #{separable_conv2d.1} parent=5 // pred_check
        %p3390 = pneg %p3389
      $region50: #{separable_conv2d.1} parent=5 // pred_check_branch
        %3392 = sbr.rel (%p3390) target = $region52
      $region51: #{separable_conv2d.1} parent=5 // pred_region
        %s3393 = ssub.s32 %s12, 2
        // Predicated region
        $region53: #{separable_conv2d.1} parent=51 // pred_check
          %p3394 = pneg %p76
        $region54: #{separable_conv2d.1} parent=51 // pred_check_branch
          %3396 = sbr.rel (%p3394) target = $region56
        $region55: #{separable_conv2d.1} parent=51 // pred_region
          %s3397 = sand.u32 %s61, 1
          %s3398 = scalar_lea.sflag [#allocation6], %s3397
          %s3399 = sand.u32 %s61, 1
          %s3400 = smul.addr %s3399, 256
          %s3401 = scalar_lea.vmem [#allocation7], %s3400
          %3402 = dma.done %s3398, 4096
        $region56: #{separable_conv2d.1} parent=51 // pred_fallthru
          _
      $region52: #{separable_conv2d.1} parent=5 // pred_fallthru
        _
    $region6: #{separable_conv2d.1} parent=1 // loop_footer
      %s16 = sadd.s32 1, %s12
    $region7: #{separable_conv2d.1} parent=1 // loop_footer_branch
      %11 = sbr.rel target = $region3
    $region8: #{separable_conv2d.1} parent=1 // loop_exit
      _
    %3403 = vsyncpa [#allocation5], 1
    %s3404 = scalar_lea.sflag [#allocation5], 1
    %3405 = vsyncpa %s3404, 1
    %3406 = vsyncpa [#allocation6], 1
    %s3407 = scalar_lea.sflag [#allocation6], 1
    %3408 = vsyncpa %s3407, 1
  %3409 = vsyncmov [#allocation3]
  %s3410 = vpop.sfrf %3409
  %p3411 = scmp.eq.s32.totalorder %s3410, 0
  %p3412 = pneg %p3411
  %3414 = shalt.err (%p3412)
  %s3415 = scalar_lea.sflag [#allocation3], 1
  %3416 = vsyncmov %s3415
  %s3417 = vpop.sfrf %3416
  %p3418 = scmp.eq.s32.totalorder %s3417, 0
  %p3419 = pneg %p3418
  %3421 = shalt.err (%p3419)

</llo_original>
